<compile_context>
chip_gen: v7x
topology: tpu7x:2x2x1
jax: 0.10.0
libtpu: 0.0.40
codegen_flags: <defaults>
</compile_context>

<pallas_src>
import jax
import jax.numpy as jnp
from jax.experimental import pallas as pl
from jax.experimental.pallas import tpu as pltpu


# ---------------------------------------------------------------------------
# Kernels
# ---------------------------------------------------------------------------

def _epilogue(acc_ref, b1_ref, alpha_ref, w2_ref, b2_ref, out_ref):
    """PReLU + Dropout(identity, eval) + Linear2 + Tanh on the resident accumulator."""
    y1 = acc_ref[...] + b1_ref[...]                       # (B, H) f32, conv bias folded in
    alpha = alpha_ref[0, 0]                               # shared PReLU parameter (SMEM)
    y1 = jnp.where(y1 > 0, y1, alpha * y1)
    y2 = jnp.dot(y1, w2_ref[...], preferred_element_type=jnp.float32) + b2_ref[...]
    out_ref[...] = jnp.tanh(y2).astype(out_ref.dtype)     # padded lanes stay tanh(0)=0


def _vad_head_kernel(h_ref, wp_ref, w1_ref, b1_ref, alpha_ref, w2_ref, b2_ref,
                     out_ref, acc_ref):
    """Primary kernel: one conv matmul + ONE Linear1 contraction per time tile.

    h_ref:   (B, TT, D_enc)  bf16 hidden slice for this time tile
    wp_ref:  (D_enc, Dp)     bf16 Conv1d(k=1) weight (resident)
    w1_ref:  (TT*Dp, H)      bf16 Linear1 weight tile, row index t*Dp + dp
    b1_ref:  (1, H)          f32 Linear1 bias (+ folded conv-bias term, resident)
    alpha_ref: (1, 1) SMEM   PReLU shared parameter
    w2_ref:  (H, 128)        f32 Linear2 weight, lane-padded 3 -> 128 (resident)
    b2_ref:  (1, 128)        f32 Linear2 bias, lane-padded
    out_ref: (B, 128)        padded output (resident; written only at finalize)
    acc_ref: (B, H) f32      Linear1 accumulator scratch (carried across grid steps)
    """
    k = pl.program_id(0)
    nk = pl.num_programs(0)

    @pl.when(k == 0)
    def _init():
        acc_ref[...] = jnp.zeros_like(acc_ref)

    B, TT, D_enc = h_ref.shape
    Dp = wp_ref.shape[1]

    # Fused Conv1d(kernel_size=1): ONE (B*TT, D_enc) @ (D_enc, Dp) MXU matmul.
    # Leading-dim merge is layout-free (TT is a multiple of 16 for bf16 hidden).
    h2 = h_ref[...].reshape(B * TT, D_enc)
    proj = jnp.dot(h2, wp_ref[...], preferred_element_type=jnp.float32)   # (B*TT, Dp) f32
    # One reshape per tile (row-major [b, t, dp] order preserved); conv bias is
    # folded into b1 at pack time so no per-step bias add is needed.
    proj = proj.reshape(B, TT * Dp).astype(jnp.bfloat16)                  # (B, TT*Dp)

    # Linear1 partial: ONE (B, TT*Dp) @ (TT*Dp, H) contraction per tile
    # (w1 tile fed straight from its VMEM ref into the dot).
    acc_ref[...] += jnp.dot(proj, w1_ref[...], preferred_element_type=jnp.float32)

    @pl.when(k == nk - 1)
    def _finalize():
        _epilogue(acc_ref, b1_ref, alpha_ref, w2_ref, b2_ref, out_ref)


def _vad_head_kernel_unrolled(h_ref, wp_ref, w1_ref, b1_ref, alpha_ref, w2_ref, b2_ref,
                              out_ref, acc_ref):
    """Proven fallback (previous revision's body): per-timestep unrolled dots.

    Only used if the single-contraction kernel fails to lower on the running
    Mosaic version.  w1_ref here is the 3-D (TT, Dp, H) view of the same weight.
    """
    k = pl.program_id(0)
    nk = pl.num_programs(0)

    @pl.when(k == 0)
    def _init():
        acc_ref[...] = jnp.zeros_like(acc_ref)

    B, TT, D_enc = h_ref.shape
    Dp = wp_ref.shape[1]
    H = w1_ref.shape[2]

    h2 = h_ref[...].reshape(B * TT, D_enc)
    proj = jnp.dot(h2, wp_ref[...], preferred_element_type=jnp.float32)   # (B*TT, Dp)
    proj = proj.reshape(B, TT, Dp).astype(jnp.bfloat16)

    partial = jnp.zeros((B, H), dtype=jnp.float32)
    for t in range(TT):                                    # static unroll
        partial = partial + jnp.dot(proj[:, t, :], w1_ref[t],
                                    preferred_element_type=jnp.float32)
    acc_ref[...] += partial

    @pl.when(k == nk - 1)
    def _finalize():
        _epilogue(acc_ref, b1_ref, alpha_ref, w2_ref, b2_ref, out_ref)


# ---------------------------------------------------------------------------
# Packing / wrapper
# ---------------------------------------------------------------------------

def _default_vmem_limit_bytes():
    """Per-generation VMEM budget: ~3/4 of physical, capped at 100 MiB.

    v5e/v6e have 128 MiB physical VMEM, v7x only 64 MiB; one hard-coded constant
    cannot be right for both, so query the running part and fall back to a value
    that is safe everywhere (48 MiB) if the query is unavailable.
    """
    try:
        cap = getattr(pltpu.get_tpu_info(), "vmem_capacity_bytes", None)
    except Exception:
        cap = None
    if not cap:
        return 48 * 1024 * 1024
    return int(min(cap * 3 // 4, 100 * 1024 * 1024))


def pack_params(conv_w, conv_b, lin1_w, lin1_b, prelu_a, lin2_w, lin2_b, T, T_padded=None):
    """One-time repack of PyTorch-layout parameters into kernel layout.

    Call once and reuse: at production size the Linear1 permute is a ~750 MiB HBM
    shuffle and must not be redone per forward call.

    T-padding: pad along the ORIGINAL time axis AFTER un-flattening to (H, Dp, T)
    (padding the flat (H, Dp*T) array at its end would interleave wrongly because
    the PyTorch flatten order is dp*T + t).  Padded w1 rows are zero, so padded
    timesteps of the hidden input contribute nothing.
    """
    Dp, D_enc, kw = conv_w.shape            # PyTorch Conv1d weight (Dp, D_enc, 1)
    assert kw == 1
    H = lin1_w.shape[0]                     # PyTorch Linear1 weight (H, Dp*T)
    assert lin1_w.shape[1] == Dp * T
    n_out = lin2_w.shape[0]                 # PyTorch Linear2 weight (n_out, H)
    T_padded = T if T_padded is None else int(T_padded)
    assert T_padded >= T

    wp = jnp.transpose(conv_w[:, :, 0], (1, 0)).astype(jnp.bfloat16)      # (D_enc, Dp)

    # w1[t, dp, h] = lin1_w[h, dp*T + t]  (matches PyTorch Flatten of (Dp, T)).
    w1_3d = jnp.transpose(lin1_w.reshape(H, Dp, T), (2, 1, 0)).astype(jnp.float32)  # (T, Dp, H)

    # Fold the Conv1d bias into Linear1's bias (exact, computed in f32):
    #   b1_eff[h] = b1[h] + sum_{t,dp} conv_b[dp] * w1[t, dp, h]
    b1_eff = lin1_b.astype(jnp.float32) + jnp.einsum(
        'd,tdh->h', conv_b.astype(jnp.float32), w1_3d)

    if T_padded != T:
        w1_3d = jnp.pad(w1_3d, ((0, T_padded - T), (0, 0), (0, 0)))

    # 2-D repack (row index t*Dp + dp) so each per-tile Linear1 partial is a single
    # (B, TT*Dp) @ (TT*Dp, H) matmul; bf16 halves the dominant HBM stream.
    w1_2d = w1_3d.reshape(T_padded * Dp, H).astype(jnp.bfloat16)

    alpha = jnp.asarray(prelu_a, jnp.float32).reshape(1, 1)                # SMEM scalar

    # Lane-pad Linear2 from width n_out (=3) to 128 -> unmasked full-lane store.
    w2 = jnp.zeros((H, 128), jnp.float32).at[:, :n_out].set(
        jnp.transpose(lin2_w, (1, 0)).astype(jnp.float32))
    b2 = jnp.zeros((1, 128), jnp.float32).at[:, :n_out].set(
        lin2_b.astype(jnp.float32)[None, :])

    return dict(wp=wp, w1=w1_2d, b1=b1_eff[None, :], alpha=alpha, w2=w2, b2=b2,
                n_out=int(n_out), T_padded=T_padded, Dp=int(Dp), H=int(H),
                D_enc=int(D_enc))


def _build_call(kernel, *, B, D_enc, Dp, H, T_pad, time_tile, w1_is_3d,
                vmem_limit, cost):
    nk = T_pad // time_tile
    if w1_is_3d:
        w1_spec = pl.BlockSpec((time_tile, Dp, H), lambda k: (k, 0, 0))
    else:
        w1_spec = pl.BlockSpec((time_tile * Dp, H), lambda k: (k, 0))

    return pl.pallas_call(
        kernel,
        out_shape=jax.ShapeDtypeStruct((B, 128), jnp.float32),
        grid_spec=pltpu.PrefetchScalarGridSpec(
            num_scalar_prefetch=0,
            grid=(nk,),
            in_specs=[
                pl.BlockSpec((B, time_tile, D_enc), lambda k: (0, k, 0)),   # hidden slice
                pl.BlockSpec((D_enc, Dp),           lambda k: (0, 0)),      # wp (resident)
                w1_spec,                                                     # w1 tile (streamed once)
                pl.BlockSpec((1, H),                lambda k: (0, 0)),      # b1 (resident)
                pl.BlockSpec(memory_space=pltpu.MemorySpace.SMEM),          # PReLU alpha
                pl.BlockSpec((H, 128),              lambda k: (0, 0)),      # w2 (padded, resident)
                pl.BlockSpec((1, 128),              lambda k: (0, 0)),      # b2 (padded, resident)
            ],
            out_specs=pl.BlockSpec((B, 128), lambda k: (0, 0)),             # resident output
            scratch_shapes=[pltpu.VMEM((B, H), jnp.float32)],               # Linear1 accumulator
        ),
        compiler_params=pltpu.CompilerParams(
            # The single grid axis is the Linear1 reduction (carries the
            # accumulator) -> must be "arbitrary".
            dimension_semantics=("arbitrary",),
            vmem_limit_bytes=vmem_limit,
        ),
        cost_estimate=cost,
    )


def vad_scoring_head(hidden, packed, *, time_tile=32):
    """hidden: (B, T, D_enc) encoder_last_hidden_state.  Returns (B, n_out) VAD scores.

    time_tile: 32 is the production baseline for every TPU generation (pad T
    1500 -> 1504).  Larger tiles (96-128) only make sense on v5e/v6e with the
    raised per-generation vmem limit; v7x (64 MiB VMEM) should stay at 32.
    """
    wp, w1_2d, b1 = packed['wp'], packed['w1'], packed['b1']
    alpha, w2, b2 = packed['alpha'], packed['w2'], packed['b2']
    n_out, T_pad = packed['n_out'], packed['T_padded']
    Dp, H, D_enc = packed['Dp'], packed['H'], packed['D_enc']

    B, T, d_enc = hidden.shape
    assert d_enc == D_enc
    assert time_tile % 16 == 0, "time tile must be a multiple of 16 (bf16 sublane packing)"
    assert T_pad % time_tile == 0, "packed T must be a multiple of the time tile"
    assert T <= T_pad

    # Stream hidden in bf16 (halves its HBM traffic and VMEM double-buffer) and pad
    # T to the packed length; padded w1 rows are zero so padded steps contribute 0.
    hidden = hidden.astype(jnp.bfloat16)
    if T_pad != T:
        hidden = jnp.pad(hidden, ((0, 0), (0, T_pad - T), (0, 0)))

    vmem_limit = _default_vmem_limit_bytes()
    w1_bytes = w1_2d.size * w1_2d.dtype.itemsize
    hid_bytes = hidden.size * hidden.dtype.itemsize
    cost = pl.CostEstimate(
        flops=int(2 * B * T_pad * Dp * (D_enc + H) + 2 * B * H * 128),
        transcendentals=int(B * 128),
        bytes_accessed=int(w1_bytes + hid_bytes + (wp.size * 2) + (H * 128 * 4) + B * 128 * 4),
    )

    common = dict(B=B, D_enc=D_enc, Dp=Dp, H=H, T_pad=T_pad, time_tile=time_tile,
                  vmem_limit=vmem_limit, cost=cost)
    try:
        call = _build_call(_vad_head_kernel, w1_is_3d=False, **common)
        out = call(hidden, wp, w1_2d, b1, alpha, w2, b2)
        out = jax.block_until_ready(out)   # surface any lowering/runtime error here
    except Exception:
        # Fallback: proven per-timestep kernel (previous revision) if the
        # single-contraction kernel's in-kernel reshape is rejected by Mosaic.
        w1_3d = w1_2d.reshape(T_pad, Dp, H)    # free row-major view at XLA level
        call = _build_call(_vad_head_kernel_unrolled, w1_is_3d=True, **common)
        out = call(hidden, wp, w1_3d, b1, alpha, w2, b2)
    return out[:, :n_out]


# ---------------------------------------------------------------------------
# Pure-JAX reference (PyTorch forward, f32, eval mode) + demo
# ---------------------------------------------------------------------------

def _reference(hidden, conv_w, conv_b, lin1_w, lin1_b, prelu_a, lin2_w, lin2_b):
    B = hidden.shape[0]
    emb = jnp.transpose(hidden, (0, 2, 1))                                  # (B, D_enc, T)
    proj = jnp.einsum('od,bdt->bot', conv_w[:, :, 0], emb) + conv_b[None, :, None]
    flat = proj.reshape(B, -1)                                              # nn.Flatten
    y1 = flat @ lin1_w.T + lin1_b
    y1 = jnp.where(y1 > 0, y1, prelu_a * y1)                                # PReLU
    y2 = y1 @ lin2_w.T + lin2_b                                             # Dropout = id (eval)
    return jnp.tanh(y2)


if __name__ == "__main__":
    # Small stand-ins for production shapes (T=1500, D_enc=768, Dp=256, H=512).
    # T=24 with time_tile=16 deliberately exercises the T-padding path (24 -> 32).
    B, T, D_enc, Dp, H = 2, 24, 64, 128, 128
    TT = 16                                    # production default would be 32

    key = jax.random.PRNGKey(0)
    k_h, k0, k1, k2, k3, k4, k5 = jax.random.split(key, 7)

    hidden = jax.random.normal(k_h, (B, T, D_enc), dtype=jnp.float32)

    # Deterministic synthetic parameters in PyTorch layouts.
    conv_w = 0.02 * jax.random.normal(k0, (Dp, D_enc, 1), dtype=jnp.float32)   # Conv1d weight
    conv_b = 0.02 * jax.random.normal(k1, (Dp,), dtype=jnp.float32)
    lin1_w = 0.02 * jax.random.normal(k2, (H, Dp * T), dtype=jnp.float32)      # Linear1 weight
    lin1_b = 0.02 * jax.random.normal(k3, (H,), dtype=jnp.float32)
    prelu_a = jnp.array(0.25, dtype=jnp.float32)                               # nn.PReLU() default
    lin2_w = 0.02 * jax.random.normal(k4, (3, H), dtype=jnp.float32)           # Linear2 weight
    lin2_b = 0.02 * jax.random.normal(k5, (3,), dtype=jnp.float32)

    T_padded = ((T + TT - 1) // TT) * TT                                       # 24 -> 32
    packed = pack_params(conv_w, conv_b, lin1_w, lin1_b, prelu_a, lin2_w, lin2_b,
                         T=T, T_padded=T_padded)
    packed = {k_: (jax.block_until_ready(v) if isinstance(v, jax.Array) else v)
              for k_, v in packed.items()}

    scores = vad_scoring_head(hidden, packed, time_tile=TT)
    scores = jax.block_until_ready(scores)

    ref = _reference(hidden, conv_w, conv_b, lin1_w, lin1_b, prelu_a, lin2_w, lin2_b)
    assert scores.shape == (B, 3), scores.shape
    # bf16 weights / bf16 hidden in the kernel vs f32 reference -> modest tolerance.
    assert jnp.allclose(scores, ref, rtol=2e-2, atol=2e-2), (scores, ref)

    print("KERNEL_OK")
</pallas_src>

<mosaic_0001>
module attributes {stable_mosaic.version = 11 : i64} {
  func.func @_vad_head_kernel(%arg0: i32, %arg1: memref<2x16x64xbf16, #tpu.memory_space<vmem>>, %arg2: memref<64x128xbf16, #tpu.memory_space<vmem>>, %arg3: memref<2048x128xbf16, #tpu.memory_space<vmem>>, %arg4: memref<1x128xf32, #tpu.memory_space<vmem>>, %arg5: memref<1x1xf32, #tpu.memory_space<smem>>, %arg6: memref<128x128xf32, #tpu.memory_space<vmem>>, %arg7: memref<1x128xf32, #tpu.memory_space<vmem>>, %arg8: memref<2x128xf32, #tpu.memory_space<vmem>>, %arg9: memref<2x128xf32, #tpu.memory_space<vmem>>) attributes {dimension_semantics = [#tpu.dimension_semantics<arbitrary>], iteration_bounds = array<i64: 2>, scalar_prefetch = 0 : i64, scratch_operands = 1 : i64, tpu.core_type = #tpu.core_type<tc>, window_params = [{transform_indices = @transform_0, window_bounds = array<i64: 2, 16, 64>}, {pipeline_mode = #tpu.pipeline_mode<synchronous>, transform_indices = @transform_1, window_bounds = array<i64: 64, 128>}, {transform_indices = @transform_2, window_bounds = array<i64: 2048, 128>}, {pipeline_mode = #tpu.pipeline_mode<synchronous>, transform_indices = @transform_3, window_bounds = array<i64: 1, 128>}, {transform_indices = @transform_4, window_bounds = array<i64: 1, 1>}, {pipeline_mode = #tpu.pipeline_mode<synchronous>, transform_indices = @transform_5, window_bounds = array<i64: 128, 128>}, {pipeline_mode = #tpu.pipeline_mode<synchronous>, transform_indices = @transform_6, window_bounds = array<i64: 1, 128>}, {pipeline_mode = #tpu.pipeline_mode<synchronous>, transform_indices = @transform_7, window_bounds = array<i64: 2, 128>}]} {
    %c0_i32 = arith.constant 0 : i32
    %0 = arith.cmpi eq, %arg0, %c0_i32 : i32
    %1 = arith.extui %0 : i1 to i32
    %c0_i32_0 = arith.constant 0 : i32
    %2 = arith.cmpi ne, %1, %c0_i32_0 : i32
    scf.if %2 {
      %cst_13 = arith.constant 0.000000e+00 : f32
      %17 = vector.broadcast %cst_13 : f32 to vector<2x128xf32>
      %c0_14 = arith.constant 0 : index
      %c0_15 = arith.constant 0 : index
      %18 = vector.load %arg9[%c0_14, %c0_15] : memref<2x128xf32, #tpu.memory_space<vmem>>, vector<2x128xf32>
      tpu.vector_store %arg9[%c0_14, %c0_15], %17 {strides = array<i32>} : memref<2x128xf32, #tpu.memory_space<vmem>>, vector<2x128xf32>,
    } else {
    }
    %c0 = arith.constant 0 : index
    %c0_1 = arith.constant 0 : index
    %c0_2 = arith.constant 0 : index
    %3 = vector.load %arg1[%c0, %c0_1, %c0_2] : memref<2x16x64xbf16, #tpu.memory_space<vmem>>, vector<2x16x64xbf16>
    %4 = vector.shape_cast %3 : vector<2x16x64xbf16> to vector<32x64xbf16>
    %c0_3 = arith.constant 0 : index
    %c0_4 = arith.constant 0 : index
    %5 = vector.load %arg2[%c0_3, %c0_4] : memref<64x128xbf16, #tpu.memory_space<vmem>>, vector<64x128xbf16>
    %cst = arith.constant dense<0.000000e+00> : vector<32x128xf32>
    %6 = tpu.matmul %4, %5, %cst {dimension_numbers = #tpu.dot_dimension_numbers<[1], [0], [0], [1], [0, 0, 1, 1], [], []>} : vector<32x64xbf16>, vector<64x128xbf16>, vector<32x128xf32> -> vector<32x128xf32>
    %7 = vector.shape_cast %6 : vector<32x128xf32> to vector<2x2048xf32>
    %8 = arith.truncf %7 : vector<2x2048xf32> to vector<2x2048xbf16>
    %c0_5 = arith.constant 0 : index
    %c0_6 = arith.constant 0 : index
    %9 = vector.load %arg9[%c0_5, %c0_6] : memref<2x128xf32, #tpu.memory_space<vmem>>, vector<2x128xf32>
    %c0_7 = arith.constant 0 : index
    %c0_8 = arith.constant 0 : index
    %10 = vector.load %arg3[%c0_7, %c0_8] : memref<2048x128xbf16, #tpu.memory_space<vmem>>, vector<2048x128xbf16>
    %cst_9 = arith.constant dense<0.000000e+00> : vector<2x128xf32>
    %11 = tpu.matmul %8, %10, %cst_9 {dimension_numbers = #tpu.dot_dimension_numbers<[1], [0], [0], [1], [0, 0, 1, 1], [], []>} : vector<2x2048xbf16>, vector<2048x128xbf16>, vector<2x128xf32> -> vector<2x128xf32>
    %12 = arith.addf %9, %11 : vector<2x128xf32>
    %c0_10 = arith.constant 0 : index
    %c0_11 = arith.constant 0 : index
    %13 = vector.load %arg9[%c0_10, %c0_11] : memref<2x128xf32, #tpu.memory_space<vmem>>, vector<2x128xf32>
    tpu.vector_store %arg9[%c0_10, %c0_11], %12 {strides = array<i32>} : memref<2x128xf32, #tpu.memory_space<vmem>>, vector<2x128xf32>,
    %c1_i32 = arith.constant 1 : i32
    %14 = arith.cmpi eq, %arg0, %c1_i32 : i32
    %15 = arith.extui %14 : i1 to i32
    %c0_i32_12 = arith.constant 0 : i32
    %16 = arith.cmpi ne, %15, %c0_i32_12 : i32
    scf.if %16 {
      %c0_13 = arith.constant 0 : index
      %c0_14 = arith.constant 0 : index
      %17 = vector.load %arg9[%c0_13, %c0_14] : memref<2x128xf32, #tpu.memory_space<vmem>>, vector<2x128xf32>
      %c0_15 = arith.constant 0 : index
      %c0_16 = arith.constant 0 : index
      %18 = vector.load %arg4[%c0_15, %c0_16] : memref<1x128xf32, #tpu.memory_space<vmem>>, vector<1x128xf32>
      %19 = vector.broadcast %18 : vector<1x128xf32> to vector<2x128xf32>
      %20 = arith.addf %17, %19 : vector<2x128xf32>
      %c0_17 = arith.constant 0 : index
      %c0_18 = arith.constant 0 : index
      %21 = memref.load %arg5[%c0_17, %c0_18] : memref<1x1xf32, #tpu.memory_space<smem>>
      %cst_19 = arith.constant 0.000000e+00 : f32
      %22 = vector.broadcast %cst_19 : f32 to vector<2x128xf32>
      %23 = arith.cmpf ogt, %20, %22 : vector<2x128xf32>
      %24 = vector.broadcast %21 : f32 to vector<2x128xf32>
      %25 = arith.mulf %24, %20 : vector<2x128xf32>
      %26 = arith.select %23, %20, %25 : vector<2x128xi1>, vector<2x128xf32>
      %c0_20 = arith.constant 0 : index
      %c0_21 = arith.constant 0 : index
      %27 = vector.load %arg6[%c0_20, %c0_21] : memref<128x128xf32, #tpu.memory_space<vmem>>, vector<128x128xf32>
      %cst_22 = arith.constant dense<0.000000e+00> : vector<2x128xf32>
      %28 = tpu.matmul %26, %27, %cst_22 {dimension_numbers = #tpu.dot_dimension_numbers<[1], [0], [0], [1], [0, 0, 1, 1], [], []>} : vector<2x128xf32>, vector<128x128xf32>, vector<2x128xf32> -> vector<2x128xf32>
      %c0_23 = arith.constant 0 : index
      %c0_24 = arith.constant 0 : index
      %29 = vector.load %arg7[%c0_23, %c0_24] : memref<1x128xf32, #tpu.memory_space<vmem>>, vector<1x128xf32>
      %30 = vector.broadcast %29 : vector<1x128xf32> to vector<2x128xf32>
      %31 = arith.addf %28, %30 : vector<2x128xf32>
      %32 = math.tanh %31 : vector<2x128xf32>
      %c0_25 = arith.constant 0 : index
      %c0_26 = arith.constant 0 : index
      %33 = vector.load %arg8[%c0_25, %c0_26] : memref<2x128xf32, #tpu.memory_space<vmem>>, vector<2x128xf32>
      tpu.vector_store %arg8[%c0_25, %c0_26], %32 {strides = array<i32>} : memref<2x128xf32, #tpu.memory_space<vmem>>, vector<2x128xf32>,
    } else {
    }
    return
  }
  func.func @transform_0(%arg0: i32) -> (i32, i32, i32) {
    %c0_i32 = arith.constant 0 : i32
    %c0_i32_0 = arith.constant 0 : i32
    %c0_i32_1 = arith.constant 0 : i32
    return %c0_i32, %arg0, %c0_i32_0 : i32, i32, i32
  }
  func.func @transform_1(%arg0: i32) -> (i32, i32) {
    %c0_i32 = arith.constant 0 : i32
    %c0_i32_0 = arith.constant 0 : i32
    %c0_i32_1 = arith.constant 0 : i32
    return %c0_i32, %c0_i32_0 : i32, i32
  }
  func.func @transform_2(%arg0: i32) -> (i32, i32) {
    %c0_i32 = arith.constant 0 : i32
    %c0_i32_0 = arith.constant 0 : i32
    return %arg0, %c0_i32 : i32, i32
  }
  func.func @transform_3(%arg0: i32) -> (i32, i32) {
    %c0_i32 = arith.constant 0 : i32
    %c0_i32_0 = arith.constant 0 : i32
    %c0_i32_1 = arith.constant 0 : i32
    return %c0_i32, %c0_i32_0 : i32, i32
  }
  func.func @transform_4(%arg0: i32) -> (i32, i32) {
    %c0_i32 = arith.constant 0 : i32
    %c0_i32_0 = arith.constant 0 : i32
    %c0_i32_1 = arith.constant 0 : i32
    return %c0_i32, %c0_i32_0 : i32, i32
  }
  func.func @transform_5(%arg0: i32) -> (i32, i32) {
    %c0_i32 = arith.constant 0 : i32
    %c0_i32_0 = arith.constant 0 : i32
    %c0_i32_1 = arith.constant 0 : i32
    return %c0_i32, %c0_i32_0 : i32, i32
  }
  func.func @transform_6(%arg0: i32) -> (i32, i32) {
    %c0_i32 = arith.constant 0 : i32
    %c0_i32_0 = arith.constant 0 : i32
    %c0_i32_1 = arith.constant 0 : i32
    return %c0_i32, %c0_i32_0 : i32, i32
  }
  func.func @transform_7(%arg0: i32) -> (i32, i32) {
    %c0_i32 = arith.constant 0 : i32
    %c0_i32_0 = arith.constant 0 : i32
    %c0_i32_1 = arith.constant 0 : i32
    return %c0_i32, %c0_i32_0 : i32, i32
  }
}

module attributes {stable_mosaic.version = 11 : i64} {
  func.func @_vad_head_kernel_unrolled(%arg0: i32, %arg1: memref<2x16x64xbf16, #tpu.memory_space<vmem>>, %arg2: memref<64x128xbf16, #tpu.memory_space<vmem>>, %arg3: memref<16x128x128xbf16, #tpu.memory_space<vmem>>, %arg4: memref<1x128xf32, #tpu.memory_space<vmem>>, %arg5: memref<1x1xf32, #tpu.memory_space<smem>>, %arg6: memref<128x128xf32, #tpu.memory_space<vmem>>, %arg7: memref<1x128xf32, #tpu.memory_space<vmem>>, %arg8: memref<2x128xf32, #tpu.memory_space<vmem>>, %arg9: memref<2x128xf32, #tpu.memory_space<vmem>>) attributes {dimension_semantics = [#tpu.dimension_semantics<arbitrary>], iteration_bounds = array<i64: 2>, scalar_prefetch = 0 : i64, scratch_operands = 1 : i64, tpu.core_type = #tpu.core_type<tc>, window_params = [{transform_indices = @transform_0, window_bounds = array<i64: 2, 16, 64>}, {pipeline_mode = #tpu.pipeline_mode<synchronous>, transform_indices = @transform_1, window_bounds = array<i64: 64, 128>}, {transform_indices = @transform_2, window_bounds = array<i64: 16, 128, 128>}, {pipeline_mode = #tpu.pipeline_mode<synchronous>, transform_indices = @transform_3, window_bounds = array<i64: 1, 128>}, {transform_indices = @transform_4, window_bounds = array<i64: 1, 1>}, {pipeline_mode = #tpu.pipeline_mode<synchronous>, transform_indices = @transform_5, window_bounds = array<i64: 128, 128>}, {pipeline_mode = #tpu.pipeline_mode<synchronous>, transform_indices = @transform_6, window_bounds = array<i64: 1, 128>}, {pipeline_mode = #tpu.pipeline_mode<synchronous>, transform_indices = @transform_7, window_bounds = array<i64: 2, 128>}]} {
    %c0_i32 = arith.constant 0 : i32
    %0 = arith.cmpi eq, %arg0, %c0_i32 : i32
    %1 = arith.extui %0 : i1 to i32
    %c0_i32_0 = arith.constant 0 : i32
    %2 = arith.cmpi ne, %1, %c0_i32_0 : i32
    scf.if %2 {
      %cst_60 = arith.constant 0.000000e+00 : f32
      %112 = vector.broadcast %cst_60 : f32 to vector<2x128xf32>
      %c0_61 = arith.constant 0 : index
      %c0_62 = arith.constant 0 : index
      %113 = vector.load %arg9[%c0_61, %c0_62] : memref<2x128xf32, #tpu.memory_space<vmem>>, vector<2x128xf32>
      tpu.vector_store %arg9[%c0_61, %c0_62], %112 {strides = array<i32>} : memref<2x128xf32, #tpu.memory_space<vmem>>, vector<2x128xf32>,
    } else {
    }
    %c0 = arith.constant 0 : index
    %c0_1 = arith.constant 0 : index
    %c0_2 = arith.constant 0 : index
    %3 = vector.load %arg1[%c0, %c0_1, %c0_2] : memref<2x16x64xbf16, #tpu.memory_space<vmem>>, vector<2x16x64xbf16>
    %4 = vector.shape_cast %3 : vector<2x16x64xbf16> to vector<32x64xbf16>
    %c0_3 = arith.constant 0 : index
    %c0_4 = arith.constant 0 : index
    %5 = vector.load %arg2[%c0_3, %c0_4] : memref<64x128xbf16, #tpu.memory_space<vmem>>, vector<64x128xbf16>
    %cst = arith.constant dense<0.000000e+00> : vector<32x128xf32>
    %6 = tpu.matmul %4, %5, %cst {dimension_numbers = #tpu.dot_dimension_numbers<[1], [0], [0], [1], [0, 0, 1, 1], [], []>} : vector<32x64xbf16>, vector<64x128xbf16>, vector<32x128xf32> -> vector<32x128xf32>
    %7 = vector.shape_cast %6 : vector<32x128xf32> to vector<2x16x128xf32>
    %8 = arith.truncf %7 : vector<2x16x128xf32> to vector<2x16x128xbf16>
    %cst_5 = arith.constant 0.000000e+00 : f32
    %9 = vector.broadcast %cst_5 : f32 to vector<2x128xf32>
    %10 = vector.extract_strided_slice %8 {offsets = [0, 0, 0], sizes = [2, 1, 128], strides = [1, 1, 1]} : vector<2x16x128xbf16> to vector<2x1x128xbf16>
    %11 = vector.shape_cast %10 : vector<2x1x128xbf16> to vector<2x128xbf16>
    %c0_6 = arith.constant 0 : index
    %c0_7 = arith.constant 0 : index
    %c0_8 = arith.constant 0 : index
    %12 = vector.load %arg3[%c0_6, %c0_7, %c0_8] : memref<16x128x128xbf16, #tpu.memory_space<vmem>>, vector<1x128x128xbf16>
    %13 = vector.shape_cast %12 : vector<1x128x128xbf16> to vector<128x128xbf16>
    %cst_9 = arith.constant dense<0.000000e+00> : vector<2x128xf32>
    %14 = tpu.matmul %11, %13, %cst_9 {dimension_numbers = #tpu.dot_dimension_numbers<[1], [0], [0], [1], [0, 0, 1, 1], [], []>} : vector<2x128xbf16>, vector<128x128xbf16>, vector<2x128xf32> -> vector<2x128xf32>
    %15 = arith.addf %9, %14 : vector<2x128xf32>
    %16 = vector.extract_strided_slice %8 {offsets = [0, 1, 0], sizes = [2, 1, 128], strides = [1, 1, 1]} : vector<2x16x128xbf16> to vector<2x1x128xbf16>
    %17 = vector.shape_cast %16 : vector<2x1x128xbf16> to vector<2x128xbf16>
    %c1 = arith.constant 1 : index
    %c0_10 = arith.constant 0 : index
    %c0_11 = arith.constant 0 : index
    %18 = vector.load %arg3[%c1, %c0_10, %c0_11] : memref<16x128x128xbf16, #tpu.memory_space<vmem>>, vector<1x128x128xbf16>
    %19 = vector.shape_cast %18 : vector<1x128x128xbf16> to vector<128x128xbf16>
    %cst_12 = arith.constant dense<0.000000e+00> : vector<2x128xf32>
    %20 = tpu.matmul %17, %19, %cst_12 {dimension_numbers = #tpu.dot_dimension_numbers<[1], [0], [0], [1], [0, 0, 1, 1], [], []>} : vector<2x128xbf16>, vector<128x128xbf16>, vector<2x128xf32> -> vector<2x128xf32>
    %21 = arith.addf %15, %20 : vector<2x128xf32>
    %22 = vector.extract_strided_slice %8 {offsets = [0, 2, 0], sizes = [2, 1, 128], strides = [1, 1, 1]} : vector<2x16x128xbf16> to vector<2x1x128xbf16>
    %23 = vector.shape_cast %22 : vector<2x1x128xbf16> to vector<2x128xbf16>
    %c2 = arith.constant 2 : index
    %c0_13 = arith.constant 0 : index
    %c0_14 = arith.constant 0 : index
    %24 = vector.load %arg3[%c2, %c0_13, %c0_14] : memref<16x128x128xbf16, #tpu.memory_space<vmem>>, vector<1x128x128xbf16>
    %25 = vector.shape_cast %24 : vector<1x128x128xbf16> to vector<128x128xbf16>
    %cst_15 = arith.constant dense<0.000000e+00> : vector<2x128xf32>
    %26 = tpu.matmul %23, %25, %cst_15 {dimension_numbers = #tpu.dot_dimension_numbers<[1], [0], [0], [1], [0, 0, 1, 1], [], []>} : vector<2x128xbf16>, vector<128x128xbf16>, vector<2x128xf32> -> vector<2x128xf32>
    %27 = arith.addf %21, %26 : vector<2x128xf32>
    %28 = vector.extract_strided_slice %8 {offsets = [0, 3, 0], sizes = [2, 1, 128], strides = [1, 1, 1]} : vector<2x16x128xbf16> to vector<2x1x128xbf16>
    %29 = vector.shape_cast %28 : vector<2x1x128xbf16> to vector<2x128xbf16>
    %c3 = arith.constant 3 : index
    %c0_16 = arith.constant 0 : index
    %c0_17 = arith.constant 0 : index
    %30 = vector.load %arg3[%c3, %c0_16, %c0_17] : memref<16x128x128xbf16, #tpu.memory_space<vmem>>, vector<1x128x128xbf16>
    %31 = vector.shape_cast %30 : vector<1x128x128xbf16> to vector<128x128xbf16>
    %cst_18 = arith.constant dense<0.000000e+00> : vector<2x128xf32>
    %32 = tpu.matmul %29, %31, %cst_18 {dimension_numbers = #tpu.dot_dimension_numbers<[1], [0], [0], [1], [0, 0, 1, 1], [], []>} : vector<2x128xbf16>, vector<128x128xbf16>, vector<2x128xf32> -> vector<2x128xf32>
    %33 = arith.addf %27, %32 : vector<2x128xf32>
    %34 = vector.extract_strided_slice %8 {offsets = [0, 4, 0], sizes = [2, 1, 128], strides = [1, 1, 1]} : vector<2x16x128xbf16> to vector<2x1x128xbf16>
    %35 = vector.shape_cast %34 : vector<2x1x128xbf16> to vector<2x128xbf16>
    %c4 = arith.constant 4 : index
    %c0_19 = arith.constant 0 : index
    %c0_20 = arith.constant 0 : index
    %36 = vector.load %arg3[%c4, %c0_19, %c0_20] : memref<16x128x128xbf16, #tpu.memory_space<vmem>>, vector<1x128x128xbf16>
    %37 = vector.shape_cast %36 : vector<1x128x128xbf16> to vector<128x128xbf16>
    %cst_21 = arith.constant dense<0.000000e+00> : vector<2x128xf32>
    %38 = tpu.matmul %35, %37, %cst_21 {dimension_numbers = #tpu.dot_dimension_numbers<[1], [0], [0], [1], [0, 0, 1, 1], [], []>} : vector<2x128xbf16>, vector<128x128xbf16>, vector<2x128xf32> -> vector<2x128xf32>
    %39 = arith.addf %33, %38 : vector<2x128xf32>
    %40 = vector.extract_strided_slice %8 {offsets = [0, 5, 0], sizes = [2, 1, 128], strides = [1, 1, 1]} : vector<2x16x128xbf16> to vector<2x1x128xbf16>
    %41 = vector.shape_cast %40 : vector<2x1x128xbf16> to vector<2x128xbf16>
    %c5 = arith.constant 5 : index
    %c0_22 = arith.constant 0 : index
    %c0_23 = arith.constant 0 : index
    %42 = vector.load %arg3[%c5, %c0_22, %c0_23] : memref<16x128x128xbf16, #tpu.memory_space<vmem>>, vector<1x128x128xbf16>
    %43 = vector.shape_cast %42 : vector<1x128x128xbf16> to vector<128x128xbf16>
    %cst_24 = arith.constant dense<0.000000e+00> : vector<2x128xf32>
    %44 = tpu.matmul %41, %43, %cst_24 {dimension_numbers = #tpu.dot_dimension_numbers<[1], [0], [0], [1], [0, 0, 1, 1], [], []>} : vector<2x128xbf16>, vector<128x128xbf16>, vector<2x128xf32> -> vector<2x128xf32>
    %45 = arith.addf %39, %44 : vector<2x128xf32>
    %46 = vector.extract_strided_slice %8 {offsets = [0, 6, 0], sizes = [2, 1, 128], strides = [1, 1, 1]} : vector<2x16x128xbf16> to vector<2x1x128xbf16>
    %47 = vector.shape_cast %46 : vector<2x1x128xbf16> to vector<2x128xbf16>
    %c6 = arith.constant 6 : index
    %c0_25 = arith.constant 0 : index
    %c0_26 = arith.constant 0 : index
    %48 = vector.load %arg3[%c6, %c0_25, %c0_26] : memref<16x128x128xbf16, #tpu.memory_space<vmem>>, vector<1x128x128xbf16>
    %49 = vector.shape_cast %48 : vector<1x128x128xbf16> to vector<128x128xbf16>
    %cst_27 = arith.constant dense<0.000000e+00> : vector<2x128xf32>
    %50 = tpu.matmul %47, %49, %cst_27 {dimension_numbers = #tpu.dot_dimension_numbers<[1], [0], [0], [1], [0, 0, 1, 1], [], []>} : vector<2x128xbf16>, vector<128x128xbf16>, vector<2x128xf32> -> vector<2x128xf32>
    %51 = arith.addf %45, %50 : vector<2x128xf32>
    %52 = vector.extract_strided_slice %8 {offsets = [0, 7, 0], sizes = [2, 1, 128], strides = [1, 1, 1]} : vector<2x16x128xbf16> to vector<2x1x128xbf16>
    %53 = vector.shape_cast %52 : vector<2x1x128xbf16> to vector<2x128xbf16>
    %c7 = arith.constant 7 : index
    %c0_28 = arith.constant 0 : index
    %c0_29 = arith.constant 0 : index
    %54 = vector.load %arg3[%c7, %c0_28, %c0_29] : memref<16x128x128xbf16, #tpu.memory_space<vmem>>, vector<1x128x128xbf16>
    %55 = vector.shape_cast %54 : vector<1x128x128xbf16> to vector<128x128xbf16>
    %cst_30 = arith.constant dense<0.000000e+00> : vector<2x128xf32>
    %56 = tpu.matmul %53, %55, %cst_30 {dimension_numbers = #tpu.dot_dimension_numbers<[1], [0], [0], [1], [0, 0, 1, 1], [], []>} : vector<2x128xbf16>, vector<128x128xbf16>, vector<2x128xf32> -> vector<2x128xf32>
    %57 = arith.addf %51, %56 : vector<2x128xf32>
    %58 = vector.extract_strided_slice %8 {offsets = [0, 8, 0], sizes = [2, 1, 128], strides = [1, 1, 1]} : vector<2x16x128xbf16> to vector<2x1x128xbf16>
    %59 = vector.shape_cast %58 : vector<2x1x128xbf16> to vector<2x128xbf16>
    %c8 = arith.constant 8 : index
    %c0_31 = arith.constant 0 : index
    %c0_32 = arith.constant 0 : index
    %60 = vector.load %arg3[%c8, %c0_31, %c0_32] : memref<16x128x128xbf16, #tpu.memory_space<vmem>>, vector<1x128x128xbf16>
    %61 = vector.shape_cast %60 : vector<1x128x128xbf16> to vector<128x128xbf16>
    %cst_33 = arith.constant dense<0.000000e+00> : vector<2x128xf32>
    %62 = tpu.matmul %59, %61, %cst_33 {dimension_numbers = #tpu.dot_dimension_numbers<[1], [0], [0], [1], [0, 0, 1, 1], [], []>} : vector<2x128xbf16>, vector<128x128xbf16>, vector<2x128xf32> -> vector<2x128xf32>
    %63 = arith.addf %57, %62 : vector<2x128xf32>
    %64 = vector.extract_strided_slice %8 {offsets = [0, 9, 0], sizes = [2, 1, 128], strides = [1, 1, 1]} : vector<2x16x128xbf16> to vector<2x1x128xbf16>
    %65 = vector.shape_cast %64 : vector<2x1x128xbf16> to vector<2x128xbf16>
    %c9 = arith.constant 9 : index
    %c0_34 = arith.constant 0 : index
    %c0_35 = arith.constant 0 : index
    %66 = vector.load %arg3[%c9, %c0_34, %c0_35] : memref<16x128x128xbf16, #tpu.memory_space<vmem>>, vector<1x128x128xbf16>
    %67 = vector.shape_cast %66 : vector<1x128x128xbf16> to vector<128x128xbf16>
    %cst_36 = arith.constant dense<0.000000e+00> : vector<2x128xf32>
    %68 = tpu.matmul %65, %67, %cst_36 {dimension_numbers = #tpu.dot_dimension_numbers<[1], [0], [0], [1], [0, 0, 1, 1], [], []>} : vector<2x128xbf16>, vector<128x128xbf16>, vector<2x128xf32> -> vector<2x128xf32>
    %69 = arith.addf %63, %68 : vector<2x128xf32>
    %70 = vector.extract_strided_slice %8 {offsets = [0, 10, 0], sizes = [2, 1, 128], strides = [1, 1, 1]} : vector<2x16x128xbf16> to vector<2x1x128xbf16>
    %71 = vector.shape_cast %70 : vector<2x1x128xbf16> to vector<2x128xbf16>
    %c10 = arith.constant 10 : index
    %c0_37 = arith.constant 0 : index
    %c0_38 = arith.constant 0 : index
    %72 = vector.load %arg3[%c10, %c0_37, %c0_38] : memref<16x128x128xbf16, #tpu.memory_space<vmem>>, vector<1x128x128xbf16>
    %73 = vector.shape_cast %72 : vector<1x128x128xbf16> to vector<128x128xbf16>
    %cst_39 = arith.constant dense<0.000000e+00> : vector<2x128xf32>
    %74 = tpu.matmul %71, %73, %cst_39 {dimension_numbers = #tpu.dot_dimension_numbers<[1], [0], [0], [1], [0, 0, 1, 1], [], []>} : vector<2x128xbf16>, vector<128x128xbf16>, vector<2x128xf32> -> vector<2x128xf32>
    %75 = arith.addf %69, %74 : vector<2x128xf32>
    %76 = vector.extract_strided_slice %8 {offsets = [0, 11, 0], sizes = [2, 1, 128], strides = [1, 1, 1]} : vector<2x16x128xbf16> to vector<2x1x128xbf16>
    %77 = vector.shape_cast %76 : vector<2x1x128xbf16> to vector<2x128xbf16>
    %c11 = arith.constant 11 : index
    %c0_40 = arith.constant 0 : index
    %c0_41 = arith.constant 0 : index
    %78 = vector.load %arg3[%c11, %c0_40, %c0_41] : memref<16x128x128xbf16, #tpu.memory_space<vmem>>, vector<1x128x128xbf16>
    %79 = vector.shape_cast %78 : vector<1x128x128xbf16> to vector<128x128xbf16>
    %cst_42 = arith.constant dense<0.000000e+00> : vector<2x128xf32>
    %80 = tpu.matmul %77, %79, %cst_42 {dimension_numbers = #tpu.dot_dimension_numbers<[1], [0], [0], [1], [0, 0, 1, 1], [], []>} : vector<2x128xbf16>, vector<128x128xbf16>, vector<2x128xf32> -> vector<2x128xf32>
    %81 = arith.addf %75, %80 : vector<2x128xf32>
    %82 = vector.extract_strided_slice %8 {offsets = [0, 12, 0], sizes = [2, 1, 128], strides = [1, 1, 1]} : vector<2x16x128xbf16> to vector<2x1x128xbf16>
    %83 = vector.shape_cast %82 : vector<2x1x128xbf16> to vector<2x128xbf16>
    %c12 = arith.constant 12 : index
    %c0_43 = arith.constant 0 : index
    %c0_44 = arith.constant 0 : index
    %84 = vector.load %arg3[%c12, %c0_43, %c0_44] : memref<16x128x128xbf16, #tpu.memory_space<vmem>>, vector<1x128x128xbf16>
    %85 = vector.shape_cast %84 : vector<1x128x128xbf16> to vector<128x128xbf16>
    %cst_45 = arith.constant dense<0.000000e+00> : vector<2x128xf32>
    %86 = tpu.matmul %83, %85, %cst_45 {dimension_numbers = #tpu.dot_dimension_numbers<[1], [0], [0], [1], [0, 0, 1, 1], [], []>} : vector<2x128xbf16>, vector<128x128xbf16>, vector<2x128xf32> -> vector<2x128xf32>
    %87 = arith.addf %81, %86 : vector<2x128xf32>
    %88 = vector.extract_strided_slice %8 {offsets = [0, 13, 0], sizes = [2, 1, 128], strides = [1, 1, 1]} : vector<2x16x128xbf16> to vector<2x1x128xbf16>
    %89 = vector.shape_cast %88 : vector<2x1x128xbf16> to vector<2x128xbf16>
    %c13 = arith.constant 13 : index
    %c0_46 = arith.constant 0 : index
    %c0_47 = arith.constant 0 : index
    %90 = vector.load %arg3[%c13, %c0_46, %c0_47] : memref<16x128x128xbf16, #tpu.memory_space<vmem>>, vector<1x128x128xbf16>
    %91 = vector.shape_cast %90 : vector<1x128x128xbf16> to vector<128x128xbf16>
    %cst_48 = arith.constant dense<0.000000e+00> : vector<2x128xf32>
    %92 = tpu.matmul %89, %91, %cst_48 {dimension_numbers = #tpu.dot_dimension_numbers<[1], [0], [0], [1], [0, 0, 1, 1], [], []>} : vector<2x128xbf16>, vector<128x128xbf16>, vector<2x128xf32> -> vector<2x128xf32>
    %93 = arith.addf %87, %92 : vector<2x128xf32>
    %94 = vector.extract_strided_slice %8 {offsets = [0, 14, 0], sizes = [2, 1, 128], strides = [1, 1, 1]} : vector<2x16x128xbf16> to vector<2x1x128xbf16>
    %95 = vector.shape_cast %94 : vector<2x1x128xbf16> to vector<2x128xbf16>
    %c14 = arith.constant 14 : index
    %c0_49 = arith.constant 0 : index
    %c0_50 = arith.constant 0 : index
    %96 = vector.load %arg3[%c14, %c0_49, %c0_50] : memref<16x128x128xbf16, #tpu.memory_space<vmem>>, vector<1x128x128xbf16>
    %97 = vector.shape_cast %96 : vector<1x128x128xbf16> to vector<128x128xbf16>
    %cst_51 = arith.constant dense<0.000000e+00> : vector<2x128xf32>
    %98 = tpu.matmul %95, %97, %cst_51 {dimension_numbers = #tpu.dot_dimension_numbers<[1], [0], [0], [1], [0, 0, 1, 1], [], []>} : vector<2x128xbf16>, vector<128x128xbf16>, vector<2x128xf32> -> vector<2x128xf32>
    %99 = arith.addf %93, %98 : vector<2x128xf32>
    %100 = vector.extract_strided_slice %8 {offsets = [0, 15, 0], sizes = [2, 1, 128], strides = [1, 1, 1]} : vector<2x16x128xbf16> to vector<2x1x128xbf16>
    %101 = vector.shape_cast %100 : vector<2x1x128xbf16> to vector<2x128xbf16>
    %c15 = arith.constant 15 : index
    %c0_52 = arith.constant 0 : index
    %c0_53 = arith.constant 0 : index
    %102 = vector.load %arg3[%c15, %c0_52, %c0_53] : memref<16x128x128xbf16, #tpu.memory_space<vmem>>, vector<1x128x128xbf16>
    %103 = vector.shape_cast %102 : vector<1x128x128xbf16> to vector<128x128xbf16>
    %cst_54 = arith.constant dense<0.000000e+00> : vector<2x128xf32>
    %104 = tpu.matmul %101, %103, %cst_54 {dimension_numbers = #tpu.dot_dimension_numbers<[1], [0], [0], [1], [0, 0, 1, 1], [], []>} : vector<2x128xbf16>, vector<128x128xbf16>, vector<2x128xf32> -> vector<2x128xf32>
    %105 = arith.addf %99, %104 : vector<2x128xf32>
    %c0_55 = arith.constant 0 : index
    %c0_56 = arith.constant 0 : index
    %106 = vector.load %arg9[%c0_55, %c0_56] : memref<2x128xf32, #tpu.memory_space<vmem>>, vector<2x128xf32>
    %107 = arith.addf %106, %105 : vector<2x128xf32>
    %c0_57 = arith.constant 0 : index
    %c0_58 = arith.constant 0 : index
    %108 = vector.load %arg9[%c0_57, %c0_58] : memref<2x128xf32, #tpu.memory_space<vmem>>, vector<2x128xf32>
    tpu.vector_store %arg9[%c0_57, %c0_58], %107 {strides = array<i32>} : memref<2x128xf32, #tpu.memory_space<vmem>>, vector<2x128xf32>,
    %c1_i32 = arith.constant 1 : i32
    %109 = arith.cmpi eq, %arg0, %c1_i32 : i32
    %110 = arith.extui %109 : i1 to i32
    %c0_i32_59 = arith.constant 0 : i32
    %111 = arith.cmpi ne, %110, %c0_i32_59 : i32
    scf.if %111 {
      %c0_60 = arith.constant 0 : index
      %c0_61 = arith.constant 0 : index
      %112 = vector.load %arg9[%c0_60, %c0_61] : memref<2x128xf32, #tpu.memory_space<vmem>>, vector<2x128xf32>
      %c0_62 = arith.constant 0 : index
      %c0_63 = arith.constant 0 : index
      %113 = vector.load %arg4[%c0_62, %c0_63] : memref<1x128xf32, #tpu.memory_space<vmem>>, vector<1x128xf32>
      %114 = vector.broadcast %113 : vector<1x128xf32> to vector<2x128xf32>
      %115 = arith.addf %112, %114 : vector<2x128xf32>
      %c0_64 = arith.constant 0 : index
      %c0_65 = arith.constant 0 : index
      %116 = memref.load %arg5[%c0_64, %c0_65] : memref<1x1xf32, #tpu.memory_space<smem>>
      %cst_66 = arith.constant 0.000000e+00 : f32
      %117 = vector.broadcast %cst_66 : f32 to vector<2x128xf32>
      %118 = arith.cmpf ogt, %115, %117 : vector<2x128xf32>
      %119 = vector.broadcast %116 : f32 to vector<2x128xf32>
      %120 = arith.mulf %119, %115 : vector<2x128xf32>
      %121 = arith.select %118, %115, %120 : vector<2x128xi1>, vector<2x128xf32>
      %c0_67 = arith.constant 0 : index
      %c0_68 = arith.constant 0 : index
      %122 = vector.load %arg6[%c0_67, %c0_68] : memref<128x128xf32, #tpu.memory_space<vmem>>, vector<128x128xf32>
      %cst_69 = arith.constant dense<0.000000e+00> : vector<2x128xf32>
      %123 = tpu.matmul %121, %122, %cst_69 {dimension_numbers = #tpu.dot_dimension_numbers<[1], [0], [0], [1], [0, 0, 1, 1], [], []>} : vector<2x128xf32>, vector<128x128xf32>, vector<2x128xf32> -> vector<2x128xf32>
      %c0_70 = arith.constant 0 : index
      %c0_71 = arith.constant 0 : index
      %124 = vector.load %arg7[%c0_70, %c0_71] : memref<1x128xf32, #tpu.memory_space<vmem>>, vector<1x128xf32>
      %125 = vector.broadcast %124 : vector<1x128xf32> to vector<2x128xf32>
      %126 = arith.addf %123, %125 : vector<2x128xf32>
      %127 = math.tanh %126 : vector<2x128xf32>
      %c0_72 = arith.constant 0 : index
      %c0_73 = arith.constant 0 : index
      %128 = vector.load %arg8[%c0_72, %c0_73] : memref<2x128xf32, #tpu.memory_space<vmem>>, vector<2x128xf32>
      tpu.vector_store %arg8[%c0_72, %c0_73], %127 {strides = array<i32>} : memref<2x128xf32, #tpu.memory_space<vmem>>, vector<2x128xf32>,
    } else {
    }
    return
  }
  func.func @transform_0(%arg0: i32) -> (i32, i32, i32) {
    %c0_i32 = arith.constant 0 : i32
    %c0_i32_0 = arith.constant 0 : i32
    %c0_i32_1 = arith.constant 0 : i32
    return %c0_i32, %arg0, %c0_i32_0 : i32, i32, i32
  }
  func.func @transform_1(%arg0: i32) -> (i32, i32) {
    %c0_i32 = arith.constant 0 : i32
    %c0_i32_0 = arith.constant 0 : i32
    %c0_i32_1 = arith.constant 0 : i32
    return %c0_i32, %c0_i32_0 : i32, i32
  }
  func.func @transform_2(%arg0: i32) -> (i32, i32, i32) {
    %c0_i32 = arith.constant 0 : i32
    %c0_i32_0 = arith.constant 0 : i32
    %c0_i32_1 = arith.constant 0 : i32
    return %arg0, %c0_i32, %c0_i32_0 : i32, i32, i32
  }
  func.func @transform_3(%arg0: i32) -> (i32, i32) {
    %c0_i32 = arith.constant 0 : i32
    %c0_i32_0 = arith.constant 0 : i32
    %c0_i32_1 = arith.constant 0 : i32
    return %c0_i32, %c0_i32_0 : i32, i32
  }
  func.func @transform_4(%arg0: i32) -> (i32, i32) {
    %c0_i32 = arith.constant 0 : i32
    %c0_i32_0 = arith.constant 0 : i32
    %c0_i32_1 = arith.constant 0 : i32
    return %c0_i32, %c0_i32_0 : i32, i32
  }
  func.func @transform_5(%arg0: i32) -> (i32, i32) {
    %c0_i32 = arith.constant 0 : i32
    %c0_i32_0 = arith.constant 0 : i32
    %c0_i32_1 = arith.constant 0 : i32
    return %c0_i32, %c0_i32_0 : i32, i32
  }
  func.func @transform_6(%arg0: i32) -> (i32, i32) {
    %c0_i32 = arith.constant 0 : i32
    %c0_i32_0 = arith.constant 0 : i32
    %c0_i32_1 = arith.constant 0 : i32
    return %c0_i32, %c0_i32_0 : i32, i32
  }
  func.func @transform_7(%arg0: i32) -> (i32, i32) {
    %c0_i32 = arith.constant 0 : i32
    %c0_i32_0 = arith.constant 0 : i32
    %c0_i32_1 = arith.constant 0 : i32
    return %c0_i32, %c0_i32_0 : i32, i32
  }
}

</mosaic_0001>

<llo_original>
// kernel: tpu_custom_call.1
$region0: #{tpu_custom_call.1}
  #allocation0 [shape = 'u32[]', space=smem, size = 0x4, offset = 0x4, fixed_abs, tag = 'smem constant byte address 0x4 - core index']
  #allocation1 [shape = 'u32[144,128]{1,0:T(1,128)}', space=vmem, size = 0x12000, scoped, tag = 'internal scratch']
  #allocation2 [shape = 'f32[2,128]{1,0:T(2,128)}', space=vmem, size = 0x400, scoped, tag = 'scratch operand']
  #allocation3 [shape = 'f32[1,1]{1,0:T(1,128)S(6)}', space=smem, size = 0x200, scoped, tag = 'scoped memory for tpu_custom_call.1']
  #allocation12 [shape = 's32[]', space=sflag, size = 0x4, offset = 0, fixed_abs, tag = 'sflag constant byte address 0x0 - dummy sync flag']
  %s0 = inlined_call_operand.hbm [shape: bf16[2,32,64], index: 0, kind: input, shape index: {}]
  %s1 = inlined_call_operand.hbm [shape: bf16[64,128], index: 1, kind: input, shape index: {}]
  %s2 = inlined_call_operand.hbm [shape: bf16[4096,128], index: 2, kind: input, shape index: {}]
  %s3 = inlined_call_operand.vmem [shape: f32[1,128], index: 3, kind: input, shape index: {}]
  %s4 = inlined_call_operand.<no memory space> [shape: f32[1,1], index: 4, kind: input, shape index: {}]
  %s5 = inlined_call_operand.hbm [shape: f32[128,128], index: 5, kind: input, shape index: {}]
  %s6 = inlined_call_operand.vmem [shape: f32[1,128], index: 6, kind: input, shape index: {}]
  %s7 = inlined_call_operand.hbm [shape: f32[2,128], index: 7, kind: output, shape index: {}]
  %s8 = sld [smem:[#allocation0]]
  $region85: #{tpu_custom_call.1} parent=0
    _
  %s10 = ssub.s32 1, %s8
  %s11 = scalar_select 0, %s10, %s8
  %12 = sst [smem:[#allocation3]] %s4
  $region1: #{tpu_custom_call.1} parent=0
    #allocation4 [shape = 'u8[16384]{0}', space=vmem, size = 0x4000, scoped, tag = 'input window, operand 0']
    #allocation5 [shape = 's32[2]{0}', space=sflag, size = 0x8, scoped, tag = 'scoped memory for tpu_custom_call.1']
    #allocation6 [shape = 's32[2]{0}', space=sflag, size = 0x8, scoped, tag = 'scoped memory for tpu_custom_call.1']
    #allocation7 [shape = 'u8[16384]{0}', space=vmem, size = 0x4000, scoped, tag = 'input window, operand 1, single buffered']
    #allocation8 [shape = 's32[1]{0}', space=sflag, size = 0x4, scoped, tag = 'scoped memory for tpu_custom_call.1']
    #allocation9 [shape = 'u8[1048576]{0}', space=vmem, size = 0x100000, scoped, tag = 'input window, operand 2']
    #allocation10 [shape = 'u8[65536]{0}', space=vmem, size = 0x10000, scoped, tag = 'input window, operand 5, single buffered']
    #allocation11 [shape = 'u8[1024]{0}', space=vmem, size = 0x400, scoped, tag = 'output window, operand 0, single buffered']
    %13 = vsyncpa [#allocation5], 0
    %s14 = scalar_lea.sflag [#allocation5], 1
    %15 = vsyncpa %s14, 0
    %16 = vsyncpa [#allocation8], 0
    %17 = vsyncpa [#allocation6], 0
    loop: start=0, step=1, limit=4
    $region2: #{tpu_custom_call.1} parent=1 // loop_pre_header
      _
    $region3: #{tpu_custom_call.1} parent=1 // loop_header
      %s19 = sphi 0, %s23
      %p20 = scmp.ge.s32.totalorder %s19, 4
      %s29 = sphi 0, %s31
      %s32 = sphi 0, %s29
      %s33 = sphi 0, %s32
      %s49 = sphi 0, %s33
      %s53 = sphi 0, %s53
      %s55 = sphi 0, %s53
      %s56 = sphi 0, %s55
      %s70 = sphi 0, %s56
      %s76 = sphi 0, %s78
      %s79 = sphi 0, %s76
      %s80 = sphi 0, %s79
      %s96 = sphi 0, %s80
      %s100 = sphi 0, %s100
      %s102 = sphi 0, %s100
      %s103 = sphi 0, %s102
      %s117 = sphi 0, %s103
      %s121 = sphi 0, %s121
      %s123 = sphi 0, %s121
      %s124 = sphi 0, %s123
      %s138 = sphi 0, %s124
      %s142 = sphi 0, %s142
      %s144 = sphi 0, %s142
      %s145 = sphi 0, %s144
      %s159 = sphi 0, %s145
      %s163 = sphi 0, %s163
      %s165 = sphi 0, %s163
      %s166 = sphi 0, %s165
      %s180 = sphi 0, %s166
      %s184 = sphi 0, %s184
      %s186 = sphi 0, %s184
      %s187 = sphi 0, %s186
      %s201 = sphi 0, %s187
    $region4: #{tpu_custom_call.1} parent=1 // loop_header_branch
      %22 = sbr.rel (%p20) target = $region8
    $region5: #{tpu_custom_call.1} parent=1 // loop_body
      %s24 = ssub.s32 %s19, 1
      %s25 = ssub.s32 %s19, 2
      %s26 = sadd.s32 %s19, 1
      %s27 = ssub.s32 %s19, %s26
      %p28 = scmp.eq.s32.totalorder %s27, 0
      %s30 = sadd.s32 %s29, 1
      %s31 = scalar_select %p28, %s29, %s30
      %p34 = pneg %p28
      %p35 = scmp.eq.s32.totalorder %s19, 1
      %p36 = por %p34, %p35
      %p37 = scmp.ne.s32.totalorder %s29, %s32
      %p38 = scmp.eq.s32.totalorder %s19, 0
      %p39 = por %p37, %p38
      %p40 = scmp.ne.s32.totalorder %s29, %s32
      %p41 = scmp.eq.s32.totalorder %s24, 1
      %p42 = por %p40, %p41
      %p43 = scmp.ne.s32.totalorder %s32, %s33
      %p44 = scmp.eq.s32.totalorder %s24, 0
      %p45 = por %p43, %p44
      %p46 = scmp.ne.s32.totalorder %s32, %s33
      %p47 = scmp.eq.s32.totalorder %s25, 1
      %p48 = por %p46, %p47
      %p50 = scmp.ne.s32.totalorder %s33, %s49
      %p51 = scmp.eq.s32.totalorder %s25, 0
      %p52 = por %p50, %p51
      %s54 = sadd.s32 %s53, 1
      %p57 = scmp.eq.s32.totalorder %s19, 1
      %p58 = scmp.ne.s32.totalorder %s53, %s55
      %p59 = scmp.eq.s32.totalorder %s19, 0
      %p60 = por %p58, %p59
      %p61 = scmp.ne.s32.totalorder %s53, %s55
      %p62 = scmp.eq.s32.totalorder %s24, 1
      %p63 = por %p61, %p62
      %p64 = scmp.ne.s32.totalorder %s55, %s56
      %p65 = scmp.eq.s32.totalorder %s24, 0
      %p66 = por %p64, %p65
      %p67 = scmp.ne.s32.totalorder %s55, %s56
      %p68 = scmp.eq.s32.totalorder %s25, 1
      %p69 = por %p67, %p68
      %p71 = scmp.ne.s32.totalorder %s56, %s70
      %p72 = scmp.eq.s32.totalorder %s25, 0
      %p73 = por %p71, %p72
      %s74 = ssub.s32 %s19, %s26
      %p75 = scmp.eq.s32.totalorder %s74, 0
      %s77 = sadd.s32 %s76, 1
      %s78 = scalar_select %p75, %s76, %s77
      %p81 = pneg %p75
      %p82 = scmp.eq.s32.totalorder %s19, 1
      %p83 = por %p81, %p82
      %p84 = scmp.ne.s32.totalorder %s76, %s79
      %p85 = scmp.eq.s32.totalorder %s19, 0
      %p86 = por %p84, %p85
      %p87 = scmp.ne.s32.totalorder %s76, %s79
      %p88 = scmp.eq.s32.totalorder %s24, 1
      %p89 = por %p87, %p88
      %p90 = scmp.ne.s32.totalorder %s79, %s80
      %p91 = scmp.eq.s32.totalorder %s24, 0
      %p92 = por %p90, %p91
      %p93 = scmp.ne.s32.totalorder %s79, %s80
      %p94 = scmp.eq.s32.totalorder %s25, 1
      %p95 = por %p93, %p94
      %p97 = scmp.ne.s32.totalorder %s80, %s96
      %p98 = scmp.eq.s32.totalorder %s25, 0
      %p99 = por %p97, %p98
      %s101 = sadd.s32 %s100, 1
      %p104 = scmp.eq.s32.totalorder %s19, 1
      %p105 = scmp.ne.s32.totalorder %s100, %s102
      %p106 = scmp.eq.s32.totalorder %s19, 0
      %p107 = por %p105, %p106
      %p108 = scmp.ne.s32.totalorder %s100, %s102
      %p109 = scmp.eq.s32.totalorder %s24, 1
      %p110 = por %p108, %p109
      %p111 = scmp.ne.s32.totalorder %s102, %s103
      %p112 = scmp.eq.s32.totalorder %s24, 0
      %p113 = por %p111, %p112
      %p114 = scmp.ne.s32.totalorder %s102, %s103
      %p115 = scmp.eq.s32.totalorder %s25, 1
      %p116 = por %p114, %p115
      %p118 = scmp.ne.s32.totalorder %s103, %s117
      %p119 = scmp.eq.s32.totalorder %s25, 0
      %p120 = por %p118, %p119
      %s122 = sadd.s32 %s121, 1
      %p125 = scmp.eq.s32.totalorder %s19, 1
      %p126 = scmp.ne.s32.totalorder %s121, %s123
      %p127 = scmp.eq.s32.totalorder %s19, 0
      %p128 = por %p126, %p127
      %p129 = scmp.ne.s32.totalorder %s121, %s123
      %p130 = scmp.eq.s32.totalorder %s24, 1
      %p131 = por %p129, %p130
      %p132 = scmp.ne.s32.totalorder %s123, %s124
      %p133 = scmp.eq.s32.totalorder %s24, 0
      %p134 = por %p132, %p133
      %p135 = scmp.ne.s32.totalorder %s123, %s124
      %p136 = scmp.eq.s32.totalorder %s25, 1
      %p137 = por %p135, %p136
      %p139 = scmp.ne.s32.totalorder %s124, %s138
      %p140 = scmp.eq.s32.totalorder %s25, 0
      %p141 = por %p139, %p140
      %s143 = sadd.s32 %s142, 1
      %p146 = scmp.eq.s32.totalorder %s19, 1
      %p147 = scmp.ne.s32.totalorder %s142, %s144
      %p148 = scmp.eq.s32.totalorder %s19, 0
      %p149 = por %p147, %p148
      %p150 = scmp.ne.s32.totalorder %s142, %s144
      %p151 = scmp.eq.s32.totalorder %s24, 1
      %p152 = por %p150, %p151
      %p153 = scmp.ne.s32.totalorder %s144, %s145
      %p154 = scmp.eq.s32.totalorder %s24, 0
      %p155 = por %p153, %p154
      %p156 = scmp.ne.s32.totalorder %s144, %s145
      %p157 = scmp.eq.s32.totalorder %s25, 1
      %p158 = por %p156, %p157
      %p160 = scmp.ne.s32.totalorder %s145, %s159
      %p161 = scmp.eq.s32.totalorder %s25, 0
      %p162 = por %p160, %p161
      %s164 = sadd.s32 %s163, 1
      %p167 = scmp.eq.s32.totalorder %s19, 1
      %p168 = scmp.ne.s32.totalorder %s163, %s165
      %p169 = scmp.eq.s32.totalorder %s19, 0
      %p170 = por %p168, %p169
      %p171 = scmp.ne.s32.totalorder %s163, %s165
      %p172 = scmp.eq.s32.totalorder %s24, 1
      %p173 = por %p171, %p172
      %p174 = scmp.ne.s32.totalorder %s165, %s166
      %p175 = scmp.eq.s32.totalorder %s24, 0
      %p176 = por %p174, %p175
      %p177 = scmp.ne.s32.totalorder %s165, %s166
      %p178 = scmp.eq.s32.totalorder %s25, 1
      %p179 = por %p177, %p178
      %p181 = scmp.ne.s32.totalorder %s166, %s180
      %p182 = scmp.eq.s32.totalorder %s25, 0
      %p183 = por %p181, %p182
      %s185 = sadd.s32 %s184, 1
      %p188 = scmp.eq.s32.totalorder %s19, 1
      %p189 = scmp.ne.s32.totalorder %s184, %s186
      %p190 = scmp.eq.s32.totalorder %s19, 0
      %p191 = por %p189, %p190
      %p192 = scmp.ne.s32.totalorder %s184, %s186
      %p193 = scmp.eq.s32.totalorder %s24, 1
      %p194 = por %p192, %p193
      %p195 = scmp.ne.s32.totalorder %s186, %s187
      %p196 = scmp.eq.s32.totalorder %s24, 0
      %p197 = por %p195, %p196
      %p198 = scmp.ne.s32.totalorder %s186, %s187
      %p199 = scmp.eq.s32.totalorder %s25, 1
      %p200 = por %p198, %p199
      %p202 = scmp.ne.s32.totalorder %s187, %s201
      %p203 = scmp.eq.s32.totalorder %s25, 0
      %p204 = por %p202, %p203
      %p205 = scmp.le.s32.totalorder 1, %s19
      %p206 = scmp.lt.s32.totalorder %s19, 3
      %p207 = pnand %p205, %p206
      %p208 = pneg %p207
      // Predicated region
      $region9: #{tpu_custom_call.1} parent=5 // pred_check
        _
      $region10: #{tpu_custom_call.1} parent=5 // pred_check_branch
        %210 = sbr.rel (%p207) target = $region12
      $region11: #{tpu_custom_call.1} parent=5 // pred_region
        %s211 = ssub.s32 %s19, 1
        // Predicated region
        $region13: #{tpu_custom_call.1} parent=11 // pred_check
          %p212 = pneg %p66
        $region14: #{tpu_custom_call.1} parent=11 // pred_check_branch
          %214 = sbr.rel (%p212) target = $region16
        $region15: #{tpu_custom_call.1} parent=11 // pred_region
          %s216 = ssub.s32 512, 512
          %217 = vsyncadd [#allocation8], %s216
          %s218 = sshll.u32 [#allocation7], 4
          %s219 = int_to_ptr.vmem [resolvable:$true] %s218
          %224 = dma.hbm_to_vmem [thread:$0]  %s1, 512, %s219, [#allocation8], 64, 64, 4
        $region16: #{tpu_custom_call.1} parent=11 // pred_fallthru
          _
        // Predicated region
        $region17: #{tpu_custom_call.1} parent=11 // pred_check
          %p225 = pneg %p113
        $region18: #{tpu_custom_call.1} parent=11 // pred_check_branch
          %227 = sbr.rel (%p225) target = $region20
        $region19: #{tpu_custom_call.1} parent=11 // pred_region
          _
        $region20: #{tpu_custom_call.1} parent=11 // pred_fallthru
          _
        // Predicated region
        $region21: #{tpu_custom_call.1} parent=11 // pred_check
          %p228 = pneg %p134
        $region22: #{tpu_custom_call.1} parent=11 // pred_check_branch
          %230 = sbr.rel (%p228) target = $region24
        $region23: #{tpu_custom_call.1} parent=11 // pred_region
          _
        $region24: #{tpu_custom_call.1} parent=11 // pred_fallthru
          _
        // Predicated region
        $region25: #{tpu_custom_call.1} parent=11 // pred_check
          %p231 = pneg %p155
        $region26: #{tpu_custom_call.1} parent=11 // pred_check_branch
          %233 = sbr.rel (%p231) target = $region28
        $region27: #{tpu_custom_call.1} parent=11 // pred_region
          %s235 = ssub.s32 2048, 2048
          %236 = vsyncadd [#allocation8], %s235
          %s237 = sshll.u32 [#allocation10], 4
          %s238 = int_to_ptr.vmem [resolvable:$true] %s237
          %243 = dma.hbm_to_vmem [thread:$0]  %s5, 2048, %s238, [#allocation8], 128, 128, 8
        $region28: #{tpu_custom_call.1} parent=11 // pred_fallthru
          _
        // Predicated region
        $region29: #{tpu_custom_call.1} parent=11 // pred_check
          %p244 = pneg %p176
        $region30: #{tpu_custom_call.1} parent=11 // pred_check_branch
          %246 = sbr.rel (%p244) target = $region32
        $region31: #{tpu_custom_call.1} parent=11 // pred_region
          _
        $region32: #{tpu_custom_call.1} parent=11 // pred_fallthru
          _
      $region12: #{tpu_custom_call.1} parent=5 // pred_fallthru
        _
      %p247 = scmp.lt.s32.totalorder %s19, 2
      // Predicated region
      $region33: #{tpu_custom_call.1} parent=5 // pred_check
        %p248 = pneg %p247
      $region34: #{tpu_custom_call.1} parent=5 // pred_check_branch
        %250 = sbr.rel (%p248) target = $region36
      $region35: #{tpu_custom_call.1} parent=5 // pred_region
        // Predicated region
        $region37: #{tpu_custom_call.1} parent=35 // pred_check
          %p251 = pneg %p39
        $region38: #{tpu_custom_call.1} parent=35 // pred_check_branch
          %253 = sbr.rel (%p251) target = $region40
        $region39: #{tpu_custom_call.1} parent=35 // pred_region
          #allocation13 [shape = 'u32[6]{0}', space=smem, size = 0x18, scoped, tag = 'DMA stride descriptor']
          %s254 = sand.u32 %s19, 1
          %s255 = scalar_lea.sflag [#allocation5], %s254
          %s256 = sand.u32 %s29, 1
          %s257 = smul.addr %s256, 16
          %s258 = scalar_lea.vmem [#allocation4], %s257
          %s259 = smul.u32 2, %s19
          %s261 = ssub.s32 256, 256
          %262 = vsyncadd %s255, %s261
          %s263 = smul.addr %s259, 64
          %s264 = scalar_lea.hbm %s0, %s263
          %s266 = sshll.u32 1, 14
          %s267 = sxor.u32 4294967295, %s266
          %s269 = sld [smem:[#allocation0]]
          %s270 = sadd.s32 2, %s269
          %s272 = sshll.u32 7, 26
          %s273 = sxor.u32 4294967295, %s272
          %s274 = sand.u32 0, %s273
          %s275 = sshll.u32 %s270, 26
          %s276 = sor.u32 %s274, %s275
          %s277 = sshll.u32 %s258, 4
          %s278 = int_to_ptr.vmem [resolvable:$true] %s277
          %284 = sst [smem:[#allocation13]] 256
          %s285 = scalar_lea.smem [#allocation13], 1
          %286 = sst [smem:[%s285]] 128
          %s287 = scalar_lea.smem [#allocation13], 2
          %288 = sst [smem:[%s287]] 2
          %s289 = scalar_lea.smem [#allocation13], 3
          %290 = sst [smem:[%s289]] 64
          %s291 = scalar_lea.smem [#allocation13], 4
          %292 = sst [smem:[%s291]] 64
          %s293 = scalar_lea.smem [#allocation13], 5
          %294 = sst [smem:[%s293]] 4
          %296 = dma.general %s264, 256, %s278, %s255, [#allocation12], [#allocation13], %s276, 0
        $region40: #{tpu_custom_call.1} parent=35 // pred_fallthru
          _
        // Predicated region
        $region41: #{tpu_custom_call.1} parent=35 // pred_check
          %p297 = pneg %p86
        $region42: #{tpu_custom_call.1} parent=35 // pred_check_branch
          %299 = sbr.rel (%p297) target = $region44
        $region43: #{tpu_custom_call.1} parent=35 // pred_region
          %s300 = sand.u32 %s19, 1
          %s301 = scalar_lea.sflag [#allocation5], %s300
          %s302 = sand.u32 %s76, 1
          %s303 = smul.addr %s302, 1024
          %s304 = scalar_lea.vmem [#allocation9], %s303
          %s305 = smul.u32 256, %s19
          %s307 = ssub.s32 16384, 16384
          %308 = vsyncadd %s301, %s307
          %s309 = smul.addr %s305, 64
          %s310 = scalar_lea.hbm %s2, %s309
          %s311 = sshll.u32 %s304, 4
          %s312 = int_to_ptr.vmem [resolvable:$true] %s311
          %317 = dma.hbm_to_vmem [thread:$0]  %s310, 16384, %s312, %s301, 64, 64, 4
        $region44: #{tpu_custom_call.1} parent=35 // pred_fallthru
          _
      $region36: #{tpu_custom_call.1} parent=5 // pred_fallthru
        _
      %p318 = scmp.le.s32.totalorder 1, %s19
      %p319 = scmp.lt.s32.totalorder %s19, 3
      %p320 = pnand %p318, %p319
      %p321 = pneg %p320
      // Predicated region
      $region45: #{tpu_custom_call.1} parent=5 // pred_check
        _
      $region46: #{tpu_custom_call.1} parent=5 // pred_check_branch
        %323 = sbr.rel (%p320) target = $region48
      $region47: #{tpu_custom_call.1} parent=5 // pred_region
        %s324 = ssub.s32 %s19, 1
        %s325 = sand.u32 %s24, 1
        %s326 = scalar_lea.sflag [#allocation5], %s325
        %s327 = sand.u32 %s32, 1
        %s328 = smul.addr %s327, 16
        %s329 = scalar_lea.vmem [#allocation4], %s328
        // Predicated region
        $region49: #{tpu_custom_call.1} parent=47 // pred_check
          %p330 = pneg %p45
        $region50: #{tpu_custom_call.1} parent=47 // pred_check_branch
          %332 = sbr.rel (%p330) target = $region52
        $region51: #{tpu_custom_call.1} parent=47 // pred_region
          %333 = dma.done %s326, 256
        $region52: #{tpu_custom_call.1} parent=47 // pred_fallthru
          _
        // Predicated region
        $region53: #{tpu_custom_call.1} parent=47 // pred_check
          %p334 = pneg %p66
        $region54: #{tpu_custom_call.1} parent=47 // pred_check_branch
          %336 = sbr.rel (%p334) target = $region56
        $region55: #{tpu_custom_call.1} parent=47 // pred_region
          %337 = dma.done [#allocation8], 512
        $region56: #{tpu_custom_call.1} parent=47 // pred_fallthru
          _
        %s338 = sand.u32 %s24, 1
        %s339 = scalar_lea.sflag [#allocation5], %s338
        %s340 = sand.u32 %s79, 1
        %s341 = smul.addr %s340, 1024
        %s342 = scalar_lea.vmem [#allocation9], %s341
        // Predicated region
        $region57: #{tpu_custom_call.1} parent=47 // pred_check
          %p343 = pneg %p92
        $region58: #{tpu_custom_call.1} parent=47 // pred_check_branch
          %345 = sbr.rel (%p343) target = $region60
        $region59: #{tpu_custom_call.1} parent=47 // pred_region
          %346 = dma.done %s339, 16384
        $region60: #{tpu_custom_call.1} parent=47 // pred_fallthru
          _
        // Predicated region
        $region61: #{tpu_custom_call.1} parent=47 // pred_check
          %p347 = pneg %p155
        $region62: #{tpu_custom_call.1} parent=47 // pred_check_branch
          %349 = sbr.rel (%p347) target = $region64
        $region63: #{tpu_custom_call.1} parent=47 // pred_region
          %350 = dma.done [#allocation8], 2048
        $region64: #{tpu_custom_call.1} parent=47 // pred_fallthru
          _
        %s351 = sand.u32 %s24, 1
        %s352 = scalar_lea.sflag [#allocation5], %s351
        %s353 = sand.u32 %s32, 1
        %s354 = smul.addr %s353, 16
        %s355 = scalar_lea.vmem [#allocation4], %s354
        %p356 = pneg %p45
        %p357 = pneg %p42
        %p358 = pneg %p66
        %p359 = pneg %p63
        %s360 = sand.u32 %s24, 1
        %s361 = scalar_lea.sflag [#allocation5], %s360
        %s362 = sand.u32 %s79, 1
        %s363 = smul.addr %s362, 1024
        %s364 = scalar_lea.vmem [#allocation9], %s363
        %p365 = pneg %p92
        %p366 = pneg %p89
        %p367 = pneg %p113
        %p368 = pneg %p110
        %p369 = pneg %p134
        %p370 = pneg %p131
        %p371 = pneg %p155
        %p372 = pneg %p152
        %p373 = pneg %p176
        %p374 = pneg %p173
        %p375 = pneg %p197
        %p376 = pneg %p194
        %s377 = smul.u32 2, %s24
        %s378 = smul.u32 256, %s24
        %p380 = scmp.eq.s32.totalorder %s24, 0
        // Predicated region
        $region65: #{tpu_custom_call.1} parent=47 // pred_check
          %p381 = pneg %p380
        $region66: #{tpu_custom_call.1} parent=47 // pred_check_branch
          %383 = sbr.rel (%p381) target = $region68
        $region67: #{tpu_custom_call.1} parent=47 // pred_region
          %384 = vst [vmem:[#allocation2] sm:$0x3] 0.0
        $region68: #{tpu_custom_call.1} parent=47 // pred_fallthru
          _
        %v385 = vld [vmem:[%s329] sm:$0xf]
        %v386 = vld [vmem:[%s329 + $0x4] sm:$0xf]
        %v387 = vld [vmem:[%s329 + $0x8] sm:$0xf]
        %v388 = vld [vmem:[%s329 + $0xc] sm:$0xf]
        %v389 = vld [vmem:[#allocation7] sm:$0xf]
        %v390 = vld [vmem:[#allocation7 + $0x4] sm:$0xf]
        %v391 = vld [vmem:[#allocation7 + $0x8] sm:$0xf]
        %v392 = vld [vmem:[#allocation7 + $0xc] sm:$0xf]
        %v393 = vld [vmem:[#allocation7 + $0x10] sm:$0xf]
        %v394 = vld [vmem:[#allocation7 + $0x14] sm:$0xf]
        %v395 = vld [vmem:[#allocation7 + $0x18] sm:$0xf]
        %v396 = vld [vmem:[#allocation7 + $0x1c] sm:$0xf]
        %v401 = vunpack.c.l.b16 %v385
        %v402 = vunpack.c.l.b16 %v386
        %v403 = vunpack.c.l.b16 %v387
        %v404 = vunpack.c.l.b16 %v388
        %v405 = vpack.c.b16 %v402, %v401
        %v406 = vpack.c.b16 %v404, %v403
        %v415 = vunpack.c.l.b16 %v389
        %v416 = vunpack.c.l.b16 %v390
        %v417 = vunpack.c.l.b16 %v391
        %v418 = vunpack.c.l.b16 %v392
        %v419 = vunpack.c.l.b16 %v393
        %v420 = vunpack.c.l.b16 %v394
        %v421 = vunpack.c.l.b16 %v395
        %v422 = vunpack.c.l.b16 %v396
        %v423 = vpack.c.b16 %v416, %v415
        %v424 = vpack.c.b16 %v418, %v417
        %v425 = vpack.c.b16 %v420, %v419
        %v426 = vpack.c.b16 %v422, %v421
        %vm431 = vcmask 523264
        %v433 = vsel %vm431, %v405, 0
        %v436 = vsel %vm431, %v406, 0
        %438 = vmatprep.subr.bf16.mxu0 0
        %439 = vmatpush1.bf16.msra.mxu0 %v423
        %440 = vmatprep.subr.bf16.mxu0 0
        %441 = vmatpush1.bf16.msra.mxu0 %v424
        %442 = vmatprep.subr.bf16.mxu0 0
        %443 = vmatpush1.bf16.msra.mxu0 %v425
        %444 = vmatprep.subr.bf16.mxu0 0
        %445 = vmatpush1.bf16.msra.mxu0 %v426
        %446 = vmatprep.subr.bf16.mxu0 0
        %447 = vmatpush1.bf16.msra.mxu0 0
        %448 = vmatprep.subr.bf16.mxu0 0
        %449 = vmatpush1.bf16.msra.mxu0 0
        %450 = vmatprep.subr.bf16.mxu0 0
        %451 = vmatpush1.bf16.msra.mxu0 0
        %452 = vmatprep.subr.bf16.mxu0 0
        %453 = vmatpush1.bf16.msra.mxu0 0
        %454 = vmatprep.subr.bf16.mxu0 0
        %455 = vmatpush1.bf16.msra.mxu0 0
        %456 = vmatprep.subr.bf16.mxu0 0
        %457 = vmatpush1.bf16.msra.mxu0 0
        %458 = vmatprep.subr.bf16.mxu0 0
        %459 = vmatpush1.bf16.msra.mxu0 0
        %460 = vmatprep.subr.bf16.mxu0 0
        %461 = vmatpush1.bf16.msra.mxu0 0
        %462 = vmatprep.subr.bf16.mxu0 0
        %463 = vmatpush1.bf16.msra.mxu0 0
        %464 = vmatprep.subr.bf16.mxu0 0
        %465 = vmatpush1.bf16.msra.mxu0 0
        %466 = vmatprep.subr.bf16.mxu0 0
        %467 = vmatpush1.bf16.msra.mxu0 0
        %468 = vmatprep.subr.bf16.mxu0 0
        %469 = vmatpush1.bf16.msra.mxu0 0
        %470 = vmatprep.mubr.bf16.mxu0 0
        %471 = vmatmul.mubr.bf16.gmra.mrb[0].mxu0 %v433
        %v472 = vpop.f32.mrb[0].mxu0
        %v473 = vadd.f32 0.0, %v472
        %v474 = vpop.f32.mrb[0].mxu0
        %v475 = vpop.f32.mrb[0].mxu0
        %v476 = vadd.f32 0.0, %v475
        %v477 = vpop.f32.mrb[0].mxu0
        %478 = vmatprep.mubr.bf16.mxu0 0
        %479 = vmatmul.mubr.bf16.gmra.mrb[0].mxu0 %v436
        %v480 = vpop.f32.mrb[0].mxu0
        %v481 = vadd.f32 0.0, %v480
        %v482 = vpop.f32.mrb[0].mxu0
        %v483 = vpop.f32.mrb[0].mxu0
        %v484 = vadd.f32 0.0, %v483
        %v485 = vpop.f32.mrb[0].mxu0
        %486 = vdwg.mxu0
        %v491 = vcombine.low %v473, %v481
        %v492 = vcombine.high %v473, %v481
        %v494 = vunpack.c.l.s4 1966171168
        %v495 = vunpack.c.0.s8 %v494
        %v496 = vlaneseq
        %v497 = vshrl.u32 %v496, 7
        %v498 = vsub.s32 %v495, %v497
        %v499 = vrot.slane %v491, %v498
        %v501 = vunpack.c.l.s4 1966171168
        %v502 = vunpack.c.0.s8 %v501
        %v503 = vlaneseq
        %v504 = vshrl.u32 %v503, 7
        %v505 = vsub.s32 %v502, %v504
        %v506 = vrot.slane %v492, %v505
        %v507 = vcombine.high %v499, %v499
        %v508 = vcombine.high %v506, %v506
        %v510 = vunpack.c.l.s4 1966171168
        %v511 = vunpack.c.0.s8 %v510
        %v512 = vlaneseq
        %v513 = vshrl.u32 %v512, 7
        %v514 = vsub.s32 %v511, %v513
        %v515 = vrot.slane %v499, %v514
        %v517 = vunpack.c.l.s4 1966171168
        %v518 = vunpack.c.0.s8 %v517
        %v519 = vlaneseq
        %v520 = vshrl.u32 %v519, 7
        %v521 = vsub.s32 %v518, %v520
        %v522 = vrot.slane %v506, %v521
        %v524 = vunpack.c.l.s4 1966171168
        %v525 = vunpack.c.0.s8 %v524
        %v526 = vlaneseq
        %v527 = vshrl.u32 %v526, 7
        %v528 = vsub.s32 %v525, %v527
        %v529 = vrot.slane %v507, %v528
        %v531 = vunpack.c.l.s4 1966171168
        %v532 = vunpack.c.0.s8 %v531
        %v533 = vlaneseq
        %v534 = vshrl.u32 %v533, 7
        %v535 = vsub.s32 %v532, %v534
        %v536 = vrot.slane %v508, %v535
        %v537 = vcombine.high %v515, %v515
        %v538 = vcombine.high %v522, %v522
        %v539 = vcombine.high %v529, %v529
        %v540 = vcombine.high %v536, %v536
        %v541 = vcombine.low %v476, %v484
        %v542 = vcombine.high %v476, %v484
        %v544 = vunpack.c.l.s4 1966171168
        %v545 = vunpack.c.0.s8 %v544
        %v546 = vlaneseq
        %v547 = vshrl.u32 %v546, 7
        %v548 = vsub.s32 %v545, %v547
        %v549 = vrot.slane %v541, %v548
        %v551 = vunpack.c.l.s4 1966171168
        %v552 = vunpack.c.0.s8 %v551
        %v553 = vlaneseq
        %v554 = vshrl.u32 %v553, 7
        %v555 = vsub.s32 %v552, %v554
        %v556 = vrot.slane %v542, %v555
        %v557 = vcombine.high %v549, %v549
        %v558 = vcombine.high %v556, %v556
        %v560 = vunpack.c.l.s4 1966171168
        %v561 = vunpack.c.0.s8 %v560
        %v562 = vlaneseq
        %v563 = vshrl.u32 %v562, 7
        %v564 = vsub.s32 %v561, %v563
        %v565 = vrot.slane %v549, %v564
        %v567 = vunpack.c.l.s4 1966171168
        %v568 = vunpack.c.0.s8 %v567
        %v569 = vlaneseq
        %v570 = vshrl.u32 %v569, 7
        %v571 = vsub.s32 %v568, %v570
        %v572 = vrot.slane %v556, %v571
        %v574 = vunpack.c.l.s4 1966171168
        %v575 = vunpack.c.0.s8 %v574
        %v576 = vlaneseq
        %v577 = vshrl.u32 %v576, 7
        %v578 = vsub.s32 %v575, %v577
        %v579 = vrot.slane %v557, %v578
        %v581 = vunpack.c.l.s4 1966171168
        %v582 = vunpack.c.0.s8 %v581
        %v583 = vlaneseq
        %v584 = vshrl.u32 %v583, 7
        %v585 = vsub.s32 %v582, %v584
        %v586 = vrot.slane %v558, %v585
        %v587 = vcombine.high %v565, %v565
        %v588 = vcombine.high %v572, %v572
        %v589 = vcombine.high %v579, %v579
        %v590 = vcombine.high %v586, %v586
        %v607 = vpack.c.bf16 %v515, %v515
        %v608 = vpack.c.bf16 %v529, %v529
        %v609 = vpack.c.bf16 %v537, %v537
        %v610 = vpack.c.bf16 %v539, %v539
        %v611 = vpack.c.bf16 %v522, %v522
        %v612 = vpack.c.bf16 %v536, %v536
        %v613 = vpack.c.bf16 %v538, %v538
        %v614 = vpack.c.bf16 %v540, %v540
        %v615 = vpack.c.bf16 %v565, %v565
        %v616 = vpack.c.bf16 %v579, %v579
        %v617 = vpack.c.bf16 %v587, %v587
        %v618 = vpack.c.bf16 %v589, %v589
        %v619 = vpack.c.bf16 %v572, %v572
        %v620 = vpack.c.bf16 %v586, %v586
        %v621 = vpack.c.bf16 %v588, %v588
        %v622 = vpack.c.bf16 %v590, %v590
        %v623 = vld [vmem:[#allocation2] sm:$0x3]
        %v624 = vld [vmem:[%s342] sm:$0xf]
        %v625 = vld [vmem:[%s342 + $0x4] sm:$0xf]
        %v626 = vld [vmem:[%s342 + $0x8] sm:$0xf]
        %v627 = vld [vmem:[%s342 + $0xc] sm:$0xf]
        %v628 = vld [vmem:[%s342 + $0x10] sm:$0xf]
        %v629 = vld [vmem:[%s342 + $0x14] sm:$0xf]
        %v630 = vld [vmem:[%s342 + $0x18] sm:$0xf]
        %v631 = vld [vmem:[%s342 + $0x1c] sm:$0xf]
        %v632 = vld [vmem:[%s342 + $0x20] sm:$0xf]
        %v633 = vld [vmem:[%s342 + $0x24] sm:$0xf]
        %v634 = vld [vmem:[%s342 + $0x28] sm:$0xf]
        %v635 = vld [vmem:[%s342 + $0x2c] sm:$0xf]
        %v636 = vld [vmem:[%s342 + $0x30] sm:$0xf]
        %v637 = vld [vmem:[%s342 + $0x34] sm:$0xf]
        %v638 = vld [vmem:[%s342 + $0x38] sm:$0xf]
        %v639 = vld [vmem:[%s342 + $0x3c] sm:$0xf]
        %v640 = vld [vmem:[%s342 + $0x40] sm:$0xf]
        %v641 = vld [vmem:[%s342 + $0x44] sm:$0xf]
        %v642 = vld [vmem:[%s342 + $0x48] sm:$0xf]
        %v643 = vld [vmem:[%s342 + $0x4c] sm:$0xf]
        %v644 = vld [vmem:[%s342 + $0x50] sm:$0xf]
        %v645 = vld [vmem:[%s342 + $0x54] sm:$0xf]
        %v646 = vld [vmem:[%s342 + $0x58] sm:$0xf]
        %v647 = vld [vmem:[%s342 + $0x5c] sm:$0xf]
        %v648 = vld [vmem:[%s342 + $0x60] sm:$0xf]
        %v649 = vld [vmem:[%s342 + $0x64] sm:$0xf]
        %v650 = vld [vmem:[%s342 + $0x68] sm:$0xf]
        %v651 = vld [vmem:[%s342 + $0x6c] sm:$0xf]
        %v652 = vld [vmem:[%s342 + $0x70] sm:$0xf]
        %v653 = vld [vmem:[%s342 + $0x74] sm:$0xf]
        %v654 = vld [vmem:[%s342 + $0x78] sm:$0xf]
        %v655 = vld [vmem:[%s342 + $0x7c] sm:$0xf]
        %v656 = vld [vmem:[%s342 + $0x80] sm:$0xf]
        %v657 = vld [vmem:[%s342 + $0x84] sm:$0xf]
        %v658 = vld [vmem:[%s342 + $0x88] sm:$0xf]
        %v659 = vld [vmem:[%s342 + $0x8c] sm:$0xf]
        %v660 = vld [vmem:[%s342 + $0x90] sm:$0xf]
        %v661 = vld [vmem:[%s342 + $0x94] sm:$0xf]
        %v662 = vld [vmem:[%s342 + $0x98] sm:$0xf]
        %v663 = vld [vmem:[%s342 + $0x9c] sm:$0xf]
        %v664 = vld [vmem:[%s342 + $0xa0] sm:$0xf]
        %v665 = vld [vmem:[%s342 + $0xa4] sm:$0xf]
        %v666 = vld [vmem:[%s342 + $0xa8] sm:$0xf]
        %v667 = vld [vmem:[%s342 + $0xac] sm:$0xf]
        %v668 = vld [vmem:[%s342 + $0xb0] sm:$0xf]
        %v669 = vld [vmem:[%s342 + $0xb4] sm:$0xf]
        %v670 = vld [vmem:[%s342 + $0xb8] sm:$0xf]
        %v671 = vld [vmem:[%s342 + $0xbc] sm:$0xf]
        %v672 = vld [vmem:[%s342 + $0xc0] sm:$0xf]
        %v673 = vld [vmem:[%s342 + $0xc4] sm:$0xf]
        %v674 = vld [vmem:[%s342 + $0xc8] sm:$0xf]
        %v675 = vld [vmem:[%s342 + $0xcc] sm:$0xf]
        %v676 = vld [vmem:[%s342 + $0xd0] sm:$0xf]
        %v677 = vld [vmem:[%s342 + $0xd4] sm:$0xf]
        %v678 = vld [vmem:[%s342 + $0xd8] sm:$0xf]
        %v679 = vld [vmem:[%s342 + $0xdc] sm:$0xf]
        %v680 = vld [vmem:[%s342 + $0xe0] sm:$0xf]
        %v681 = vld [vmem:[%s342 + $0xe4] sm:$0xf]
        %v682 = vld [vmem:[%s342 + $0xe8] sm:$0xf]
        %v683 = vld [vmem:[%s342 + $0xec] sm:$0xf]
        %v684 = vld [vmem:[%s342 + $0xf0] sm:$0xf]
        %v685 = vld [vmem:[%s342 + $0xf4] sm:$0xf]
        %v686 = vld [vmem:[%s342 + $0xf8] sm:$0xf]
        %v687 = vld [vmem:[%s342 + $0xfc] sm:$0xf]
        %v688 = vld [vmem:[%s342 + $0x100] sm:$0xf]
        %v689 = vld [vmem:[%s342 + $0x104] sm:$0xf]
        %v690 = vld [vmem:[%s342 + $0x108] sm:$0xf]
        %v691 = vld [vmem:[%s342 + $0x10c] sm:$0xf]
        %v692 = vld [vmem:[%s342 + $0x110] sm:$0xf]
        %v693 = vld [vmem:[%s342 + $0x114] sm:$0xf]
        %v694 = vld [vmem:[%s342 + $0x118] sm:$0xf]
        %v695 = vld [vmem:[%s342 + $0x11c] sm:$0xf]
        %v696 = vld [vmem:[%s342 + $0x120] sm:$0xf]
        %v697 = vld [vmem:[%s342 + $0x124] sm:$0xf]
        %v698 = vld [vmem:[%s342 + $0x128] sm:$0xf]
        %v699 = vld [vmem:[%s342 + $0x12c] sm:$0xf]
        %v700 = vld [vmem:[%s342 + $0x130] sm:$0xf]
        %v701 = vld [vmem:[%s342 + $0x134] sm:$0xf]
        %v702 = vld [vmem:[%s342 + $0x138] sm:$0xf]
        %v703 = vld [vmem:[%s342 + $0x13c] sm:$0xf]
        %v704 = vld [vmem:[%s342 + $0x140] sm:$0xf]
        %v705 = vld [vmem:[%s342 + $0x144] sm:$0xf]
        %v706 = vld [vmem:[%s342 + $0x148] sm:$0xf]
        %v707 = vld [vmem:[%s342 + $0x14c] sm:$0xf]
        %v708 = vld [vmem:[%s342 + $0x150] sm:$0xf]
        %v709 = vld [vmem:[%s342 + $0x154] sm:$0xf]
        %v710 = vld [vmem:[%s342 + $0x158] sm:$0xf]
        %v711 = vld [vmem:[%s342 + $0x15c] sm:$0xf]
        %v712 = vld [vmem:[%s342 + $0x160] sm:$0xf]
        %v713 = vld [vmem:[%s342 + $0x164] sm:$0xf]
        %v714 = vld [vmem:[%s342 + $0x168] sm:$0xf]
        %v715 = vld [vmem:[%s342 + $0x16c] sm:$0xf]
        %v716 = vld [vmem:[%s342 + $0x170] sm:$0xf]
        %v717 = vld [vmem:[%s342 + $0x174] sm:$0xf]
        %v718 = vld [vmem:[%s342 + $0x178] sm:$0xf]
        %v719 = vld [vmem:[%s342 + $0x17c] sm:$0xf]
        %v720 = vld [vmem:[%s342 + $0x180] sm:$0xf]
        %v721 = vld [vmem:[%s342 + $0x184] sm:$0xf]
        %v722 = vld [vmem:[%s342 + $0x188] sm:$0xf]
        %v723 = vld [vmem:[%s342 + $0x18c] sm:$0xf]
        %v724 = vld [vmem:[%s342 + $0x190] sm:$0xf]
        %v725 = vld [vmem:[%s342 + $0x194] sm:$0xf]
        %v726 = vld [vmem:[%s342 + $0x198] sm:$0xf]
        %v727 = vld [vmem:[%s342 + $0x19c] sm:$0xf]
        %v728 = vld [vmem:[%s342 + $0x1a0] sm:$0xf]
        %v729 = vld [vmem:[%s342 + $0x1a4] sm:$0xf]
        %v730 = vld [vmem:[%s342 + $0x1a8] sm:$0xf]
        %v731 = vld [vmem:[%s342 + $0x1ac] sm:$0xf]
        %v732 = vld [vmem:[%s342 + $0x1b0] sm:$0xf]
        %v733 = vld [vmem:[%s342 + $0x1b4] sm:$0xf]
        %v734 = vld [vmem:[%s342 + $0x1b8] sm:$0xf]
        %v735 = vld [vmem:[%s342 + $0x1bc] sm:$0xf]
        %v736 = vld [vmem:[%s342 + $0x1c0] sm:$0xf]
        %v737 = vld [vmem:[%s342 + $0x1c4] sm:$0xf]
        %v738 = vld [vmem:[%s342 + $0x1c8] sm:$0xf]
        %v739 = vld [vmem:[%s342 + $0x1cc] sm:$0xf]
        %v740 = vld [vmem:[%s342 + $0x1d0] sm:$0xf]
        %v741 = vld [vmem:[%s342 + $0x1d4] sm:$0xf]
        %v742 = vld [vmem:[%s342 + $0x1d8] sm:$0xf]
        %v743 = vld [vmem:[%s342 + $0x1dc] sm:$0xf]
        %v744 = vld [vmem:[%s342 + $0x1e0] sm:$0xf]
        %v745 = vld [vmem:[%s342 + $0x1e4] sm:$0xf]
        %v746 = vld [vmem:[%s342 + $0x1e8] sm:$0xf]
        %v747 = vld [vmem:[%s342 + $0x1ec] sm:$0xf]
        %v748 = vld [vmem:[%s342 + $0x1f0] sm:$0xf]
        %v749 = vld [vmem:[%s342 + $0x1f4] sm:$0xf]
        %v750 = vld [vmem:[%s342 + $0x1f8] sm:$0xf]
        %v751 = vld [vmem:[%s342 + $0x1fc] sm:$0xf]
        %v752 = vld [vmem:[%s342 + $0x200] sm:$0xf]
        %v753 = vld [vmem:[%s342 + $0x204] sm:$0xf]
        %v754 = vld [vmem:[%s342 + $0x208] sm:$0xf]
        %v755 = vld [vmem:[%s342 + $0x20c] sm:$0xf]
        %v756 = vld [vmem:[%s342 + $0x210] sm:$0xf]
        %v757 = vld [vmem:[%s342 + $0x214] sm:$0xf]
        %v758 = vld [vmem:[%s342 + $0x218] sm:$0xf]
        %v759 = vld [vmem:[%s342 + $0x21c] sm:$0xf]
        %v760 = vld [vmem:[%s342 + $0x220] sm:$0xf]
        %v761 = vld [vmem:[%s342 + $0x224] sm:$0xf]
        %v762 = vld [vmem:[%s342 + $0x228] sm:$0xf]
        %v763 = vld [vmem:[%s342 + $0x22c] sm:$0xf]
        %v764 = vld [vmem:[%s342 + $0x230] sm:$0xf]
        %v765 = vld [vmem:[%s342 + $0x234] sm:$0xf]
        %v766 = vld [vmem:[%s342 + $0x238] sm:$0xf]
        %v767 = vld [vmem:[%s342 + $0x23c] sm:$0xf]
        %v768 = vld [vmem:[%s342 + $0x240] sm:$0xf]
        %v769 = vld [vmem:[%s342 + $0x244] sm:$0xf]
        %v770 = vld [vmem:[%s342 + $0x248] sm:$0xf]
        %v771 = vld [vmem:[%s342 + $0x24c] sm:$0xf]
        %v772 = vld [vmem:[%s342 + $0x250] sm:$0xf]
        %v773 = vld [vmem:[%s342 + $0x254] sm:$0xf]
        %v774 = vld [vmem:[%s342 + $0x258] sm:$0xf]
        %v775 = vld [vmem:[%s342 + $0x25c] sm:$0xf]
        %v776 = vld [vmem:[%s342 + $0x260] sm:$0xf]
        %v777 = vld [vmem:[%s342 + $0x264] sm:$0xf]
        %v778 = vld [vmem:[%s342 + $0x268] sm:$0xf]
        %v779 = vld [vmem:[%s342 + $0x26c] sm:$0xf]
        %v780 = vld [vmem:[%s342 + $0x270] sm:$0xf]
        %v781 = vld [vmem:[%s342 + $0x274] sm:$0xf]
        %v782 = vld [vmem:[%s342 + $0x278] sm:$0xf]
        %v783 = vld [vmem:[%s342 + $0x27c] sm:$0xf]
        %v784 = vld [vmem:[%s342 + $0x280] sm:$0xf]
        %v785 = vld [vmem:[%s342 + $0x284] sm:$0xf]
        %v786 = vld [vmem:[%s342 + $0x288] sm:$0xf]
        %v787 = vld [vmem:[%s342 + $0x28c] sm:$0xf]
        %v788 = vld [vmem:[%s342 + $0x290] sm:$0xf]
        %v789 = vld [vmem:[%s342 + $0x294] sm:$0xf]
        %v790 = vld [vmem:[%s342 + $0x298] sm:$0xf]
        %v791 = vld [vmem:[%s342 + $0x29c] sm:$0xf]
        %v792 = vld [vmem:[%s342 + $0x2a0] sm:$0xf]
        %v793 = vld [vmem:[%s342 + $0x2a4] sm:$0xf]
        %v794 = vld [vmem:[%s342 + $0x2a8] sm:$0xf]
        %v795 = vld [vmem:[%s342 + $0x2ac] sm:$0xf]
        %v796 = vld [vmem:[%s342 + $0x2b0] sm:$0xf]
        %v797 = vld [vmem:[%s342 + $0x2b4] sm:$0xf]
        %v798 = vld [vmem:[%s342 + $0x2b8] sm:$0xf]
        %v799 = vld [vmem:[%s342 + $0x2bc] sm:$0xf]
        %v800 = vld [vmem:[%s342 + $0x2c0] sm:$0xf]
        %v801 = vld [vmem:[%s342 + $0x2c4] sm:$0xf]
        %v802 = vld [vmem:[%s342 + $0x2c8] sm:$0xf]
        %v803 = vld [vmem:[%s342 + $0x2cc] sm:$0xf]
        %v804 = vld [vmem:[%s342 + $0x2d0] sm:$0xf]
        %v805 = vld [vmem:[%s342 + $0x2d4] sm:$0xf]
        %v806 = vld [vmem:[%s342 + $0x2d8] sm:$0xf]
        %v807 = vld [vmem:[%s342 + $0x2dc] sm:$0xf]
        %v808 = vld [vmem:[%s342 + $0x2e0] sm:$0xf]
        %v809 = vld [vmem:[%s342 + $0x2e4] sm:$0xf]
        %v810 = vld [vmem:[%s342 + $0x2e8] sm:$0xf]
        %v811 = vld [vmem:[%s342 + $0x2ec] sm:$0xf]
        %v812 = vld [vmem:[%s342 + $0x2f0] sm:$0xf]
        %v813 = vld [vmem:[%s342 + $0x2f4] sm:$0xf]
        %v814 = vld [vmem:[%s342 + $0x2f8] sm:$0xf]
        %v815 = vld [vmem:[%s342 + $0x2fc] sm:$0xf]
        %v816 = vld [vmem:[%s342 + $0x300] sm:$0xf]
        %v817 = vld [vmem:[%s342 + $0x304] sm:$0xf]
        %v818 = vld [vmem:[%s342 + $0x308] sm:$0xf]
        %v819 = vld [vmem:[%s342 + $0x30c] sm:$0xf]
        %v820 = vld [vmem:[%s342 + $0x310] sm:$0xf]
        %v821 = vld [vmem:[%s342 + $0x314] sm:$0xf]
        %v822 = vld [vmem:[%s342 + $0x318] sm:$0xf]
        %v823 = vld [vmem:[%s342 + $0x31c] sm:$0xf]
        %v824 = vld [vmem:[%s342 + $0x320] sm:$0xf]
        %v825 = vld [vmem:[%s342 + $0x324] sm:$0xf]
        %v826 = vld [vmem:[%s342 + $0x328] sm:$0xf]
        %v827 = vld [vmem:[%s342 + $0x32c] sm:$0xf]
        %v828 = vld [vmem:[%s342 + $0x330] sm:$0xf]
        %v829 = vld [vmem:[%s342 + $0x334] sm:$0xf]
        %v830 = vld [vmem:[%s342 + $0x338] sm:$0xf]
        %v831 = vld [vmem:[%s342 + $0x33c] sm:$0xf]
        %v832 = vld [vmem:[%s342 + $0x340] sm:$0xf]
        %v833 = vld [vmem:[%s342 + $0x344] sm:$0xf]
        %v834 = vld [vmem:[%s342 + $0x348] sm:$0xf]
        %v835 = vld [vmem:[%s342 + $0x34c] sm:$0xf]
        %v836 = vld [vmem:[%s342 + $0x350] sm:$0xf]
        %v837 = vld [vmem:[%s342 + $0x354] sm:$0xf]
        %v838 = vld [vmem:[%s342 + $0x358] sm:$0xf]
        %v839 = vld [vmem:[%s342 + $0x35c] sm:$0xf]
        %v840 = vld [vmem:[%s342 + $0x360] sm:$0xf]
        %v841 = vld [vmem:[%s342 + $0x364] sm:$0xf]
        %v842 = vld [vmem:[%s342 + $0x368] sm:$0xf]
        %v843 = vld [vmem:[%s342 + $0x36c] sm:$0xf]
        %v844 = vld [vmem:[%s342 + $0x370] sm:$0xf]
        %v845 = vld [vmem:[%s342 + $0x374] sm:$0xf]
        %v846 = vld [vmem:[%s342 + $0x378] sm:$0xf]
        %v847 = vld [vmem:[%s342 + $0x37c] sm:$0xf]
        %v848 = vld [vmem:[%s342 + $0x380] sm:$0xf]
        %v849 = vld [vmem:[%s342 + $0x384] sm:$0xf]
        %v850 = vld [vmem:[%s342 + $0x388] sm:$0xf]
        %v851 = vld [vmem:[%s342 + $0x38c] sm:$0xf]
        %v852 = vld [vmem:[%s342 + $0x390] sm:$0xf]
        %v853 = vld [vmem:[%s342 + $0x394] sm:$0xf]
        %v854 = vld [vmem:[%s342 + $0x398] sm:$0xf]
        %v855 = vld [vmem:[%s342 + $0x39c] sm:$0xf]
        %v856 = vld [vmem:[%s342 + $0x3a0] sm:$0xf]
        %v857 = vld [vmem:[%s342 + $0x3a4] sm:$0xf]
        %v858 = vld [vmem:[%s342 + $0x3a8] sm:$0xf]
        %v859 = vld [vmem:[%s342 + $0x3ac] sm:$0xf]
        %v860 = vld [vmem:[%s342 + $0x3b0] sm:$0xf]
        %v861 = vld [vmem:[%s342 + $0x3b4] sm:$0xf]
        %v862 = vld [vmem:[%s342 + $0x3b8] sm:$0xf]
        %v863 = vld [vmem:[%s342 + $0x3bc] sm:$0xf]
        %v864 = vld [vmem:[%s342 + $0x3c0] sm:$0xf]
        %v865 = vld [vmem:[%s342 + $0x3c4] sm:$0xf]
        %v866 = vld [vmem:[%s342 + $0x3c8] sm:$0xf]
        %v867 = vld [vmem:[%s342 + $0x3cc] sm:$0xf]
        %v868 = vld [vmem:[%s342 + $0x3d0] sm:$0xf]
        %v869 = vld [vmem:[%s342 + $0x3d4] sm:$0xf]
        %v870 = vld [vmem:[%s342 + $0x3d8] sm:$0xf]
        %v871 = vld [vmem:[%s342 + $0x3dc] sm:$0xf]
        %v872 = vld [vmem:[%s342 + $0x3e0] sm:$0xf]
        %v873 = vld [vmem:[%s342 + $0x3e4] sm:$0xf]
        %v874 = vld [vmem:[%s342 + $0x3e8] sm:$0xf]
        %v875 = vld [vmem:[%s342 + $0x3ec] sm:$0xf]
        %v876 = vld [vmem:[%s342 + $0x3f0] sm:$0xf]
        %v877 = vld [vmem:[%s342 + $0x3f4] sm:$0xf]
        %v878 = vld [vmem:[%s342 + $0x3f8] sm:$0xf]
        %v879 = vld [vmem:[%s342 + $0x3fc] sm:$0xf]
        %v1136 = vunpack.c.l.b16 %v624
        %v1137 = vunpack.c.l.b16 %v625
        %v1138 = vunpack.c.l.b16 %v626
        %v1139 = vunpack.c.l.b16 %v627
        %v1140 = vunpack.c.l.b16 %v628
        %v1141 = vunpack.c.l.b16 %v629
        %v1142 = vunpack.c.l.b16 %v630
        %v1143 = vunpack.c.l.b16 %v631
        %v1144 = vunpack.c.l.b16 %v632
        %v1145 = vunpack.c.l.b16 %v633
        %v1146 = vunpack.c.l.b16 %v634
        %v1147 = vunpack.c.l.b16 %v635
        %v1148 = vunpack.c.l.b16 %v636
        %v1149 = vunpack.c.l.b16 %v637
        %v1150 = vunpack.c.l.b16 %v638
        %v1151 = vunpack.c.l.b16 %v639
        %v1152 = vunpack.c.l.b16 %v640
        %v1153 = vunpack.c.l.b16 %v641
        %v1154 = vunpack.c.l.b16 %v642
        %v1155 = vunpack.c.l.b16 %v643
        %v1156 = vunpack.c.l.b16 %v644
        %v1157 = vunpack.c.l.b16 %v645
        %v1158 = vunpack.c.l.b16 %v646
        %v1159 = vunpack.c.l.b16 %v647
        %v1160 = vunpack.c.l.b16 %v648
        %v1161 = vunpack.c.l.b16 %v649
        %v1162 = vunpack.c.l.b16 %v650
        %v1163 = vunpack.c.l.b16 %v651
        %v1164 = vunpack.c.l.b16 %v652
        %v1165 = vunpack.c.l.b16 %v653
        %v1166 = vunpack.c.l.b16 %v654
        %v1167 = vunpack.c.l.b16 %v655
        %v1168 = vunpack.c.l.b16 %v656
        %v1169 = vunpack.c.l.b16 %v657
        %v1170 = vunpack.c.l.b16 %v658
        %v1171 = vunpack.c.l.b16 %v659
        %v1172 = vunpack.c.l.b16 %v660
        %v1173 = vunpack.c.l.b16 %v661
        %v1174 = vunpack.c.l.b16 %v662
        %v1175 = vunpack.c.l.b16 %v663
        %v1176 = vunpack.c.l.b16 %v664
        %v1177 = vunpack.c.l.b16 %v665
        %v1178 = vunpack.c.l.b16 %v666
        %v1179 = vunpack.c.l.b16 %v667
        %v1180 = vunpack.c.l.b16 %v668
        %v1181 = vunpack.c.l.b16 %v669
        %v1182 = vunpack.c.l.b16 %v670
        %v1183 = vunpack.c.l.b16 %v671
        %v1184 = vunpack.c.l.b16 %v672
        %v1185 = vunpack.c.l.b16 %v673
        %v1186 = vunpack.c.l.b16 %v674
        %v1187 = vunpack.c.l.b16 %v675
        %v1188 = vunpack.c.l.b16 %v676
        %v1189 = vunpack.c.l.b16 %v677
        %v1190 = vunpack.c.l.b16 %v678
        %v1191 = vunpack.c.l.b16 %v679
        %v1192 = vunpack.c.l.b16 %v680
        %v1193 = vunpack.c.l.b16 %v681
        %v1194 = vunpack.c.l.b16 %v682
        %v1195 = vunpack.c.l.b16 %v683
        %v1196 = vunpack.c.l.b16 %v684
        %v1197 = vunpack.c.l.b16 %v685
        %v1198 = vunpack.c.l.b16 %v686
        %v1199 = vunpack.c.l.b16 %v687
        %v1200 = vunpack.c.l.b16 %v688
        %v1201 = vunpack.c.l.b16 %v689
        %v1202 = vunpack.c.l.b16 %v690
        %v1203 = vunpack.c.l.b16 %v691
        %v1204 = vunpack.c.l.b16 %v692
        %v1205 = vunpack.c.l.b16 %v693
        %v1206 = vunpack.c.l.b16 %v694
        %v1207 = vunpack.c.l.b16 %v695
        %v1208 = vunpack.c.l.b16 %v696
        %v1209 = vunpack.c.l.b16 %v697
        %v1210 = vunpack.c.l.b16 %v698
        %v1211 = vunpack.c.l.b16 %v699
        %v1212 = vunpack.c.l.b16 %v700
        %v1213 = vunpack.c.l.b16 %v701
        %v1214 = vunpack.c.l.b16 %v702
        %v1215 = vunpack.c.l.b16 %v703
        %v1216 = vunpack.c.l.b16 %v704
        %v1217 = vunpack.c.l.b16 %v705
        %v1218 = vunpack.c.l.b16 %v706
        %v1219 = vunpack.c.l.b16 %v707
        %v1220 = vunpack.c.l.b16 %v708
        %v1221 = vunpack.c.l.b16 %v709
        %v1222 = vunpack.c.l.b16 %v710
        %v1223 = vunpack.c.l.b16 %v711
        %v1224 = vunpack.c.l.b16 %v712
        %v1225 = vunpack.c.l.b16 %v713
        %v1226 = vunpack.c.l.b16 %v714
        %v1227 = vunpack.c.l.b16 %v715
        %v1228 = vunpack.c.l.b16 %v716
        %v1229 = vunpack.c.l.b16 %v717
        %v1230 = vunpack.c.l.b16 %v718
        %v1231 = vunpack.c.l.b16 %v719
        %v1232 = vunpack.c.l.b16 %v720
        %v1233 = vunpack.c.l.b16 %v721
        %v1234 = vunpack.c.l.b16 %v722
        %v1235 = vunpack.c.l.b16 %v723
        %v1236 = vunpack.c.l.b16 %v724
        %v1237 = vunpack.c.l.b16 %v725
        %v1238 = vunpack.c.l.b16 %v726
        %v1239 = vunpack.c.l.b16 %v727
        %v1240 = vunpack.c.l.b16 %v728
        %v1241 = vunpack.c.l.b16 %v729
        %v1242 = vunpack.c.l.b16 %v730
        %v1243 = vunpack.c.l.b16 %v731
        %v1244 = vunpack.c.l.b16 %v732
        %v1245 = vunpack.c.l.b16 %v733
        %v1246 = vunpack.c.l.b16 %v734
        %v1247 = vunpack.c.l.b16 %v735
        %v1248 = vunpack.c.l.b16 %v736
        %v1249 = vunpack.c.l.b16 %v737
        %v1250 = vunpack.c.l.b16 %v738
        %v1251 = vunpack.c.l.b16 %v739
        %v1252 = vunpack.c.l.b16 %v740
        %v1253 = vunpack.c.l.b16 %v741
        %v1254 = vunpack.c.l.b16 %v742
        %v1255 = vunpack.c.l.b16 %v743
        %v1256 = vunpack.c.l.b16 %v744
        %v1257 = vunpack.c.l.b16 %v745
        %v1258 = vunpack.c.l.b16 %v746
        %v1259 = vunpack.c.l.b16 %v747
        %v1260 = vunpack.c.l.b16 %v748
        %v1261 = vunpack.c.l.b16 %v749
        %v1262 = vunpack.c.l.b16 %v750
        %v1263 = vunpack.c.l.b16 %v751
        %v1264 = vunpack.c.l.b16 %v752
        %v1265 = vunpack.c.l.b16 %v753
        %v1266 = vunpack.c.l.b16 %v754
        %v1267 = vunpack.c.l.b16 %v755
        %v1268 = vunpack.c.l.b16 %v756
        %v1269 = vunpack.c.l.b16 %v757
        %v1270 = vunpack.c.l.b16 %v758
        %v1271 = vunpack.c.l.b16 %v759
        %v1272 = vunpack.c.l.b16 %v760
        %v1273 = vunpack.c.l.b16 %v761
        %v1274 = vunpack.c.l.b16 %v762
        %v1275 = vunpack.c.l.b16 %v763
        %v1276 = vunpack.c.l.b16 %v764
        %v1277 = vunpack.c.l.b16 %v765
        %v1278 = vunpack.c.l.b16 %v766
        %v1279 = vunpack.c.l.b16 %v767
        %v1280 = vunpack.c.l.b16 %v768
        %v1281 = vunpack.c.l.b16 %v769
        %v1282 = vunpack.c.l.b16 %v770
        %v1283 = vunpack.c.l.b16 %v771
        %v1284 = vunpack.c.l.b16 %v772
        %v1285 = vunpack.c.l.b16 %v773
        %v1286 = vunpack.c.l.b16 %v774
        %v1287 = vunpack.c.l.b16 %v775
        %v1288 = vunpack.c.l.b16 %v776
        %v1289 = vunpack.c.l.b16 %v777
        %v1290 = vunpack.c.l.b16 %v778
        %v1291 = vunpack.c.l.b16 %v779
        %v1292 = vunpack.c.l.b16 %v780
        %v1293 = vunpack.c.l.b16 %v781
        %v1294 = vunpack.c.l.b16 %v782
        %v1295 = vunpack.c.l.b16 %v783
        %v1296 = vunpack.c.l.b16 %v784
        %v1297 = vunpack.c.l.b16 %v785
        %v1298 = vunpack.c.l.b16 %v786
        %v1299 = vunpack.c.l.b16 %v787
        %v1300 = vunpack.c.l.b16 %v788
        %v1301 = vunpack.c.l.b16 %v789
        %v1302 = vunpack.c.l.b16 %v790
        %v1303 = vunpack.c.l.b16 %v791
        %v1304 = vunpack.c.l.b16 %v792
        %v1305 = vunpack.c.l.b16 %v793
        %v1306 = vunpack.c.l.b16 %v794
        %v1307 = vunpack.c.l.b16 %v795
        %v1308 = vunpack.c.l.b16 %v796
        %v1309 = vunpack.c.l.b16 %v797
        %v1310 = vunpack.c.l.b16 %v798
        %v1311 = vunpack.c.l.b16 %v799
        %v1312 = vunpack.c.l.b16 %v800
        %v1313 = vunpack.c.l.b16 %v801
        %v1314 = vunpack.c.l.b16 %v802
        %v1315 = vunpack.c.l.b16 %v803
        %v1316 = vunpack.c.l.b16 %v804
        %v1317 = vunpack.c.l.b16 %v805
        %v1318 = vunpack.c.l.b16 %v806
        %v1319 = vunpack.c.l.b16 %v807
        %v1320 = vunpack.c.l.b16 %v808
        %v1321 = vunpack.c.l.b16 %v809
        %v1322 = vunpack.c.l.b16 %v810
        %v1323 = vunpack.c.l.b16 %v811
        %v1324 = vunpack.c.l.b16 %v812
        %v1325 = vunpack.c.l.b16 %v813
        %v1326 = vunpack.c.l.b16 %v814
        %v1327 = vunpack.c.l.b16 %v815
        %v1328 = vunpack.c.l.b16 %v816
        %v1329 = vunpack.c.l.b16 %v817
        %v1330 = vunpack.c.l.b16 %v818
        %v1331 = vunpack.c.l.b16 %v819
        %v1332 = vunpack.c.l.b16 %v820
        %v1333 = vunpack.c.l.b16 %v821
        %v1334 = vunpack.c.l.b16 %v822
        %v1335 = vunpack.c.l.b16 %v823
        %v1336 = vunpack.c.l.b16 %v824
        %v1337 = vunpack.c.l.b16 %v825
        %v1338 = vunpack.c.l.b16 %v826
        %v1339 = vunpack.c.l.b16 %v827
        %v1340 = vunpack.c.l.b16 %v828
        %v1341 = vunpack.c.l.b16 %v829
        %v1342 = vunpack.c.l.b16 %v830
        %v1343 = vunpack.c.l.b16 %v831
        %v1344 = vunpack.c.l.b16 %v832
        %v1345 = vunpack.c.l.b16 %v833
        %v1346 = vunpack.c.l.b16 %v834
        %v1347 = vunpack.c.l.b16 %v835
        %v1348 = vunpack.c.l.b16 %v836
        %v1349 = vunpack.c.l.b16 %v837
        %v1350 = vunpack.c.l.b16 %v838
        %v1351 = vunpack.c.l.b16 %v839
        %v1352 = vunpack.c.l.b16 %v840
        %v1353 = vunpack.c.l.b16 %v841
        %v1354 = vunpack.c.l.b16 %v842
        %v1355 = vunpack.c.l.b16 %v843
        %v1356 = vunpack.c.l.b16 %v844
        %v1357 = vunpack.c.l.b16 %v845
        %v1358 = vunpack.c.l.b16 %v846
        %v1359 = vunpack.c.l.b16 %v847
        %v1360 = vunpack.c.l.b16 %v848
        %v1361 = vunpack.c.l.b16 %v849
        %v1362 = vunpack.c.l.b16 %v850
        %v1363 = vunpack.c.l.b16 %v851
        %v1364 = vunpack.c.l.b16 %v852
        %v1365 = vunpack.c.l.b16 %v853
        %v1366 = vunpack.c.l.b16 %v854
        %v1367 = vunpack.c.l.b16 %v855
        %v1368 = vunpack.c.l.b16 %v856
        %v1369 = vunpack.c.l.b16 %v857
        %v1370 = vunpack.c.l.b16 %v858
        %v1371 = vunpack.c.l.b16 %v859
        %v1372 = vunpack.c.l.b16 %v860
        %v1373 = vunpack.c.l.b16 %v861
        %v1374 = vunpack.c.l.b16 %v862
        %v1375 = vunpack.c.l.b16 %v863
        %v1376 = vunpack.c.l.b16 %v864
        %v1377 = vunpack.c.l.b16 %v865
        %v1378 = vunpack.c.l.b16 %v866
        %v1379 = vunpack.c.l.b16 %v867
        %v1380 = vunpack.c.l.b16 %v868
        %v1381 = vunpack.c.l.b16 %v869
        %v1382 = vunpack.c.l.b16 %v870
        %v1383 = vunpack.c.l.b16 %v871
        %v1384 = vunpack.c.l.b16 %v872
        %v1385 = vunpack.c.l.b16 %v873
        %v1386 = vunpack.c.l.b16 %v874
        %v1387 = vunpack.c.l.b16 %v875
        %v1388 = vunpack.c.l.b16 %v876
        %v1389 = vunpack.c.l.b16 %v877
        %v1390 = vunpack.c.l.b16 %v878
        %v1391 = vunpack.c.l.b16 %v879
        %v1392 = vpack.c.b16 %v1137, %v1136
        %v1393 = vpack.c.b16 %v1139, %v1138
        %v1394 = vpack.c.b16 %v1141, %v1140
        %v1395 = vpack.c.b16 %v1143, %v1142
        %v1396 = vpack.c.b16 %v1145, %v1144
        %v1397 = vpack.c.b16 %v1147, %v1146
        %v1398 = vpack.c.b16 %v1149, %v1148
        %v1399 = vpack.c.b16 %v1151, %v1150
        %v1400 = vpack.c.b16 %v1153, %v1152
        %v1401 = vpack.c.b16 %v1155, %v1154
        %v1402 = vpack.c.b16 %v1157, %v1156
        %v1403 = vpack.c.b16 %v1159, %v1158
        %v1404 = vpack.c.b16 %v1161, %v1160
        %v1405 = vpack.c.b16 %v1163, %v1162
        %v1406 = vpack.c.b16 %v1165, %v1164
        %v1407 = vpack.c.b16 %v1167, %v1166
        %v1408 = vpack.c.b16 %v1169, %v1168
        %v1409 = vpack.c.b16 %v1171, %v1170
        %v1410 = vpack.c.b16 %v1173, %v1172
        %v1411 = vpack.c.b16 %v1175, %v1174
        %v1412 = vpack.c.b16 %v1177, %v1176
        %v1413 = vpack.c.b16 %v1179, %v1178
        %v1414 = vpack.c.b16 %v1181, %v1180
        %v1415 = vpack.c.b16 %v1183, %v1182
        %v1416 = vpack.c.b16 %v1185, %v1184
        %v1417 = vpack.c.b16 %v1187, %v1186
        %v1418 = vpack.c.b16 %v1189, %v1188
        %v1419 = vpack.c.b16 %v1191, %v1190
        %v1420 = vpack.c.b16 %v1193, %v1192
        %v1421 = vpack.c.b16 %v1195, %v1194
        %v1422 = vpack.c.b16 %v1197, %v1196
        %v1423 = vpack.c.b16 %v1199, %v1198
        %v1424 = vpack.c.b16 %v1201, %v1200
        %v1425 = vpack.c.b16 %v1203, %v1202
        %v1426 = vpack.c.b16 %v1205, %v1204
        %v1427 = vpack.c.b16 %v1207, %v1206
        %v1428 = vpack.c.b16 %v1209, %v1208
        %v1429 = vpack.c.b16 %v1211, %v1210
        %v1430 = vpack.c.b16 %v1213, %v1212
        %v1431 = vpack.c.b16 %v1215, %v1214
        %v1432 = vpack.c.b16 %v1217, %v1216
        %v1433 = vpack.c.b16 %v1219, %v1218
        %v1434 = vpack.c.b16 %v1221, %v1220
        %v1435 = vpack.c.b16 %v1223, %v1222
        %v1436 = vpack.c.b16 %v1225, %v1224
        %v1437 = vpack.c.b16 %v1227, %v1226
        %v1438 = vpack.c.b16 %v1229, %v1228
        %v1439 = vpack.c.b16 %v1231, %v1230
        %v1440 = vpack.c.b16 %v1233, %v1232
        %v1441 = vpack.c.b16 %v1235, %v1234
        %v1442 = vpack.c.b16 %v1237, %v1236
        %v1443 = vpack.c.b16 %v1239, %v1238
        %v1444 = vpack.c.b16 %v1241, %v1240
        %v1445 = vpack.c.b16 %v1243, %v1242
        %v1446 = vpack.c.b16 %v1245, %v1244
        %v1447 = vpack.c.b16 %v1247, %v1246
        %v1448 = vpack.c.b16 %v1249, %v1248
        %v1449 = vpack.c.b16 %v1251, %v1250
        %v1450 = vpack.c.b16 %v1253, %v1252
        %v1451 = vpack.c.b16 %v1255, %v1254
        %v1452 = vpack.c.b16 %v1257, %v1256
        %v1453 = vpack.c.b16 %v1259, %v1258
        %v1454 = vpack.c.b16 %v1261, %v1260
        %v1455 = vpack.c.b16 %v1263, %v1262
        %v1456 = vpack.c.b16 %v1265, %v1264
        %v1457 = vpack.c.b16 %v1267, %v1266
        %v1458 = vpack.c.b16 %v1269, %v1268
        %v1459 = vpack.c.b16 %v1271, %v1270
        %v1460 = vpack.c.b16 %v1273, %v1272
        %v1461 = vpack.c.b16 %v1275, %v1274
        %v1462 = vpack.c.b16 %v1277, %v1276
        %v1463 = vpack.c.b16 %v1279, %v1278
        %v1464 = vpack.c.b16 %v1281, %v1280
        %v1465 = vpack.c.b16 %v1283, %v1282
        %v1466 = vpack.c.b16 %v1285, %v1284
        %v1467 = vpack.c.b16 %v1287, %v1286
        %v1468 = vpack.c.b16 %v1289, %v1288
        %v1469 = vpack.c.b16 %v1291, %v1290
        %v1470 = vpack.c.b16 %v1293, %v1292
        %v1471 = vpack.c.b16 %v1295, %v1294
        %v1472 = vpack.c.b16 %v1297, %v1296
        %v1473 = vpack.c.b16 %v1299, %v1298
        %v1474 = vpack.c.b16 %v1301, %v1300
        %v1475 = vpack.c.b16 %v1303, %v1302
        %v1476 = vpack.c.b16 %v1305, %v1304
        %v1477 = vpack.c.b16 %v1307, %v1306
        %v1478 = vpack.c.b16 %v1309, %v1308
        %v1479 = vpack.c.b16 %v1311, %v1310
        %v1480 = vpack.c.b16 %v1313, %v1312
        %v1481 = vpack.c.b16 %v1315, %v1314
        %v1482 = vpack.c.b16 %v1317, %v1316
        %v1483 = vpack.c.b16 %v1319, %v1318
        %v1484 = vpack.c.b16 %v1321, %v1320
        %v1485 = vpack.c.b16 %v1323, %v1322
        %v1486 = vpack.c.b16 %v1325, %v1324
        %v1487 = vpack.c.b16 %v1327, %v1326
        %v1488 = vpack.c.b16 %v1329, %v1328
        %v1489 = vpack.c.b16 %v1331, %v1330
        %v1490 = vpack.c.b16 %v1333, %v1332
        %v1491 = vpack.c.b16 %v1335, %v1334
        %v1492 = vpack.c.b16 %v1337, %v1336
        %v1493 = vpack.c.b16 %v1339, %v1338
        %v1494 = vpack.c.b16 %v1341, %v1340
        %v1495 = vpack.c.b16 %v1343, %v1342
        %v1496 = vpack.c.b16 %v1345, %v1344
        %v1497 = vpack.c.b16 %v1347, %v1346
        %v1498 = vpack.c.b16 %v1349, %v1348
        %v1499 = vpack.c.b16 %v1351, %v1350
        %v1500 = vpack.c.b16 %v1353, %v1352
        %v1501 = vpack.c.b16 %v1355, %v1354
        %v1502 = vpack.c.b16 %v1357, %v1356
        %v1503 = vpack.c.b16 %v1359, %v1358
        %v1504 = vpack.c.b16 %v1361, %v1360
        %v1505 = vpack.c.b16 %v1363, %v1362
        %v1506 = vpack.c.b16 %v1365, %v1364
        %v1507 = vpack.c.b16 %v1367, %v1366
        %v1508 = vpack.c.b16 %v1369, %v1368
        %v1509 = vpack.c.b16 %v1371, %v1370
        %v1510 = vpack.c.b16 %v1373, %v1372
        %v1511 = vpack.c.b16 %v1375, %v1374
        %v1512 = vpack.c.b16 %v1377, %v1376
        %v1513 = vpack.c.b16 %v1379, %v1378
        %v1514 = vpack.c.b16 %v1381, %v1380
        %v1515 = vpack.c.b16 %v1383, %v1382
        %v1516 = vpack.c.b16 %v1385, %v1384
        %v1517 = vpack.c.b16 %v1387, %v1386
        %v1518 = vpack.c.b16 %v1389, %v1388
        %v1519 = vpack.c.b16 %v1391, %v1390
        %1648 = vmatprep.subr.bf16.mxu0 0
        %1649 = vmatpush1.bf16.msra.mxu0 %v1392
        %1650 = vmatprep.subr.bf16.mxu0 0
        %1651 = vmatpush1.bf16.msra.mxu0 %v1393
        %1652 = vmatprep.subr.bf16.mxu0 0
        %1653 = vmatpush1.bf16.msra.mxu0 %v1394
        %1654 = vmatprep.subr.bf16.mxu0 0
        %1655 = vmatpush1.bf16.msra.mxu0 %v1395
        %1656 = vmatprep.subr.bf16.mxu0 0
        %1657 = vmatpush1.bf16.msra.mxu0 %v1396
        %1658 = vmatprep.subr.bf16.mxu0 0
        %1659 = vmatpush1.bf16.msra.mxu0 %v1397
        %1660 = vmatprep.subr.bf16.mxu0 0
        %1661 = vmatpush1.bf16.msra.mxu0 %v1398
        %1662 = vmatprep.subr.bf16.mxu0 0
        %1663 = vmatpush1.bf16.msra.mxu0 %v1399
        %1664 = vmatprep.subr.bf16.mxu0 0
        %1665 = vmatpush1.bf16.msra.mxu0 %v1400
        %1666 = vmatprep.subr.bf16.mxu0 0
        %1667 = vmatpush1.bf16.msra.mxu0 %v1401
        %1668 = vmatprep.subr.bf16.mxu0 0
        %1669 = vmatpush1.bf16.msra.mxu0 %v1402
        %1670 = vmatprep.subr.bf16.mxu0 0
        %1671 = vmatpush1.bf16.msra.mxu0 %v1403
        %1672 = vmatprep.subr.bf16.mxu0 0
        %1673 = vmatpush1.bf16.msra.mxu0 %v1404
        %1674 = vmatprep.subr.bf16.mxu0 0
        %1675 = vmatpush1.bf16.msra.mxu0 %v1405
        %1676 = vmatprep.subr.bf16.mxu0 0
        %1677 = vmatpush1.bf16.msra.mxu0 %v1406
        %1678 = vmatprep.subr.bf16.mxu0 0
        %1679 = vmatpush1.bf16.msra.mxu0 %v1407
        %1680 = vmatprep.mubr.bf16.mxu0 %v608
        %1681 = vmatmul.mubr.bf16.gmra.mrb[0].mxu0 %v607
        %v1682 = vpop.f32.mrb[0].mxu0
        %v1683 = vadd.f32 0.0, %v1682
        %v1684 = vpop.f32.mrb[0].mxu0
        %v1685 = vpop.f32.mrb[0].mxu0
        %v1686 = vpop.f32.mrb[0].mxu0
        %1687 = vdwg.mxu0
        %1688 = vmatprep.subr.bf16.mxu0 0
        %1689 = vmatpush1.bf16.msra.mxu0 %v1408
        %1690 = vmatprep.subr.bf16.mxu0 0
        %1691 = vmatpush1.bf16.msra.mxu0 %v1409
        %1692 = vmatprep.subr.bf16.mxu0 0
        %1693 = vmatpush1.bf16.msra.mxu0 %v1410
        %1694 = vmatprep.subr.bf16.mxu0 0
        %1695 = vmatpush1.bf16.msra.mxu0 %v1411
        %1696 = vmatprep.subr.bf16.mxu0 0
        %1697 = vmatpush1.bf16.msra.mxu0 %v1412
        %1698 = vmatprep.subr.bf16.mxu0 0
        %1699 = vmatpush1.bf16.msra.mxu0 %v1413
        %1700 = vmatprep.subr.bf16.mxu0 0
        %1701 = vmatpush1.bf16.msra.mxu0 %v1414
        %1702 = vmatprep.subr.bf16.mxu0 0
        %1703 = vmatpush1.bf16.msra.mxu0 %v1415
        %1704 = vmatprep.subr.bf16.mxu0 0
        %1705 = vmatpush1.bf16.msra.mxu0 %v1416
        %1706 = vmatprep.subr.bf16.mxu0 0
        %1707 = vmatpush1.bf16.msra.mxu0 %v1417
        %1708 = vmatprep.subr.bf16.mxu0 0
        %1709 = vmatpush1.bf16.msra.mxu0 %v1418
        %1710 = vmatprep.subr.bf16.mxu0 0
        %1711 = vmatpush1.bf16.msra.mxu0 %v1419
        %1712 = vmatprep.subr.bf16.mxu0 0
        %1713 = vmatpush1.bf16.msra.mxu0 %v1420
        %1714 = vmatprep.subr.bf16.mxu0 0
        %1715 = vmatpush1.bf16.msra.mxu0 %v1421
        %1716 = vmatprep.subr.bf16.mxu0 0
        %1717 = vmatpush1.bf16.msra.mxu0 %v1422
        %1718 = vmatprep.subr.bf16.mxu0 0
        %1719 = vmatpush1.bf16.msra.mxu0 %v1423
        %1720 = vmatprep.mubr.bf16.mxu0 %v610
        %1721 = vmatmul.mubr.bf16.gmra.mrb[0].mxu0 %v609
        %v1722 = vpop.f32.mrb[0].mxu0
        %v1723 = vadd.f32 %v1683, %v1722
        %v1724 = vpop.f32.mrb[0].mxu0
        %v1725 = vpop.f32.mrb[0].mxu0
        %v1726 = vpop.f32.mrb[0].mxu0
        %1727 = vdwg.mxu0
        %1728 = vmatprep.subr.bf16.mxu0 0
        %1729 = vmatpush1.bf16.msra.mxu0 %v1424
        %1730 = vmatprep.subr.bf16.mxu0 0
        %1731 = vmatpush1.bf16.msra.mxu0 %v1425
        %1732 = vmatprep.subr.bf16.mxu0 0
        %1733 = vmatpush1.bf16.msra.mxu0 %v1426
        %1734 = vmatprep.subr.bf16.mxu0 0
        %1735 = vmatpush1.bf16.msra.mxu0 %v1427
        %1736 = vmatprep.subr.bf16.mxu0 0
        %1737 = vmatpush1.bf16.msra.mxu0 %v1428
        %1738 = vmatprep.subr.bf16.mxu0 0
        %1739 = vmatpush1.bf16.msra.mxu0 %v1429
        %1740 = vmatprep.subr.bf16.mxu0 0
        %1741 = vmatpush1.bf16.msra.mxu0 %v1430
        %1742 = vmatprep.subr.bf16.mxu0 0
        %1743 = vmatpush1.bf16.msra.mxu0 %v1431
        %1744 = vmatprep.subr.bf16.mxu0 0
        %1745 = vmatpush1.bf16.msra.mxu0 %v1432
        %1746 = vmatprep.subr.bf16.mxu0 0
        %1747 = vmatpush1.bf16.msra.mxu0 %v1433
        %1748 = vmatprep.subr.bf16.mxu0 0
        %1749 = vmatpush1.bf16.msra.mxu0 %v1434
        %1750 = vmatprep.subr.bf16.mxu0 0
        %1751 = vmatpush1.bf16.msra.mxu0 %v1435
        %1752 = vmatprep.subr.bf16.mxu0 0
        %1753 = vmatpush1.bf16.msra.mxu0 %v1436
        %1754 = vmatprep.subr.bf16.mxu0 0
        %1755 = vmatpush1.bf16.msra.mxu0 %v1437
        %1756 = vmatprep.subr.bf16.mxu0 0
        %1757 = vmatpush1.bf16.msra.mxu0 %v1438
        %1758 = vmatprep.subr.bf16.mxu0 0
        %1759 = vmatpush1.bf16.msra.mxu0 %v1439
        %1760 = vmatprep.mubr.bf16.mxu0 %v612
        %1761 = vmatmul.mubr.bf16.gmra.mrb[0].mxu0 %v611
        %v1762 = vpop.f32.mrb[0].mxu0
        %v1763 = vadd.f32 %v1723, %v1762
        %v1764 = vpop.f32.mrb[0].mxu0
        %v1765 = vpop.f32.mrb[0].mxu0
        %v1766 = vpop.f32.mrb[0].mxu0
        %1767 = vdwg.mxu0
        %1768 = vmatprep.subr.bf16.mxu0 0
        %1769 = vmatpush1.bf16.msra.mxu0 %v1440
        %1770 = vmatprep.subr.bf16.mxu0 0
        %1771 = vmatpush1.bf16.msra.mxu0 %v1441
        %1772 = vmatprep.subr.bf16.mxu0 0
        %1773 = vmatpush1.bf16.msra.mxu0 %v1442
        %1774 = vmatprep.subr.bf16.mxu0 0
        %1775 = vmatpush1.bf16.msra.mxu0 %v1443
        %1776 = vmatprep.subr.bf16.mxu0 0
        %1777 = vmatpush1.bf16.msra.mxu0 %v1444
        %1778 = vmatprep.subr.bf16.mxu0 0
        %1779 = vmatpush1.bf16.msra.mxu0 %v1445
        %1780 = vmatprep.subr.bf16.mxu0 0
        %1781 = vmatpush1.bf16.msra.mxu0 %v1446
        %1782 = vmatprep.subr.bf16.mxu0 0
        %1783 = vmatpush1.bf16.msra.mxu0 %v1447
        %1784 = vmatprep.subr.bf16.mxu0 0
        %1785 = vmatpush1.bf16.msra.mxu0 %v1448
        %1786 = vmatprep.subr.bf16.mxu0 0
        %1787 = vmatpush1.bf16.msra.mxu0 %v1449
        %1788 = vmatprep.subr.bf16.mxu0 0
        %1789 = vmatpush1.bf16.msra.mxu0 %v1450
        %1790 = vmatprep.subr.bf16.mxu0 0
        %1791 = vmatpush1.bf16.msra.mxu0 %v1451
        %1792 = vmatprep.subr.bf16.mxu0 0
        %1793 = vmatpush1.bf16.msra.mxu0 %v1452
        %1794 = vmatprep.subr.bf16.mxu0 0
        %1795 = vmatpush1.bf16.msra.mxu0 %v1453
        %1796 = vmatprep.subr.bf16.mxu0 0
        %1797 = vmatpush1.bf16.msra.mxu0 %v1454
        %1798 = vmatprep.subr.bf16.mxu0 0
        %1799 = vmatpush1.bf16.msra.mxu0 %v1455
        %1800 = vmatprep.mubr.bf16.mxu0 %v614
        %1801 = vmatmul.mubr.bf16.gmra.mrb[0].mxu0 %v613
        %v1802 = vpop.f32.mrb[0].mxu0
        %v1803 = vadd.f32 %v1763, %v1802
        %v1804 = vpop.f32.mrb[0].mxu0
        %v1805 = vpop.f32.mrb[0].mxu0
        %v1806 = vpop.f32.mrb[0].mxu0
        %1807 = vdwg.mxu0
        %1808 = vmatprep.subr.bf16.mxu0 0
        %1809 = vmatpush1.bf16.msra.mxu0 %v1456
        %1810 = vmatprep.subr.bf16.mxu0 0
        %1811 = vmatpush1.bf16.msra.mxu0 %v1457
        %1812 = vmatprep.subr.bf16.mxu0 0
        %1813 = vmatpush1.bf16.msra.mxu0 %v1458
        %1814 = vmatprep.subr.bf16.mxu0 0
        %1815 = vmatpush1.bf16.msra.mxu0 %v1459
        %1816 = vmatprep.subr.bf16.mxu0 0
        %1817 = vmatpush1.bf16.msra.mxu0 %v1460
        %1818 = vmatprep.subr.bf16.mxu0 0
        %1819 = vmatpush1.bf16.msra.mxu0 %v1461
        %1820 = vmatprep.subr.bf16.mxu0 0
        %1821 = vmatpush1.bf16.msra.mxu0 %v1462
        %1822 = vmatprep.subr.bf16.mxu0 0
        %1823 = vmatpush1.bf16.msra.mxu0 %v1463
        %1824 = vmatprep.subr.bf16.mxu0 0
        %1825 = vmatpush1.bf16.msra.mxu0 %v1464
        %1826 = vmatprep.subr.bf16.mxu0 0
        %1827 = vmatpush1.bf16.msra.mxu0 %v1465
        %1828 = vmatprep.subr.bf16.mxu0 0
        %1829 = vmatpush1.bf16.msra.mxu0 %v1466
        %1830 = vmatprep.subr.bf16.mxu0 0
        %1831 = vmatpush1.bf16.msra.mxu0 %v1467
        %1832 = vmatprep.subr.bf16.mxu0 0
        %1833 = vmatpush1.bf16.msra.mxu0 %v1468
        %1834 = vmatprep.subr.bf16.mxu0 0
        %1835 = vmatpush1.bf16.msra.mxu0 %v1469
        %1836 = vmatprep.subr.bf16.mxu0 0
        %1837 = vmatpush1.bf16.msra.mxu0 %v1470
        %1838 = vmatprep.subr.bf16.mxu0 0
        %1839 = vmatpush1.bf16.msra.mxu0 %v1471
        %1840 = vmatprep.mubr.bf16.mxu0 %v616
        %1841 = vmatmul.mubr.bf16.gmra.mrb[0].mxu0 %v615
        %v1842 = vpop.f32.mrb[0].mxu0
        %v1843 = vadd.f32 %v1803, %v1842
        %v1844 = vpop.f32.mrb[0].mxu0
        %v1845 = vpop.f32.mrb[0].mxu0
        %v1846 = vpop.f32.mrb[0].mxu0
        %1847 = vdwg.mxu0
        %1848 = vmatprep.subr.bf16.mxu0 0
        %1849 = vmatpush1.bf16.msra.mxu0 %v1472
        %1850 = vmatprep.subr.bf16.mxu0 0
        %1851 = vmatpush1.bf16.msra.mxu0 %v1473
        %1852 = vmatprep.subr.bf16.mxu0 0
        %1853 = vmatpush1.bf16.msra.mxu0 %v1474
        %1854 = vmatprep.subr.bf16.mxu0 0
        %1855 = vmatpush1.bf16.msra.mxu0 %v1475
        %1856 = vmatprep.subr.bf16.mxu0 0
        %1857 = vmatpush1.bf16.msra.mxu0 %v1476
        %1858 = vmatprep.subr.bf16.mxu0 0
        %1859 = vmatpush1.bf16.msra.mxu0 %v1477
        %1860 = vmatprep.subr.bf16.mxu0 0
        %1861 = vmatpush1.bf16.msra.mxu0 %v1478
        %1862 = vmatprep.subr.bf16.mxu0 0
        %1863 = vmatpush1.bf16.msra.mxu0 %v1479
        %1864 = vmatprep.subr.bf16.mxu0 0
        %1865 = vmatpush1.bf16.msra.mxu0 %v1480
        %1866 = vmatprep.subr.bf16.mxu0 0
        %1867 = vmatpush1.bf16.msra.mxu0 %v1481
        %1868 = vmatprep.subr.bf16.mxu0 0
        %1869 = vmatpush1.bf16.msra.mxu0 %v1482
        %1870 = vmatprep.subr.bf16.mxu0 0
        %1871 = vmatpush1.bf16.msra.mxu0 %v1483
        %1872 = vmatprep.subr.bf16.mxu0 0
        %1873 = vmatpush1.bf16.msra.mxu0 %v1484
        %1874 = vmatprep.subr.bf16.mxu0 0
        %1875 = vmatpush1.bf16.msra.mxu0 %v1485
        %1876 = vmatprep.subr.bf16.mxu0 0
        %1877 = vmatpush1.bf16.msra.mxu0 %v1486
        %1878 = vmatprep.subr.bf16.mxu0 0
        %1879 = vmatpush1.bf16.msra.mxu0 %v1487
        %1880 = vmatprep.mubr.bf16.mxu0 %v618
        %1881 = vmatmul.mubr.bf16.gmra.mrb[0].mxu0 %v617
        %v1882 = vpop.f32.mrb[0].mxu0
        %v1883 = vadd.f32 %v1843, %v1882
        %v1884 = vpop.f32.mrb[0].mxu0
        %v1885 = vpop.f32.mrb[0].mxu0
        %v1886 = vpop.f32.mrb[0].mxu0
        %1887 = vdwg.mxu0
        %1888 = vmatprep.subr.bf16.mxu0 0
        %1889 = vmatpush1.bf16.msra.mxu0 %v1488
        %1890 = vmatprep.subr.bf16.mxu0 0
        %1891 = vmatpush1.bf16.msra.mxu0 %v1489
        %1892 = vmatprep.subr.bf16.mxu0 0
        %1893 = vmatpush1.bf16.msra.mxu0 %v1490
        %1894 = vmatprep.subr.bf16.mxu0 0
        %1895 = vmatpush1.bf16.msra.mxu0 %v1491
        %1896 = vmatprep.subr.bf16.mxu0 0
        %1897 = vmatpush1.bf16.msra.mxu0 %v1492
        %1898 = vmatprep.subr.bf16.mxu0 0
        %1899 = vmatpush1.bf16.msra.mxu0 %v1493
        %1900 = vmatprep.subr.bf16.mxu0 0
        %1901 = vmatpush1.bf16.msra.mxu0 %v1494
        %1902 = vmatprep.subr.bf16.mxu0 0
        %1903 = vmatpush1.bf16.msra.mxu0 %v1495
        %1904 = vmatprep.subr.bf16.mxu0 0
        %1905 = vmatpush1.bf16.msra.mxu0 %v1496
        %1906 = vmatprep.subr.bf16.mxu0 0
        %1907 = vmatpush1.bf16.msra.mxu0 %v1497
        %1908 = vmatprep.subr.bf16.mxu0 0
        %1909 = vmatpush1.bf16.msra.mxu0 %v1498
        %1910 = vmatprep.subr.bf16.mxu0 0
        %1911 = vmatpush1.bf16.msra.mxu0 %v1499
        %1912 = vmatprep.subr.bf16.mxu0 0
        %1913 = vmatpush1.bf16.msra.mxu0 %v1500
        %1914 = vmatprep.subr.bf16.mxu0 0
        %1915 = vmatpush1.bf16.msra.mxu0 %v1501
        %1916 = vmatprep.subr.bf16.mxu0 0
        %1917 = vmatpush1.bf16.msra.mxu0 %v1502
        %1918 = vmatprep.subr.bf16.mxu0 0
        %1919 = vmatpush1.bf16.msra.mxu0 %v1503
        %1920 = vmatprep.mubr.bf16.mxu0 %v620
        %1921 = vmatmul.mubr.bf16.gmra.mrb[0].mxu0 %v619
        %v1922 = vpop.f32.mrb[0].mxu0
        %v1923 = vadd.f32 %v1883, %v1922
        %v1924 = vpop.f32.mrb[0].mxu0
        %v1925 = vpop.f32.mrb[0].mxu0
        %v1926 = vpop.f32.mrb[0].mxu0
        %1927 = vdwg.mxu0
        %1928 = vmatprep.subr.bf16.mxu0 0
        %1929 = vmatpush1.bf16.msra.mxu0 %v1504
        %1930 = vmatprep.subr.bf16.mxu0 0
        %1931 = vmatpush1.bf16.msra.mxu0 %v1505
        %1932 = vmatprep.subr.bf16.mxu0 0
        %1933 = vmatpush1.bf16.msra.mxu0 %v1506
        %1934 = vmatprep.subr.bf16.mxu0 0
        %1935 = vmatpush1.bf16.msra.mxu0 %v1507
        %1936 = vmatprep.subr.bf16.mxu0 0
        %1937 = vmatpush1.bf16.msra.mxu0 %v1508
        %1938 = vmatprep.subr.bf16.mxu0 0
        %1939 = vmatpush1.bf16.msra.mxu0 %v1509
        %1940 = vmatprep.subr.bf16.mxu0 0
        %1941 = vmatpush1.bf16.msra.mxu0 %v1510
        %1942 = vmatprep.subr.bf16.mxu0 0
        %1943 = vmatpush1.bf16.msra.mxu0 %v1511
        %1944 = vmatprep.subr.bf16.mxu0 0
        %1945 = vmatpush1.bf16.msra.mxu0 %v1512
        %1946 = vmatprep.subr.bf16.mxu0 0
        %1947 = vmatpush1.bf16.msra.mxu0 %v1513
        %1948 = vmatprep.subr.bf16.mxu0 0
        %1949 = vmatpush1.bf16.msra.mxu0 %v1514
        %1950 = vmatprep.subr.bf16.mxu0 0
        %1951 = vmatpush1.bf16.msra.mxu0 %v1515
        %1952 = vmatprep.subr.bf16.mxu0 0
        %1953 = vmatpush1.bf16.msra.mxu0 %v1516
        %1954 = vmatprep.subr.bf16.mxu0 0
        %1955 = vmatpush1.bf16.msra.mxu0 %v1517
        %1956 = vmatprep.subr.bf16.mxu0 0
        %1957 = vmatpush1.bf16.msra.mxu0 %v1518
        %1958 = vmatprep.subr.bf16.mxu0 0
        %1959 = vmatpush1.bf16.msra.mxu0 %v1519
        %1960 = vmatprep.mubr.bf16.mxu0 %v622
        %1961 = vmatmul.mubr.bf16.gmra.mrb[0].mxu0 %v621
        %v1962 = vpop.f32.mrb[0].mxu0
        %v1963 = vadd.f32 %v1923, %v1962
        %v1964 = vpop.f32.mrb[0].mxu0
        %v1965 = vpop.f32.mrb[0].mxu0
        %v1966 = vpop.f32.mrb[0].mxu0
        %1967 = vdwg.mxu0
        %v1968 = vadd.f32 %v623, %v1963
        %1969 = vst [vmem:[#allocation2] sm:$0x3] %v1968
        %p1970 = scmp.eq.s32.totalorder %s24, 1
        // Predicated region
        $region69: #{tpu_custom_call.1} parent=47 // pred_check
          %p1971 = pneg %p1970
        $region70: #{tpu_custom_call.1} parent=47 // pred_check_branch
          %1973 = sbr.rel (%p1971) target = $region72
        $region71: #{tpu_custom_call.1} parent=47 // pred_region
          %v1974 = vld [vmem:[#allocation2] sm:$0x3]
          %v1975 = vld [vmem:[%s3] sm:$0x1]
          %v1977 = vlaneseq
          %v1978 = vshrl.u32 %v1977, 7
          %v1979 = vsub.s32 0, %v1978
          %v1980 = vrot.slane %v1975, %v1979
          %v1982 = vadd.f32 %v1974, %v1980
          %s1983 = sld [smem:[#allocation3]]
          %vm1984 = vcmp.gt.f32.partialorder %v1982, 0.0
          %v1985 = vstv %s1983
          %v1986 = vmul.f32 %v1985, %v1982
          %v1987 = vsel %vm1984, %v1982, %v1986
          %v1988 = vld [vmem:[#allocation10] sm:$0xff]
          %v1989 = vld [vmem:[#allocation10 + $0x8] sm:$0xff]
          %v1990 = vld [vmem:[#allocation10 + $0x10] sm:$0xff]
          %v1991 = vld [vmem:[#allocation10 + $0x18] sm:$0xff]
          %v1992 = vld [vmem:[#allocation10 + $0x20] sm:$0xff]
          %v1993 = vld [vmem:[#allocation10 + $0x28] sm:$0xff]
          %v1994 = vld [vmem:[#allocation10 + $0x30] sm:$0xff]
          %v1995 = vld [vmem:[#allocation10 + $0x38] sm:$0xff]
          %v1996 = vld [vmem:[#allocation10 + $0x40] sm:$0xff]
          %v1997 = vld [vmem:[#allocation10 + $0x48] sm:$0xff]
          %v1998 = vld [vmem:[#allocation10 + $0x50] sm:$0xff]
          %v1999 = vld [vmem:[#allocation10 + $0x58] sm:$0xff]
          %v2000 = vld [vmem:[#allocation10 + $0x60] sm:$0xff]
          %v2001 = vld [vmem:[#allocation10 + $0x68] sm:$0xff]
          %v2002 = vld [vmem:[#allocation10 + $0x70] sm:$0xff]
          %v2003 = vld [vmem:[#allocation10 + $0x78] sm:$0xff]
          %v2004 = vld [vmem:[%s6] sm:$0x1]
          %v2006 = vlaneseq
          %v2007 = vshrl.u32 %v2006, 7
          %v2008 = vsub.s32 0, %v2007
          %v2009 = vrot.slane %v2004, %v2008
          %2011 = vmatprep.subr.mxu0 0.0
          %2012 = vmatpush1.msra.mxu0 %v1988
          %2013 = vmatprep.subr.mxu0 0.0
          %2014 = vmatpush1.msra.mxu0 %v1989
          %2015 = vmatprep.subr.mxu0 0.0
          %2016 = vmatpush1.msra.mxu0 %v1990
          %2017 = vmatprep.subr.mxu0 0.0
          %2018 = vmatpush1.msra.mxu0 %v1991
          %2019 = vmatprep.subr.mxu0 0.0
          %2020 = vmatpush1.msra.mxu0 %v1992
          %2021 = vmatprep.subr.mxu0 0.0
          %2022 = vmatpush1.msra.mxu0 %v1993
          %2023 = vmatprep.subr.mxu0 0.0
          %2024 = vmatpush1.msra.mxu0 %v1994
          %2025 = vmatprep.subr.mxu0 0.0
          %2026 = vmatpush1.msra.mxu0 %v1995
          %2027 = vmatprep.subr.mxu0 0.0
          %2028 = vmatpush1.msra.mxu0 %v1996
          %2029 = vmatprep.subr.mxu0 0.0
          %2030 = vmatpush1.msra.mxu0 %v1997
          %2031 = vmatprep.subr.mxu0 0.0
          %2032 = vmatpush1.msra.mxu0 %v1998
          %2033 = vmatprep.subr.mxu0 0.0
          %2034 = vmatpush1.msra.mxu0 %v1999
          %2035 = vmatprep.subr.mxu0 0.0
          %2036 = vmatpush1.msra.mxu0 %v2000
          %2037 = vmatprep.subr.mxu0 0.0
          %2038 = vmatpush1.msra.mxu0 %v2001
          %2039 = vmatprep.subr.mxu0 0.0
          %2040 = vmatpush1.msra.mxu0 %v2002
          %2041 = vmatprep.subr.mxu0 0.0
          %2042 = vmatpush1.msra.mxu0 %v2003
          %2043 = vmatprep.subr.mxu0 0.0
          %2044 = vmatpush1.msra.mxu0 0.0
          %2045 = vmatprep.subr.mxu0 0.0
          %2046 = vmatpush1.msra.mxu0 0.0
          %2047 = vmatprep.subr.mxu0 0.0
          %2048 = vmatpush1.msra.mxu0 0.0
          %2049 = vmatprep.subr.mxu0 0.0
          %2050 = vmatpush1.msra.mxu0 0.0
          %2051 = vmatprep.subr.mxu0 0.0
          %2052 = vmatpush1.msra.mxu0 0.0
          %2053 = vmatprep.subr.mxu0 0.0
          %2054 = vmatpush1.msra.mxu0 0.0
          %2055 = vmatprep.subr.mxu0 0.0
          %2056 = vmatpush1.msra.mxu0 0.0
          %2057 = vmatprep.subr.mxu0 0.0
          %2058 = vmatpush1.msra.mxu0 0.0
          %2059 = vmatprep.subr.mxu0 0.0
          %2060 = vmatpush1.msra.mxu0 0.0
          %2061 = vmatprep.subr.mxu0 0.0
          %2062 = vmatpush1.msra.mxu0 0.0
          %2063 = vmatprep.subr.mxu0 0.0
          %2064 = vmatpush1.msra.mxu0 0.0
          %2065 = vmatprep.subr.mxu0 0.0
          %2066 = vmatpush1.msra.mxu0 0.0
          %2067 = vmatprep.subr.mxu0 0.0
          %2068 = vmatpush1.msra.mxu0 0.0
          %2069 = vmatprep.subr.mxu0 0.0
          %2070 = vmatpush1.msra.mxu0 0.0
          %2071 = vmatprep.subr.mxu0 0.0
          %2072 = vmatpush1.msra.mxu0 0.0
          %2073 = vmatprep.subr.mxu0 0.0
          %2074 = vmatpush1.msra.mxu0 0.0
          %2075 = vmatprep.mubr.f32.mxu0 0.0
          %2076 = vmatmul.mubr.f32.gmra.mrb[0].mxu0 %v1987
          %v2077 = vpop.f32.mrb[0].mxu0
          %v2078 = vadd.f32 %v2009, %v2077
          %v2079 = vpop.f32.mrb[0].mxu0
          %2080 = vdwg.mxu0
          %v2081 = vtanh.pop %v2078
          %2082 = vst [vmem:[#allocation11] sm:$0x3] %v2081
        $region72: #{tpu_custom_call.1} parent=47 // pred_fallthru
          _
        // Predicated region
        $region73: #{tpu_custom_call.1} parent=47 // pred_check
          %p2083 = pneg %p194
        $region74: #{tpu_custom_call.1} parent=47 // pred_check_branch
          %2085 = sbr.rel (%p2083) target = $region76
        $region75: #{tpu_custom_call.1} parent=47 // pred_region
          %s2087 = ssub.s32 32, 32
          %2088 = vsyncadd [#allocation6], %s2087
          %s2090 = sshll.u32 [#allocation11], 4
          %s2091 = int_to_ptr.vmem [resolvable:$true] %s2090
          %2093 = dma.vmem_to_hbm [thread:$0]  %s2091, 32, %s7, [#allocation6]
        $region76: #{tpu_custom_call.1} parent=47 // pred_fallthru
          _
        // Predicated region
        $region77: #{tpu_custom_call.1} parent=47 // pred_check
          %p2094 = pneg %p194
        $region78: #{tpu_custom_call.1} parent=47 // pred_check_branch
          %2096 = sbr.rel (%p2094) target = $region80
        $region79: #{tpu_custom_call.1} parent=47 // pred_region
          %2097 = dma.done [#allocation6], 32
        $region80: #{tpu_custom_call.1} parent=47 // pred_fallthru
          _
      $region48: #{tpu_custom_call.1} parent=5 // pred_fallthru
        _
      %p2098 = scmp.le.s32.totalorder 2, %s19
      // Predicated region
      $region81: #{tpu_custom_call.1} parent=5 // pred_check
        %p2099 = pneg %p2098
      $region82: #{tpu_custom_call.1} parent=5 // pred_check_branch
        %2101 = sbr.rel (%p2099) target = $region84
      $region83: #{tpu_custom_call.1} parent=5 // pred_region
        %s2102 = ssub.s32 %s19, 2
      $region84: #{tpu_custom_call.1} parent=5 // pred_fallthru
        _
    $region6: #{tpu_custom_call.1} parent=1 // loop_footer
      %s23 = sadd.s32 1, %s19
    $region7: #{tpu_custom_call.1} parent=1 // loop_footer_branch
      %18 = sbr.rel target = $region3
    $region8: #{tpu_custom_call.1} parent=1 // loop_exit
      _
    %2103 = vsyncpa [#allocation5], 1
    %s2104 = scalar_lea.sflag [#allocation5], 1
    %2105 = vsyncpa %s2104, 1
    %2106 = vsyncpa [#allocation8], 1
    %2107 = vsyncpa [#allocation6], 1
    %s2108 = scalar_lea.sflag [#allocation6], 1
    %2109 = vsyncpa %s2108, 1

// kernel: tpu_custom_call.1
$region0: #{tpu_custom_call.1}
  #allocation0 [shape = 'u32[]', space=smem, size = 0x4, offset = 0x4, fixed_abs, tag = 'smem constant byte address 0x4 - core index']
  #allocation1 [shape = 'u32[144,128]{1,0:T(1,128)}', space=vmem, size = 0x12000, scoped, tag = 'internal scratch']
  #allocation2 [shape = 'f32[2,128]{1,0:T(2,128)}', space=vmem, size = 0x400, scoped, tag = 'scratch operand']
  #allocation3 [shape = 'f32[1,1]{1,0:T(1,128)S(6)}', space=smem, size = 0x200, scoped, tag = 'scoped memory for tpu_custom_call.1']
  #allocation12 [shape = 's32[]', space=sflag, size = 0x4, offset = 0, fixed_abs, tag = 'sflag constant byte address 0x0 - dummy sync flag']
  %s0 = inlined_call_operand.hbm [shape: bf16[2,32,64], index: 0, kind: input, shape index: {}]
  %s1 = inlined_call_operand.hbm [shape: bf16[64,128], index: 1, kind: input, shape index: {}]
  %s2 = inlined_call_operand.hbm [shape: bf16[32,128,128], index: 2, kind: input, shape index: {}]
  %s3 = inlined_call_operand.vmem [shape: f32[1,128], index: 3, kind: input, shape index: {}]
  %s4 = inlined_call_operand.<no memory space> [shape: f32[1,1], index: 4, kind: input, shape index: {}]
  %s5 = inlined_call_operand.hbm [shape: f32[128,128], index: 5, kind: input, shape index: {}]
  %s6 = inlined_call_operand.vmem [shape: f32[1,128], index: 6, kind: input, shape index: {}]
  %s7 = inlined_call_operand.hbm [shape: f32[2,128], index: 7, kind: output, shape index: {}]
  %s8 = sld [smem:[#allocation0]]
  $region85: #{tpu_custom_call.1} parent=0
    _
  %s10 = ssub.s32 1, %s8
  %s11 = scalar_select 0, %s10, %s8
  %12 = sst [smem:[#allocation3]] %s4
  $region1: #{tpu_custom_call.1} parent=0
    #allocation4 [shape = 'u8[16384]{0}', space=vmem, size = 0x4000, scoped, tag = 'input window, operand 0']
    #allocation5 [shape = 's32[2]{0}', space=sflag, size = 0x8, scoped, tag = 'scoped memory for tpu_custom_call.1']
    #allocation6 [shape = 's32[2]{0}', space=sflag, size = 0x8, scoped, tag = 'scoped memory for tpu_custom_call.1']
    #allocation7 [shape = 'u8[16384]{0}', space=vmem, size = 0x4000, scoped, tag = 'input window, operand 1, single buffered']
    #allocation8 [shape = 's32[1]{0}', space=sflag, size = 0x4, scoped, tag = 'scoped memory for tpu_custom_call.1']
    #allocation9 [shape = 'u8[1048576]{0}', space=vmem, size = 0x100000, scoped, tag = 'input window, operand 2']
    #allocation10 [shape = 'u8[65536]{0}', space=vmem, size = 0x10000, scoped, tag = 'input window, operand 5, single buffered']
    #allocation11 [shape = 'u8[1024]{0}', space=vmem, size = 0x400, scoped, tag = 'output window, operand 0, single buffered']
    %13 = vsyncpa [#allocation5], 0
    %s14 = scalar_lea.sflag [#allocation5], 1
    %15 = vsyncpa %s14, 0
    %16 = vsyncpa [#allocation8], 0
    %17 = vsyncpa [#allocation6], 0
    loop: start=0, step=1, limit=4
    $region2: #{tpu_custom_call.1} parent=1 // loop_pre_header
      _
    $region3: #{tpu_custom_call.1} parent=1 // loop_header
      %s19 = sphi 0, %s23
      %p20 = scmp.ge.s32.totalorder %s19, 4
      %s29 = sphi 0, %s31
      %s32 = sphi 0, %s29
      %s33 = sphi 0, %s32
      %s49 = sphi 0, %s33
      %s53 = sphi 0, %s53
      %s55 = sphi 0, %s53
      %s56 = sphi 0, %s55
      %s70 = sphi 0, %s56
      %s76 = sphi 0, %s78
      %s79 = sphi 0, %s76
      %s80 = sphi 0, %s79
      %s96 = sphi 0, %s80
      %s100 = sphi 0, %s100
      %s102 = sphi 0, %s100
      %s103 = sphi 0, %s102
      %s117 = sphi 0, %s103
      %s121 = sphi 0, %s121
      %s123 = sphi 0, %s121
      %s124 = sphi 0, %s123
      %s138 = sphi 0, %s124
      %s142 = sphi 0, %s142
      %s144 = sphi 0, %s142
      %s145 = sphi 0, %s144
      %s159 = sphi 0, %s145
      %s163 = sphi 0, %s163
      %s165 = sphi 0, %s163
      %s166 = sphi 0, %s165
      %s180 = sphi 0, %s166
      %s184 = sphi 0, %s184
      %s186 = sphi 0, %s184
      %s187 = sphi 0, %s186
      %s201 = sphi 0, %s187
    $region4: #{tpu_custom_call.1} parent=1 // loop_header_branch
      %22 = sbr.rel (%p20) target = $region8
    $region5: #{tpu_custom_call.1} parent=1 // loop_body
      %s24 = ssub.s32 %s19, 1
      %s25 = ssub.s32 %s19, 2
      %s26 = sadd.s32 %s19, 1
      %s27 = ssub.s32 %s19, %s26
      %p28 = scmp.eq.s32.totalorder %s27, 0
      %s30 = sadd.s32 %s29, 1
      %s31 = scalar_select %p28, %s29, %s30
      %p34 = pneg %p28
      %p35 = scmp.eq.s32.totalorder %s19, 1
      %p36 = por %p34, %p35
      %p37 = scmp.ne.s32.totalorder %s29, %s32
      %p38 = scmp.eq.s32.totalorder %s19, 0
      %p39 = por %p37, %p38
      %p40 = scmp.ne.s32.totalorder %s29, %s32
      %p41 = scmp.eq.s32.totalorder %s24, 1
      %p42 = por %p40, %p41
      %p43 = scmp.ne.s32.totalorder %s32, %s33
      %p44 = scmp.eq.s32.totalorder %s24, 0
      %p45 = por %p43, %p44
      %p46 = scmp.ne.s32.totalorder %s32, %s33
      %p47 = scmp.eq.s32.totalorder %s25, 1
      %p48 = por %p46, %p47
      %p50 = scmp.ne.s32.totalorder %s33, %s49
      %p51 = scmp.eq.s32.totalorder %s25, 0
      %p52 = por %p50, %p51
      %s54 = sadd.s32 %s53, 1
      %p57 = scmp.eq.s32.totalorder %s19, 1
      %p58 = scmp.ne.s32.totalorder %s53, %s55
      %p59 = scmp.eq.s32.totalorder %s19, 0
      %p60 = por %p58, %p59
      %p61 = scmp.ne.s32.totalorder %s53, %s55
      %p62 = scmp.eq.s32.totalorder %s24, 1
      %p63 = por %p61, %p62
      %p64 = scmp.ne.s32.totalorder %s55, %s56
      %p65 = scmp.eq.s32.totalorder %s24, 0
      %p66 = por %p64, %p65
      %p67 = scmp.ne.s32.totalorder %s55, %s56
      %p68 = scmp.eq.s32.totalorder %s25, 1
      %p69 = por %p67, %p68
      %p71 = scmp.ne.s32.totalorder %s56, %s70
      %p72 = scmp.eq.s32.totalorder %s25, 0
      %p73 = por %p71, %p72
      %s74 = ssub.s32 %s19, %s26
      %p75 = scmp.eq.s32.totalorder %s74, 0
      %s77 = sadd.s32 %s76, 1
      %s78 = scalar_select %p75, %s76, %s77
      %p81 = pneg %p75
      %p82 = scmp.eq.s32.totalorder %s19, 1
      %p83 = por %p81, %p82
      %p84 = scmp.ne.s32.totalorder %s76, %s79
      %p85 = scmp.eq.s32.totalorder %s19, 0
      %p86 = por %p84, %p85
      %p87 = scmp.ne.s32.totalorder %s76, %s79
      %p88 = scmp.eq.s32.totalorder %s24, 1
      %p89 = por %p87, %p88
      %p90 = scmp.ne.s32.totalorder %s79, %s80
      %p91 = scmp.eq.s32.totalorder %s24, 0
      %p92 = por %p90, %p91
      %p93 = scmp.ne.s32.totalorder %s79, %s80
      %p94 = scmp.eq.s32.totalorder %s25, 1
      %p95 = por %p93, %p94
      %p97 = scmp.ne.s32.totalorder %s80, %s96
      %p98 = scmp.eq.s32.totalorder %s25, 0
      %p99 = por %p97, %p98
      %s101 = sadd.s32 %s100, 1
      %p104 = scmp.eq.s32.totalorder %s19, 1
      %p105 = scmp.ne.s32.totalorder %s100, %s102
      %p106 = scmp.eq.s32.totalorder %s19, 0
      %p107 = por %p105, %p106
      %p108 = scmp.ne.s32.totalorder %s100, %s102
      %p109 = scmp.eq.s32.totalorder %s24, 1
      %p110 = por %p108, %p109
      %p111 = scmp.ne.s32.totalorder %s102, %s103
      %p112 = scmp.eq.s32.totalorder %s24, 0
      %p113 = por %p111, %p112
      %p114 = scmp.ne.s32.totalorder %s102, %s103
      %p115 = scmp.eq.s32.totalorder %s25, 1
      %p116 = por %p114, %p115
      %p118 = scmp.ne.s32.totalorder %s103, %s117
      %p119 = scmp.eq.s32.totalorder %s25, 0
      %p120 = por %p118, %p119
      %s122 = sadd.s32 %s121, 1
      %p125 = scmp.eq.s32.totalorder %s19, 1
      %p126 = scmp.ne.s32.totalorder %s121, %s123
      %p127 = scmp.eq.s32.totalorder %s19, 0
      %p128 = por %p126, %p127
      %p129 = scmp.ne.s32.totalorder %s121, %s123
      %p130 = scmp.eq.s32.totalorder %s24, 1
      %p131 = por %p129, %p130
      %p132 = scmp.ne.s32.totalorder %s123, %s124
      %p133 = scmp.eq.s32.totalorder %s24, 0
      %p134 = por %p132, %p133
      %p135 = scmp.ne.s32.totalorder %s123, %s124
      %p136 = scmp.eq.s32.totalorder %s25, 1
      %p137 = por %p135, %p136
      %p139 = scmp.ne.s32.totalorder %s124, %s138
      %p140 = scmp.eq.s32.totalorder %s25, 0
      %p141 = por %p139, %p140
      %s143 = sadd.s32 %s142, 1
      %p146 = scmp.eq.s32.totalorder %s19, 1
      %p147 = scmp.ne.s32.totalorder %s142, %s144
      %p148 = scmp.eq.s32.totalorder %s19, 0
      %p149 = por %p147, %p148
      %p150 = scmp.ne.s32.totalorder %s142, %s144
      %p151 = scmp.eq.s32.totalorder %s24, 1
      %p152 = por %p150, %p151
      %p153 = scmp.ne.s32.totalorder %s144, %s145
      %p154 = scmp.eq.s32.totalorder %s24, 0
      %p155 = por %p153, %p154
      %p156 = scmp.ne.s32.totalorder %s144, %s145
      %p157 = scmp.eq.s32.totalorder %s25, 1
      %p158 = por %p156, %p157
      %p160 = scmp.ne.s32.totalorder %s145, %s159
      %p161 = scmp.eq.s32.totalorder %s25, 0
      %p162 = por %p160, %p161
      %s164 = sadd.s32 %s163, 1
      %p167 = scmp.eq.s32.totalorder %s19, 1
      %p168 = scmp.ne.s32.totalorder %s163, %s165
      %p169 = scmp.eq.s32.totalorder %s19, 0
      %p170 = por %p168, %p169
      %p171 = scmp.ne.s32.totalorder %s163, %s165
      %p172 = scmp.eq.s32.totalorder %s24, 1
      %p173 = por %p171, %p172
      %p174 = scmp.ne.s32.totalorder %s165, %s166
      %p175 = scmp.eq.s32.totalorder %s24, 0
      %p176 = por %p174, %p175
      %p177 = scmp.ne.s32.totalorder %s165, %s166
      %p178 = scmp.eq.s32.totalorder %s25, 1
      %p179 = por %p177, %p178
      %p181 = scmp.ne.s32.totalorder %s166, %s180
      %p182 = scmp.eq.s32.totalorder %s25, 0
      %p183 = por %p181, %p182
      %s185 = sadd.s32 %s184, 1
      %p188 = scmp.eq.s32.totalorder %s19, 1
      %p189 = scmp.ne.s32.totalorder %s184, %s186
      %p190 = scmp.eq.s32.totalorder %s19, 0
      %p191 = por %p189, %p190
      %p192 = scmp.ne.s32.totalorder %s184, %s186
      %p193 = scmp.eq.s32.totalorder %s24, 1
      %p194 = por %p192, %p193
      %p195 = scmp.ne.s32.totalorder %s186, %s187
      %p196 = scmp.eq.s32.totalorder %s24, 0
      %p197 = por %p195, %p196
      %p198 = scmp.ne.s32.totalorder %s186, %s187
      %p199 = scmp.eq.s32.totalorder %s25, 1
      %p200 = por %p198, %p199
      %p202 = scmp.ne.s32.totalorder %s187, %s201
      %p203 = scmp.eq.s32.totalorder %s25, 0
      %p204 = por %p202, %p203
      %p205 = scmp.le.s32.totalorder 1, %s19
      %p206 = scmp.lt.s32.totalorder %s19, 3
      %p207 = pnand %p205, %p206
      %p208 = pneg %p207
      // Predicated region
      $region9: #{tpu_custom_call.1} parent=5 // pred_check
        _
      $region10: #{tpu_custom_call.1} parent=5 // pred_check_branch
        %210 = sbr.rel (%p207) target = $region12
      $region11: #{tpu_custom_call.1} parent=5 // pred_region
        %s211 = ssub.s32 %s19, 1
        // Predicated region
        $region13: #{tpu_custom_call.1} parent=11 // pred_check
          %p212 = pneg %p66
        $region14: #{tpu_custom_call.1} parent=11 // pred_check_branch
          %214 = sbr.rel (%p212) target = $region16
        $region15: #{tpu_custom_call.1} parent=11 // pred_region
          %s216 = ssub.s32 512, 512
          %217 = vsyncadd [#allocation8], %s216
          %s218 = sshll.u32 [#allocation7], 4
          %s219 = int_to_ptr.vmem [resolvable:$true] %s218
          %224 = dma.hbm_to_vmem [thread:$0]  %s1, 512, %s219, [#allocation8], 64, 64, 4
        $region16: #{tpu_custom_call.1} parent=11 // pred_fallthru
          _
        // Predicated region
        $region17: #{tpu_custom_call.1} parent=11 // pred_check
          %p225 = pneg %p113
        $region18: #{tpu_custom_call.1} parent=11 // pred_check_branch
          %227 = sbr.rel (%p225) target = $region20
        $region19: #{tpu_custom_call.1} parent=11 // pred_region
          _
        $region20: #{tpu_custom_call.1} parent=11 // pred_fallthru
          _
        // Predicated region
        $region21: #{tpu_custom_call.1} parent=11 // pred_check
          %p228 = pneg %p134
        $region22: #{tpu_custom_call.1} parent=11 // pred_check_branch
          %230 = sbr.rel (%p228) target = $region24
        $region23: #{tpu_custom_call.1} parent=11 // pred_region
          _
        $region24: #{tpu_custom_call.1} parent=11 // pred_fallthru
          _
        // Predicated region
        $region25: #{tpu_custom_call.1} parent=11 // pred_check
          %p231 = pneg %p155
        $region26: #{tpu_custom_call.1} parent=11 // pred_check_branch
          %233 = sbr.rel (%p231) target = $region28
        $region27: #{tpu_custom_call.1} parent=11 // pred_region
          %s235 = ssub.s32 2048, 2048
          %236 = vsyncadd [#allocation8], %s235
          %s237 = sshll.u32 [#allocation10], 4
          %s238 = int_to_ptr.vmem [resolvable:$true] %s237
          %243 = dma.hbm_to_vmem [thread:$0]  %s5, 2048, %s238, [#allocation8], 128, 128, 8
        $region28: #{tpu_custom_call.1} parent=11 // pred_fallthru
          _
        // Predicated region
        $region29: #{tpu_custom_call.1} parent=11 // pred_check
          %p244 = pneg %p176
        $region30: #{tpu_custom_call.1} parent=11 // pred_check_branch
          %246 = sbr.rel (%p244) target = $region32
        $region31: #{tpu_custom_call.1} parent=11 // pred_region
          _
        $region32: #{tpu_custom_call.1} parent=11 // pred_fallthru
          _
      $region12: #{tpu_custom_call.1} parent=5 // pred_fallthru
        _
      %p247 = scmp.lt.s32.totalorder %s19, 2
      // Predicated region
      $region33: #{tpu_custom_call.1} parent=5 // pred_check
        %p248 = pneg %p247
      $region34: #{tpu_custom_call.1} parent=5 // pred_check_branch
        %250 = sbr.rel (%p248) target = $region36
      $region35: #{tpu_custom_call.1} parent=5 // pred_region
        // Predicated region
        $region37: #{tpu_custom_call.1} parent=35 // pred_check
          %p251 = pneg %p39
        $region38: #{tpu_custom_call.1} parent=35 // pred_check_branch
          %253 = sbr.rel (%p251) target = $region40
        $region39: #{tpu_custom_call.1} parent=35 // pred_region
          #allocation13 [shape = 'u32[6]{0}', space=smem, size = 0x18, scoped, tag = 'DMA stride descriptor']
          %s254 = sand.u32 %s19, 1
          %s255 = scalar_lea.sflag [#allocation5], %s254
          %s256 = sand.u32 %s29, 1
          %s257 = smul.addr %s256, 16
          %s258 = scalar_lea.vmem [#allocation4], %s257
          %s259 = smul.u32 2, %s19
          %s261 = ssub.s32 256, 256
          %262 = vsyncadd %s255, %s261
          %s263 = smul.addr %s259, 64
          %s264 = scalar_lea.hbm %s0, %s263
          %s266 = sshll.u32 1, 14
          %s267 = sxor.u32 4294967295, %s266
          %s269 = sld [smem:[#allocation0]]
          %s270 = sadd.s32 2, %s269
          %s272 = sshll.u32 7, 26
          %s273 = sxor.u32 4294967295, %s272
          %s274 = sand.u32 0, %s273
          %s275 = sshll.u32 %s270, 26
          %s276 = sor.u32 %s274, %s275
          %s277 = sshll.u32 %s258, 4
          %s278 = int_to_ptr.vmem [resolvable:$true] %s277
          %284 = sst [smem:[#allocation13]] 256
          %s285 = scalar_lea.smem [#allocation13], 1
          %286 = sst [smem:[%s285]] 128
          %s287 = scalar_lea.smem [#allocation13], 2
          %288 = sst [smem:[%s287]] 2
          %s289 = scalar_lea.smem [#allocation13], 3
          %290 = sst [smem:[%s289]] 64
          %s291 = scalar_lea.smem [#allocation13], 4
          %292 = sst [smem:[%s291]] 64
          %s293 = scalar_lea.smem [#allocation13], 5
          %294 = sst [smem:[%s293]] 4
          %296 = dma.general %s264, 256, %s278, %s255, [#allocation12], [#allocation13], %s276, 0
        $region40: #{tpu_custom_call.1} parent=35 // pred_fallthru
          _
        // Predicated region
        $region41: #{tpu_custom_call.1} parent=35 // pred_check
          %p297 = pneg %p86
        $region42: #{tpu_custom_call.1} parent=35 // pred_check_branch
          %299 = sbr.rel (%p297) target = $region44
        $region43: #{tpu_custom_call.1} parent=35 // pred_region
          %s300 = sand.u32 %s19, 1
          %s301 = scalar_lea.sflag [#allocation5], %s300
          %s302 = sand.u32 %s76, 1
          %s303 = smul.addr %s302, 1024
          %s304 = scalar_lea.vmem [#allocation9], %s303
          %s305 = smul.u32 16, %s19
          %s307 = ssub.s32 16384, 16384
          %308 = vsyncadd %s301, %s307
          %s309 = smul.addr %s305, 16
          %s310 = smul.addr %s309, 64
          %s311 = scalar_lea.hbm %s2, %s310
          %s312 = sshll.u32 %s304, 4
          %s313 = int_to_ptr.vmem [resolvable:$true] %s312
          %318 = dma.hbm_to_vmem [thread:$0]  %s311, 16384, %s313, %s301, 64, 64, 4
        $region44: #{tpu_custom_call.1} parent=35 // pred_fallthru
          _
      $region36: #{tpu_custom_call.1} parent=5 // pred_fallthru
        _
      %p319 = scmp.le.s32.totalorder 1, %s19
      %p320 = scmp.lt.s32.totalorder %s19, 3
      %p321 = pnand %p319, %p320
      %p322 = pneg %p321
      // Predicated region
      $region45: #{tpu_custom_call.1} parent=5 // pred_check
        _
      $region46: #{tpu_custom_call.1} parent=5 // pred_check_branch
        %324 = sbr.rel (%p321) target = $region48
      $region47: #{tpu_custom_call.1} parent=5 // pred_region
        %s325 = ssub.s32 %s19, 1
        %s326 = sand.u32 %s24, 1
        %s327 = scalar_lea.sflag [#allocation5], %s326
        %s328 = sand.u32 %s32, 1
        %s329 = smul.addr %s328, 16
        %s330 = scalar_lea.vmem [#allocation4], %s329
        // Predicated region
        $region49: #{tpu_custom_call.1} parent=47 // pred_check
          %p331 = pneg %p45
        $region50: #{tpu_custom_call.1} parent=47 // pred_check_branch
          %333 = sbr.rel (%p331) target = $region52
        $region51: #{tpu_custom_call.1} parent=47 // pred_region
          %334 = dma.done %s327, 256
        $region52: #{tpu_custom_call.1} parent=47 // pred_fallthru
          _
        // Predicated region
        $region53: #{tpu_custom_call.1} parent=47 // pred_check
          %p335 = pneg %p66
        $region54: #{tpu_custom_call.1} parent=47 // pred_check_branch
          %337 = sbr.rel (%p335) target = $region56
        $region55: #{tpu_custom_call.1} parent=47 // pred_region
          %338 = dma.done [#allocation8], 512
        $region56: #{tpu_custom_call.1} parent=47 // pred_fallthru
          _
        %s339 = sand.u32 %s24, 1
        %s340 = scalar_lea.sflag [#allocation5], %s339
        %s341 = sand.u32 %s79, 1
        %s342 = smul.addr %s341, 1024
        %s343 = scalar_lea.vmem [#allocation9], %s342
        // Predicated region
        $region57: #{tpu_custom_call.1} parent=47 // pred_check
          %p344 = pneg %p92
        $region58: #{tpu_custom_call.1} parent=47 // pred_check_branch
          %346 = sbr.rel (%p344) target = $region60
        $region59: #{tpu_custom_call.1} parent=47 // pred_region
          %347 = dma.done %s340, 16384
        $region60: #{tpu_custom_call.1} parent=47 // pred_fallthru
          _
        // Predicated region
        $region61: #{tpu_custom_call.1} parent=47 // pred_check
          %p348 = pneg %p155
        $region62: #{tpu_custom_call.1} parent=47 // pred_check_branch
          %350 = sbr.rel (%p348) target = $region64
        $region63: #{tpu_custom_call.1} parent=47 // pred_region
          %351 = dma.done [#allocation8], 2048
        $region64: #{tpu_custom_call.1} parent=47 // pred_fallthru
          _
        %s352 = sand.u32 %s24, 1
        %s353 = scalar_lea.sflag [#allocation5], %s352
        %s354 = sand.u32 %s32, 1
        %s355 = smul.addr %s354, 16
        %s356 = scalar_lea.vmem [#allocation4], %s355
        %p357 = pneg %p45
        %p358 = pneg %p42
        %p359 = pneg %p66
        %p360 = pneg %p63
        %s361 = sand.u32 %s24, 1
        %s362 = scalar_lea.sflag [#allocation5], %s361
        %s363 = sand.u32 %s79, 1
        %s364 = smul.addr %s363, 1024
        %s365 = scalar_lea.vmem [#allocation9], %s364
        %p366 = pneg %p92
        %p367 = pneg %p89
        %p368 = pneg %p113
        %p369 = pneg %p110
        %p370 = pneg %p134
        %p371 = pneg %p131
        %p372 = pneg %p155
        %p373 = pneg %p152
        %p374 = pneg %p176
        %p375 = pneg %p173
        %p376 = pneg %p197
        %p377 = pneg %p194
        %s378 = smul.u32 2, %s24
        %s379 = smul.u32 16, %s24
        %p381 = scmp.eq.s32.totalorder %s24, 0
        // Predicated region
        $region65: #{tpu_custom_call.1} parent=47 // pred_check
          %p382 = pneg %p381
        $region66: #{tpu_custom_call.1} parent=47 // pred_check_branch
          %384 = sbr.rel (%p382) target = $region68
        $region67: #{tpu_custom_call.1} parent=47 // pred_region
          %385 = vst [vmem:[#allocation2] sm:$0x3] 0.0
        $region68: #{tpu_custom_call.1} parent=47 // pred_fallthru
          _
        %v386 = vld [vmem:[%s330] sm:$0xf]
        %v387 = vld [vmem:[%s330 + $0x4] sm:$0xf]
        %v388 = vld [vmem:[%s330 + $0x8] sm:$0xf]
        %v389 = vld [vmem:[%s330 + $0xc] sm:$0xf]
        %v390 = vld [vmem:[#allocation7] sm:$0xf]
        %v391 = vld [vmem:[#allocation7 + $0x4] sm:$0xf]
        %v392 = vld [vmem:[#allocation7 + $0x8] sm:$0xf]
        %v393 = vld [vmem:[#allocation7 + $0xc] sm:$0xf]
        %v394 = vld [vmem:[#allocation7 + $0x10] sm:$0xf]
        %v395 = vld [vmem:[#allocation7 + $0x14] sm:$0xf]
        %v396 = vld [vmem:[#allocation7 + $0x18] sm:$0xf]
        %v397 = vld [vmem:[#allocation7 + $0x1c] sm:$0xf]
        %v402 = vunpack.c.l.b16 %v386
        %v403 = vunpack.c.l.b16 %v387
        %v404 = vunpack.c.l.b16 %v388
        %v405 = vunpack.c.l.b16 %v389
        %v406 = vpack.c.b16 %v403, %v402
        %v407 = vpack.c.b16 %v405, %v404
        %v416 = vunpack.c.l.b16 %v390
        %v417 = vunpack.c.l.b16 %v391
        %v418 = vunpack.c.l.b16 %v392
        %v419 = vunpack.c.l.b16 %v393
        %v420 = vunpack.c.l.b16 %v394
        %v421 = vunpack.c.l.b16 %v395
        %v422 = vunpack.c.l.b16 %v396
        %v423 = vunpack.c.l.b16 %v397
        %v424 = vpack.c.b16 %v417, %v416
        %v425 = vpack.c.b16 %v419, %v418
        %v426 = vpack.c.b16 %v421, %v420
        %v427 = vpack.c.b16 %v423, %v422
        %vm432 = vcmask 523264
        %v434 = vsel %vm432, %v406, 0
        %v437 = vsel %vm432, %v407, 0
        %439 = vmatprep.subr.bf16.mxu0 0
        %440 = vmatpush1.bf16.msra.mxu0 %v424
        %441 = vmatprep.subr.bf16.mxu0 0
        %442 = vmatpush1.bf16.msra.mxu0 %v425
        %443 = vmatprep.subr.bf16.mxu0 0
        %444 = vmatpush1.bf16.msra.mxu0 %v426
        %445 = vmatprep.subr.bf16.mxu0 0
        %446 = vmatpush1.bf16.msra.mxu0 %v427
        %447 = vmatprep.subr.bf16.mxu0 0
        %448 = vmatpush1.bf16.msra.mxu0 0
        %449 = vmatprep.subr.bf16.mxu0 0
        %450 = vmatpush1.bf16.msra.mxu0 0
        %451 = vmatprep.subr.bf16.mxu0 0
        %452 = vmatpush1.bf16.msra.mxu0 0
        %453 = vmatprep.subr.bf16.mxu0 0
        %454 = vmatpush1.bf16.msra.mxu0 0
        %455 = vmatprep.subr.bf16.mxu0 0
        %456 = vmatpush1.bf16.msra.mxu0 0
        %457 = vmatprep.subr.bf16.mxu0 0
        %458 = vmatpush1.bf16.msra.mxu0 0
        %459 = vmatprep.subr.bf16.mxu0 0
        %460 = vmatpush1.bf16.msra.mxu0 0
        %461 = vmatprep.subr.bf16.mxu0 0
        %462 = vmatpush1.bf16.msra.mxu0 0
        %463 = vmatprep.subr.bf16.mxu0 0
        %464 = vmatpush1.bf16.msra.mxu0 0
        %465 = vmatprep.subr.bf16.mxu0 0
        %466 = vmatpush1.bf16.msra.mxu0 0
        %467 = vmatprep.subr.bf16.mxu0 0
        %468 = vmatpush1.bf16.msra.mxu0 0
        %469 = vmatprep.subr.bf16.mxu0 0
        %470 = vmatpush1.bf16.msra.mxu0 0
        %471 = vmatprep.mubr.bf16.mxu0 0
        %472 = vmatmul.mubr.bf16.gmra.mrb[0].mxu0 %v434
        %v473 = vpop.f32.mrb[0].mxu0
        %v474 = vadd.f32 0.0, %v473
        %v475 = vpop.f32.mrb[0].mxu0
        %v476 = vpop.f32.mrb[0].mxu0
        %v477 = vadd.f32 0.0, %v476
        %v478 = vpop.f32.mrb[0].mxu0
        %479 = vmatprep.mubr.bf16.mxu0 0
        %480 = vmatmul.mubr.bf16.gmra.mrb[0].mxu0 %v437
        %v481 = vpop.f32.mrb[0].mxu0
        %v482 = vadd.f32 0.0, %v481
        %v483 = vpop.f32.mrb[0].mxu0
        %v484 = vpop.f32.mrb[0].mxu0
        %v485 = vadd.f32 0.0, %v484
        %v486 = vpop.f32.mrb[0].mxu0
        %487 = vdwg.mxu0
        %v488 = vpack.c.bf16 %v477, %v474
        %v489 = vpack.c.bf16 %v485, %v482
        %v490 = vld [vmem:[%s343] sm:$0xf]
        %v491 = vld [vmem:[%s343 + $0x4] sm:$0xf]
        %v492 = vld [vmem:[%s343 + $0x8] sm:$0xf]
        %v493 = vld [vmem:[%s343 + $0xc] sm:$0xf]
        %v494 = vld [vmem:[%s343 + $0x10] sm:$0xf]
        %v495 = vld [vmem:[%s343 + $0x14] sm:$0xf]
        %v496 = vld [vmem:[%s343 + $0x18] sm:$0xf]
        %v497 = vld [vmem:[%s343 + $0x1c] sm:$0xf]
        %v498 = vld [vmem:[%s343 + $0x20] sm:$0xf]
        %v499 = vld [vmem:[%s343 + $0x24] sm:$0xf]
        %v500 = vld [vmem:[%s343 + $0x28] sm:$0xf]
        %v501 = vld [vmem:[%s343 + $0x2c] sm:$0xf]
        %v502 = vld [vmem:[%s343 + $0x30] sm:$0xf]
        %v503 = vld [vmem:[%s343 + $0x34] sm:$0xf]
        %v504 = vld [vmem:[%s343 + $0x38] sm:$0xf]
        %v505 = vld [vmem:[%s343 + $0x3c] sm:$0xf]
        %s506 = scalar_lea.vmem %s343, 64 [#allocation9]
        %v507 = vld [vmem:[%s506] sm:$0xf]
        %v508 = vld [vmem:[%s506 + $0x4] sm:$0xf]
        %v509 = vld [vmem:[%s506 + $0x8] sm:$0xf]
        %v510 = vld [vmem:[%s506 + $0xc] sm:$0xf]
        %v511 = vld [vmem:[%s506 + $0x10] sm:$0xf]
        %v512 = vld [vmem:[%s506 + $0x14] sm:$0xf]
        %v513 = vld [vmem:[%s506 + $0x18] sm:$0xf]
        %v514 = vld [vmem:[%s506 + $0x1c] sm:$0xf]
        %v515 = vld [vmem:[%s506 + $0x20] sm:$0xf]
        %v516 = vld [vmem:[%s506 + $0x24] sm:$0xf]
        %v517 = vld [vmem:[%s506 + $0x28] sm:$0xf]
        %v518 = vld [vmem:[%s506 + $0x2c] sm:$0xf]
        %v519 = vld [vmem:[%s506 + $0x30] sm:$0xf]
        %v520 = vld [vmem:[%s506 + $0x34] sm:$0xf]
        %v521 = vld [vmem:[%s506 + $0x38] sm:$0xf]
        %v522 = vld [vmem:[%s506 + $0x3c] sm:$0xf]
        %v525 = vunpack.c.l.b16 %v488
        %v526 = vunpack.c.l.b16 %v489
        %v527 = vrot.slane %v525, 1
        %vm528 = vcmask 1041409
        %v529 = vsel %vm528, %v526, %v527
        %v530 = vpack.c.b16 %v529, %v529
        %v548 = vunpack.c.l.b16 %v507
        %v549 = vunpack.c.l.b16 %v508
        %v550 = vunpack.c.l.b16 %v509
        %v551 = vunpack.c.l.b16 %v510
        %v552 = vunpack.c.l.b16 %v511
        %v553 = vunpack.c.l.b16 %v512
        %v554 = vunpack.c.l.b16 %v513
        %v555 = vunpack.c.l.b16 %v514
        %v556 = vunpack.c.l.b16 %v515
        %v557 = vunpack.c.l.b16 %v516
        %v558 = vunpack.c.l.b16 %v517
        %v559 = vunpack.c.l.b16 %v518
        %v560 = vunpack.c.l.b16 %v519
        %v561 = vunpack.c.l.b16 %v520
        %v562 = vunpack.c.l.b16 %v521
        %v563 = vunpack.c.l.b16 %v522
        %v564 = vpack.c.b16 %v549, %v548
        %v565 = vpack.c.b16 %v551, %v550
        %v566 = vpack.c.b16 %v553, %v552
        %v567 = vpack.c.b16 %v555, %v554
        %v568 = vpack.c.b16 %v557, %v556
        %v569 = vpack.c.b16 %v559, %v558
        %v570 = vpack.c.b16 %v561, %v560
        %v571 = vpack.c.b16 %v563, %v562
        %580 = vmatprep.subr.bf16.mxu0 0
        %581 = vmatpush1.bf16.msra.mxu0 %v564
        %582 = vmatprep.subr.bf16.mxu0 0
        %583 = vmatpush1.bf16.msra.mxu0 %v565
        %584 = vmatprep.subr.bf16.mxu0 0
        %585 = vmatpush1.bf16.msra.mxu0 %v566
        %586 = vmatprep.subr.bf16.mxu0 0
        %587 = vmatpush1.bf16.msra.mxu0 %v567
        %588 = vmatprep.subr.bf16.mxu0 0
        %589 = vmatpush1.bf16.msra.mxu0 %v568
        %590 = vmatprep.subr.bf16.mxu0 0
        %591 = vmatpush1.bf16.msra.mxu0 %v569
        %592 = vmatprep.subr.bf16.mxu0 0
        %593 = vmatpush1.bf16.msra.mxu0 %v570
        %594 = vmatprep.subr.bf16.mxu0 0
        %595 = vmatpush1.bf16.msra.mxu0 %v571
        %596 = vmatprep.subr.bf16.mxu0 0
        %597 = vmatpush1.bf16.msra.mxu0 0
        %598 = vmatprep.subr.bf16.mxu0 0
        %599 = vmatpush1.bf16.msra.mxu0 0
        %600 = vmatprep.subr.bf16.mxu0 0
        %601 = vmatpush1.bf16.msra.mxu0 0
        %602 = vmatprep.subr.bf16.mxu0 0
        %603 = vmatpush1.bf16.msra.mxu0 0
        %604 = vmatprep.subr.bf16.mxu0 0
        %605 = vmatpush1.bf16.msra.mxu0 0
        %606 = vmatprep.subr.bf16.mxu0 0
        %607 = vmatpush1.bf16.msra.mxu0 0
        %608 = vmatprep.subr.bf16.mxu0 0
        %609 = vmatpush1.bf16.msra.mxu0 0
        %610 = vmatprep.subr.bf16.mxu0 0
        %611 = vmatpush1.bf16.msra.mxu0 0
        %612 = vmatprep.mubr.bf16.mxu0 0
        %613 = vmatmul.mubr.bf16.gmra.mrb[0].mxu0 %v530
        %v614 = vpop.f32.mrb[0].mxu0
        %v615 = vadd.f32 0.0, %v614
        %v616 = vpop.f32.mrb[0].mxu0
        %v617 = vpop.f32.mrb[0].mxu0
        %v618 = vpop.f32.mrb[0].mxu0
        %619 = vdwg.mxu0
        %v620 = vrot.slane %v526, 7
        %v621 = vsel %vm528, %v620, %v525
        %v622 = vpack.c.b16 %v621, %v621
        %v640 = vunpack.c.l.b16 %v490
        %v641 = vunpack.c.l.b16 %v491
        %v642 = vunpack.c.l.b16 %v492
        %v643 = vunpack.c.l.b16 %v493
        %v644 = vunpack.c.l.b16 %v494
        %v645 = vunpack.c.l.b16 %v495
        %v646 = vunpack.c.l.b16 %v496
        %v647 = vunpack.c.l.b16 %v497
        %v648 = vunpack.c.l.b16 %v498
        %v649 = vunpack.c.l.b16 %v499
        %v650 = vunpack.c.l.b16 %v500
        %v651 = vunpack.c.l.b16 %v501
        %v652 = vunpack.c.l.b16 %v502
        %v653 = vunpack.c.l.b16 %v503
        %v654 = vunpack.c.l.b16 %v504
        %v655 = vunpack.c.l.b16 %v505
        %v656 = vpack.c.b16 %v641, %v640
        %v657 = vpack.c.b16 %v643, %v642
        %v658 = vpack.c.b16 %v645, %v644
        %v659 = vpack.c.b16 %v647, %v646
        %v660 = vpack.c.b16 %v649, %v648
        %v661 = vpack.c.b16 %v651, %v650
        %v662 = vpack.c.b16 %v653, %v652
        %v663 = vpack.c.b16 %v655, %v654
        %672 = vmatprep.subr.bf16.mxu0 0
        %673 = vmatpush1.bf16.msra.mxu0 %v656
        %674 = vmatprep.subr.bf16.mxu0 0
        %675 = vmatpush1.bf16.msra.mxu0 %v657
        %676 = vmatprep.subr.bf16.mxu0 0
        %677 = vmatpush1.bf16.msra.mxu0 %v658
        %678 = vmatprep.subr.bf16.mxu0 0
        %679 = vmatpush1.bf16.msra.mxu0 %v659
        %680 = vmatprep.subr.bf16.mxu0 0
        %681 = vmatpush1.bf16.msra.mxu0 %v660
        %682 = vmatprep.subr.bf16.mxu0 0
        %683 = vmatpush1.bf16.msra.mxu0 %v661
        %684 = vmatprep.subr.bf16.mxu0 0
        %685 = vmatpush1.bf16.msra.mxu0 %v662
        %686 = vmatprep.subr.bf16.mxu0 0
        %687 = vmatpush1.bf16.msra.mxu0 %v663
        %688 = vmatprep.subr.bf16.mxu0 0
        %689 = vmatpush1.bf16.msra.mxu0 0
        %690 = vmatprep.subr.bf16.mxu0 0
        %691 = vmatpush1.bf16.msra.mxu0 0
        %692 = vmatprep.subr.bf16.mxu0 0
        %693 = vmatpush1.bf16.msra.mxu0 0
        %694 = vmatprep.subr.bf16.mxu0 0
        %695 = vmatpush1.bf16.msra.mxu0 0
        %696 = vmatprep.subr.bf16.mxu0 0
        %697 = vmatpush1.bf16.msra.mxu0 0
        %698 = vmatprep.subr.bf16.mxu0 0
        %699 = vmatpush1.bf16.msra.mxu0 0
        %700 = vmatprep.subr.bf16.mxu0 0
        %701 = vmatpush1.bf16.msra.mxu0 0
        %702 = vmatprep.subr.bf16.mxu0 0
        %703 = vmatpush1.bf16.msra.mxu0 0
        %704 = vmatprep.mubr.bf16.mxu0 0
        %705 = vmatmul.mubr.bf16.gmra.mrb[0].mxu0 %v622
        %v706 = vpop.f32.mrb[0].mxu0
        %v707 = vadd.f32 %v615, %v706
        %v708 = vpop.f32.mrb[0].mxu0
        %v709 = vpop.f32.mrb[0].mxu0
        %v710 = vpop.f32.mrb[0].mxu0
        %711 = vdwg.mxu0
        %s712 = scalar_lea.vmem %s343, 128 [#allocation9]
        %v713 = vld [vmem:[%s712] sm:$0xf]
        %v714 = vld [vmem:[%s712 + $0x4] sm:$0xf]
        %v715 = vld [vmem:[%s712 + $0x8] sm:$0xf]
        %v716 = vld [vmem:[%s712 + $0xc] sm:$0xf]
        %v717 = vld [vmem:[%s712 + $0x10] sm:$0xf]
        %v718 = vld [vmem:[%s712 + $0x14] sm:$0xf]
        %v719 = vld [vmem:[%s712 + $0x18] sm:$0xf]
        %v720 = vld [vmem:[%s712 + $0x1c] sm:$0xf]
        %v721 = vld [vmem:[%s712 + $0x20] sm:$0xf]
        %v722 = vld [vmem:[%s712 + $0x24] sm:$0xf]
        %v723 = vld [vmem:[%s712 + $0x28] sm:$0xf]
        %v724 = vld [vmem:[%s712 + $0x2c] sm:$0xf]
        %v725 = vld [vmem:[%s712 + $0x30] sm:$0xf]
        %v726 = vld [vmem:[%s712 + $0x34] sm:$0xf]
        %v727 = vld [vmem:[%s712 + $0x38] sm:$0xf]
        %v728 = vld [vmem:[%s712 + $0x3c] sm:$0xf]
        %v729 = vrot.slane %v525, 2
        %v730 = vrot.slane %v526, 1
        %v731 = vsel %vm528, %v730, %v729
        %v732 = vpack.c.b16 %v731, %v731
        %v750 = vunpack.c.l.b16 %v713
        %v751 = vunpack.c.l.b16 %v714
        %v752 = vunpack.c.l.b16 %v715
        %v753 = vunpack.c.l.b16 %v716
        %v754 = vunpack.c.l.b16 %v717
        %v755 = vunpack.c.l.b16 %v718
        %v756 = vunpack.c.l.b16 %v719
        %v757 = vunpack.c.l.b16 %v720
        %v758 = vunpack.c.l.b16 %v721
        %v759 = vunpack.c.l.b16 %v722
        %v760 = vunpack.c.l.b16 %v723
        %v761 = vunpack.c.l.b16 %v724
        %v762 = vunpack.c.l.b16 %v725
        %v763 = vunpack.c.l.b16 %v726
        %v764 = vunpack.c.l.b16 %v727
        %v765 = vunpack.c.l.b16 %v728
        %v766 = vpack.c.b16 %v751, %v750
        %v767 = vpack.c.b16 %v753, %v752
        %v768 = vpack.c.b16 %v755, %v754
        %v769 = vpack.c.b16 %v757, %v756
        %v770 = vpack.c.b16 %v759, %v758
        %v771 = vpack.c.b16 %v761, %v760
        %v772 = vpack.c.b16 %v763, %v762
        %v773 = vpack.c.b16 %v765, %v764
        %782 = vmatprep.subr.bf16.mxu0 0
        %783 = vmatpush1.bf16.msra.mxu0 %v766
        %784 = vmatprep.subr.bf16.mxu0 0
        %785 = vmatpush1.bf16.msra.mxu0 %v767
        %786 = vmatprep.subr.bf16.mxu0 0
        %787 = vmatpush1.bf16.msra.mxu0 %v768
        %788 = vmatprep.subr.bf16.mxu0 0
        %789 = vmatpush1.bf16.msra.mxu0 %v769
        %790 = vmatprep.subr.bf16.mxu0 0
        %791 = vmatpush1.bf16.msra.mxu0 %v770
        %792 = vmatprep.subr.bf16.mxu0 0
        %793 = vmatpush1.bf16.msra.mxu0 %v771
        %794 = vmatprep.subr.bf16.mxu0 0
        %795 = vmatpush1.bf16.msra.mxu0 %v772
        %796 = vmatprep.subr.bf16.mxu0 0
        %797 = vmatpush1.bf16.msra.mxu0 %v773
        %798 = vmatprep.subr.bf16.mxu0 0
        %799 = vmatpush1.bf16.msra.mxu0 0
        %800 = vmatprep.subr.bf16.mxu0 0
        %801 = vmatpush1.bf16.msra.mxu0 0
        %802 = vmatprep.subr.bf16.mxu0 0
        %803 = vmatpush1.bf16.msra.mxu0 0
        %804 = vmatprep.subr.bf16.mxu0 0
        %805 = vmatpush1.bf16.msra.mxu0 0
        %806 = vmatprep.subr.bf16.mxu0 0
        %807 = vmatpush1.bf16.msra.mxu0 0
        %808 = vmatprep.subr.bf16.mxu0 0
        %809 = vmatpush1.bf16.msra.mxu0 0
        %810 = vmatprep.subr.bf16.mxu0 0
        %811 = vmatpush1.bf16.msra.mxu0 0
        %812 = vmatprep.subr.bf16.mxu0 0
        %813 = vmatpush1.bf16.msra.mxu0 0
        %814 = vmatprep.mubr.bf16.mxu0 0
        %815 = vmatmul.mubr.bf16.gmra.mrb[0].mxu0 %v732
        %v816 = vpop.f32.mrb[0].mxu0
        %v817 = vadd.f32 0.0, %v816
        %v818 = vpop.f32.mrb[0].mxu0
        %v819 = vpop.f32.mrb[0].mxu0
        %v820 = vpop.f32.mrb[0].mxu0
        %821 = vdwg.mxu0
        %v822 = vadd.f32 %v707, %v817
        %s823 = scalar_lea.vmem %s343, 192 [#allocation9]
        %v824 = vld [vmem:[%s823] sm:$0xf]
        %v825 = vld [vmem:[%s823 + $0x4] sm:$0xf]
        %v826 = vld [vmem:[%s823 + $0x8] sm:$0xf]
        %v827 = vld [vmem:[%s823 + $0xc] sm:$0xf]
        %v828 = vld [vmem:[%s823 + $0x10] sm:$0xf]
        %v829 = vld [vmem:[%s823 + $0x14] sm:$0xf]
        %v830 = vld [vmem:[%s823 + $0x18] sm:$0xf]
        %v831 = vld [vmem:[%s823 + $0x1c] sm:$0xf]
        %v832 = vld [vmem:[%s823 + $0x20] sm:$0xf]
        %v833 = vld [vmem:[%s823 + $0x24] sm:$0xf]
        %v834 = vld [vmem:[%s823 + $0x28] sm:$0xf]
        %v835 = vld [vmem:[%s823 + $0x2c] sm:$0xf]
        %v836 = vld [vmem:[%s823 + $0x30] sm:$0xf]
        %v837 = vld [vmem:[%s823 + $0x34] sm:$0xf]
        %v838 = vld [vmem:[%s823 + $0x38] sm:$0xf]
        %v839 = vld [vmem:[%s823 + $0x3c] sm:$0xf]
        %v840 = vrot.slane %v525, 3
        %v841 = vrot.slane %v526, 2
        %v842 = vsel %vm528, %v841, %v840
        %v843 = vpack.c.b16 %v842, %v842
        %v861 = vunpack.c.l.b16 %v824
        %v862 = vunpack.c.l.b16 %v825
        %v863 = vunpack.c.l.b16 %v826
        %v864 = vunpack.c.l.b16 %v827
        %v865 = vunpack.c.l.b16 %v828
        %v866 = vunpack.c.l.b16 %v829
        %v867 = vunpack.c.l.b16 %v830
        %v868 = vunpack.c.l.b16 %v831
        %v869 = vunpack.c.l.b16 %v832
        %v870 = vunpack.c.l.b16 %v833
        %v871 = vunpack.c.l.b16 %v834
        %v872 = vunpack.c.l.b16 %v835
        %v873 = vunpack.c.l.b16 %v836
        %v874 = vunpack.c.l.b16 %v837
        %v875 = vunpack.c.l.b16 %v838
        %v876 = vunpack.c.l.b16 %v839
        %v877 = vpack.c.b16 %v862, %v861
        %v878 = vpack.c.b16 %v864, %v863
        %v879 = vpack.c.b16 %v866, %v865
        %v880 = vpack.c.b16 %v868, %v867
        %v881 = vpack.c.b16 %v870, %v869
        %v882 = vpack.c.b16 %v872, %v871
        %v883 = vpack.c.b16 %v874, %v873
        %v884 = vpack.c.b16 %v876, %v875
        %893 = vmatprep.subr.bf16.mxu0 0
        %894 = vmatpush1.bf16.msra.mxu0 %v877
        %895 = vmatprep.subr.bf16.mxu0 0
        %896 = vmatpush1.bf16.msra.mxu0 %v878
        %897 = vmatprep.subr.bf16.mxu0 0
        %898 = vmatpush1.bf16.msra.mxu0 %v879
        %899 = vmatprep.subr.bf16.mxu0 0
        %900 = vmatpush1.bf16.msra.mxu0 %v880
        %901 = vmatprep.subr.bf16.mxu0 0
        %902 = vmatpush1.bf16.msra.mxu0 %v881
        %903 = vmatprep.subr.bf16.mxu0 0
        %904 = vmatpush1.bf16.msra.mxu0 %v882
        %905 = vmatprep.subr.bf16.mxu0 0
        %906 = vmatpush1.bf16.msra.mxu0 %v883
        %907 = vmatprep.subr.bf16.mxu0 0
        %908 = vmatpush1.bf16.msra.mxu0 %v884
        %909 = vmatprep.subr.bf16.mxu0 0
        %910 = vmatpush1.bf16.msra.mxu0 0
        %911 = vmatprep.subr.bf16.mxu0 0
        %912 = vmatpush1.bf16.msra.mxu0 0
        %913 = vmatprep.subr.bf16.mxu0 0
        %914 = vmatpush1.bf16.msra.mxu0 0
        %915 = vmatprep.subr.bf16.mxu0 0
        %916 = vmatpush1.bf16.msra.mxu0 0
        %917 = vmatprep.subr.bf16.mxu0 0
        %918 = vmatpush1.bf16.msra.mxu0 0
        %919 = vmatprep.subr.bf16.mxu0 0
        %920 = vmatpush1.bf16.msra.mxu0 0
        %921 = vmatprep.subr.bf16.mxu0 0
        %922 = vmatpush1.bf16.msra.mxu0 0
        %923 = vmatprep.subr.bf16.mxu0 0
        %924 = vmatpush1.bf16.msra.mxu0 0
        %925 = vmatprep.mubr.bf16.mxu0 0
        %926 = vmatmul.mubr.bf16.gmra.mrb[0].mxu0 %v843
        %v927 = vpop.f32.mrb[0].mxu0
        %v928 = vadd.f32 0.0, %v927
        %v929 = vpop.f32.mrb[0].mxu0
        %v930 = vpop.f32.mrb[0].mxu0
        %v931 = vpop.f32.mrb[0].mxu0
        %932 = vdwg.mxu0
        %v933 = vadd.f32 %v822, %v928
        %s934 = scalar_lea.vmem %s343, 256 [#allocation9]
        %v935 = vld [vmem:[%s934] sm:$0xf]
        %v936 = vld [vmem:[%s934 + $0x4] sm:$0xf]
        %v937 = vld [vmem:[%s934 + $0x8] sm:$0xf]
        %v938 = vld [vmem:[%s934 + $0xc] sm:$0xf]
        %v939 = vld [vmem:[%s934 + $0x10] sm:$0xf]
        %v940 = vld [vmem:[%s934 + $0x14] sm:$0xf]
        %v941 = vld [vmem:[%s934 + $0x18] sm:$0xf]
        %v942 = vld [vmem:[%s934 + $0x1c] sm:$0xf]
        %v943 = vld [vmem:[%s934 + $0x20] sm:$0xf]
        %v944 = vld [vmem:[%s934 + $0x24] sm:$0xf]
        %v945 = vld [vmem:[%s934 + $0x28] sm:$0xf]
        %v946 = vld [vmem:[%s934 + $0x2c] sm:$0xf]
        %v947 = vld [vmem:[%s934 + $0x30] sm:$0xf]
        %v948 = vld [vmem:[%s934 + $0x34] sm:$0xf]
        %v949 = vld [vmem:[%s934 + $0x38] sm:$0xf]
        %v950 = vld [vmem:[%s934 + $0x3c] sm:$0xf]
        %v951 = vrot.slane %v525, 4
        %v952 = vrot.slane %v526, 3
        %v953 = vsel %vm528, %v952, %v951
        %v954 = vpack.c.b16 %v953, %v953
        %v972 = vunpack.c.l.b16 %v935
        %v973 = vunpack.c.l.b16 %v936
        %v974 = vunpack.c.l.b16 %v937
        %v975 = vunpack.c.l.b16 %v938
        %v976 = vunpack.c.l.b16 %v939
        %v977 = vunpack.c.l.b16 %v940
        %v978 = vunpack.c.l.b16 %v941
        %v979 = vunpack.c.l.b16 %v942
        %v980 = vunpack.c.l.b16 %v943
        %v981 = vunpack.c.l.b16 %v944
        %v982 = vunpack.c.l.b16 %v945
        %v983 = vunpack.c.l.b16 %v946
        %v984 = vunpack.c.l.b16 %v947
        %v985 = vunpack.c.l.b16 %v948
        %v986 = vunpack.c.l.b16 %v949
        %v987 = vunpack.c.l.b16 %v950
        %v988 = vpack.c.b16 %v973, %v972
        %v989 = vpack.c.b16 %v975, %v974
        %v990 = vpack.c.b16 %v977, %v976
        %v991 = vpack.c.b16 %v979, %v978
        %v992 = vpack.c.b16 %v981, %v980
        %v993 = vpack.c.b16 %v983, %v982
        %v994 = vpack.c.b16 %v985, %v984
        %v995 = vpack.c.b16 %v987, %v986
        %1004 = vmatprep.subr.bf16.mxu0 0
        %1005 = vmatpush1.bf16.msra.mxu0 %v988
        %1006 = vmatprep.subr.bf16.mxu0 0
        %1007 = vmatpush1.bf16.msra.mxu0 %v989
        %1008 = vmatprep.subr.bf16.mxu0 0
        %1009 = vmatpush1.bf16.msra.mxu0 %v990
        %1010 = vmatprep.subr.bf16.mxu0 0
        %1011 = vmatpush1.bf16.msra.mxu0 %v991
        %1012 = vmatprep.subr.bf16.mxu0 0
        %1013 = vmatpush1.bf16.msra.mxu0 %v992
        %1014 = vmatprep.subr.bf16.mxu0 0
        %1015 = vmatpush1.bf16.msra.mxu0 %v993
        %1016 = vmatprep.subr.bf16.mxu0 0
        %1017 = vmatpush1.bf16.msra.mxu0 %v994
        %1018 = vmatprep.subr.bf16.mxu0 0
        %1019 = vmatpush1.bf16.msra.mxu0 %v995
        %1020 = vmatprep.subr.bf16.mxu0 0
        %1021 = vmatpush1.bf16.msra.mxu0 0
        %1022 = vmatprep.subr.bf16.mxu0 0
        %1023 = vmatpush1.bf16.msra.mxu0 0
        %1024 = vmatprep.subr.bf16.mxu0 0
        %1025 = vmatpush1.bf16.msra.mxu0 0
        %1026 = vmatprep.subr.bf16.mxu0 0
        %1027 = vmatpush1.bf16.msra.mxu0 0
        %1028 = vmatprep.subr.bf16.mxu0 0
        %1029 = vmatpush1.bf16.msra.mxu0 0
        %1030 = vmatprep.subr.bf16.mxu0 0
        %1031 = vmatpush1.bf16.msra.mxu0 0
        %1032 = vmatprep.subr.bf16.mxu0 0
        %1033 = vmatpush1.bf16.msra.mxu0 0
        %1034 = vmatprep.subr.bf16.mxu0 0
        %1035 = vmatpush1.bf16.msra.mxu0 0
        %1036 = vmatprep.mubr.bf16.mxu0 0
        %1037 = vmatmul.mubr.bf16.gmra.mrb[0].mxu0 %v954
        %v1038 = vpop.f32.mrb[0].mxu0
        %v1039 = vadd.f32 0.0, %v1038
        %v1040 = vpop.f32.mrb[0].mxu0
        %v1041 = vpop.f32.mrb[0].mxu0
        %v1042 = vpop.f32.mrb[0].mxu0
        %1043 = vdwg.mxu0
        %v1044 = vadd.f32 %v933, %v1039
        %s1045 = scalar_lea.vmem %s343, 320 [#allocation9]
        %v1046 = vld [vmem:[%s1045] sm:$0xf]
        %v1047 = vld [vmem:[%s1045 + $0x4] sm:$0xf]
        %v1048 = vld [vmem:[%s1045 + $0x8] sm:$0xf]
        %v1049 = vld [vmem:[%s1045 + $0xc] sm:$0xf]
        %v1050 = vld [vmem:[%s1045 + $0x10] sm:$0xf]
        %v1051 = vld [vmem:[%s1045 + $0x14] sm:$0xf]
        %v1052 = vld [vmem:[%s1045 + $0x18] sm:$0xf]
        %v1053 = vld [vmem:[%s1045 + $0x1c] sm:$0xf]
        %v1054 = vld [vmem:[%s1045 + $0x20] sm:$0xf]
        %v1055 = vld [vmem:[%s1045 + $0x24] sm:$0xf]
        %v1056 = vld [vmem:[%s1045 + $0x28] sm:$0xf]
        %v1057 = vld [vmem:[%s1045 + $0x2c] sm:$0xf]
        %v1058 = vld [vmem:[%s1045 + $0x30] sm:$0xf]
        %v1059 = vld [vmem:[%s1045 + $0x34] sm:$0xf]
        %v1060 = vld [vmem:[%s1045 + $0x38] sm:$0xf]
        %v1061 = vld [vmem:[%s1045 + $0x3c] sm:$0xf]
        %v1062 = vrot.slane %v525, 5
        %v1063 = vrot.slane %v526, 4
        %v1064 = vsel %vm528, %v1063, %v1062
        %v1065 = vpack.c.b16 %v1064, %v1064
        %v1083 = vunpack.c.l.b16 %v1046
        %v1084 = vunpack.c.l.b16 %v1047
        %v1085 = vunpack.c.l.b16 %v1048
        %v1086 = vunpack.c.l.b16 %v1049
        %v1087 = vunpack.c.l.b16 %v1050
        %v1088 = vunpack.c.l.b16 %v1051
        %v1089 = vunpack.c.l.b16 %v1052
        %v1090 = vunpack.c.l.b16 %v1053
        %v1091 = vunpack.c.l.b16 %v1054
        %v1092 = vunpack.c.l.b16 %v1055
        %v1093 = vunpack.c.l.b16 %v1056
        %v1094 = vunpack.c.l.b16 %v1057
        %v1095 = vunpack.c.l.b16 %v1058
        %v1096 = vunpack.c.l.b16 %v1059
        %v1097 = vunpack.c.l.b16 %v1060
        %v1098 = vunpack.c.l.b16 %v1061
        %v1099 = vpack.c.b16 %v1084, %v1083
        %v1100 = vpack.c.b16 %v1086, %v1085
        %v1101 = vpack.c.b16 %v1088, %v1087
        %v1102 = vpack.c.b16 %v1090, %v1089
        %v1103 = vpack.c.b16 %v1092, %v1091
        %v1104 = vpack.c.b16 %v1094, %v1093
        %v1105 = vpack.c.b16 %v1096, %v1095
        %v1106 = vpack.c.b16 %v1098, %v1097
        %1115 = vmatprep.subr.bf16.mxu0 0
        %1116 = vmatpush1.bf16.msra.mxu0 %v1099
        %1117 = vmatprep.subr.bf16.mxu0 0
        %1118 = vmatpush1.bf16.msra.mxu0 %v1100
        %1119 = vmatprep.subr.bf16.mxu0 0
        %1120 = vmatpush1.bf16.msra.mxu0 %v1101
        %1121 = vmatprep.subr.bf16.mxu0 0
        %1122 = vmatpush1.bf16.msra.mxu0 %v1102
        %1123 = vmatprep.subr.bf16.mxu0 0
        %1124 = vmatpush1.bf16.msra.mxu0 %v1103
        %1125 = vmatprep.subr.bf16.mxu0 0
        %1126 = vmatpush1.bf16.msra.mxu0 %v1104
        %1127 = vmatprep.subr.bf16.mxu0 0
        %1128 = vmatpush1.bf16.msra.mxu0 %v1105
        %1129 = vmatprep.subr.bf16.mxu0 0
        %1130 = vmatpush1.bf16.msra.mxu0 %v1106
        %1131 = vmatprep.subr.bf16.mxu0 0
        %1132 = vmatpush1.bf16.msra.mxu0 0
        %1133 = vmatprep.subr.bf16.mxu0 0
        %1134 = vmatpush1.bf16.msra.mxu0 0
        %1135 = vmatprep.subr.bf16.mxu0 0
        %1136 = vmatpush1.bf16.msra.mxu0 0
        %1137 = vmatprep.subr.bf16.mxu0 0
        %1138 = vmatpush1.bf16.msra.mxu0 0
        %1139 = vmatprep.subr.bf16.mxu0 0
        %1140 = vmatpush1.bf16.msra.mxu0 0
        %1141 = vmatprep.subr.bf16.mxu0 0
        %1142 = vmatpush1.bf16.msra.mxu0 0
        %1143 = vmatprep.subr.bf16.mxu0 0
        %1144 = vmatpush1.bf16.msra.mxu0 0
        %1145 = vmatprep.subr.bf16.mxu0 0
        %1146 = vmatpush1.bf16.msra.mxu0 0
        %1147 = vmatprep.mubr.bf16.mxu0 0
        %1148 = vmatmul.mubr.bf16.gmra.mrb[0].mxu0 %v1065
        %v1149 = vpop.f32.mrb[0].mxu0
        %v1150 = vadd.f32 0.0, %v1149
        %v1151 = vpop.f32.mrb[0].mxu0
        %v1152 = vpop.f32.mrb[0].mxu0
        %v1153 = vpop.f32.mrb[0].mxu0
        %1154 = vdwg.mxu0
        %v1155 = vadd.f32 %v1044, %v1150
        %s1156 = scalar_lea.vmem %s343, 384 [#allocation9]
        %v1157 = vld [vmem:[%s1156] sm:$0xf]
        %v1158 = vld [vmem:[%s1156 + $0x4] sm:$0xf]
        %v1159 = vld [vmem:[%s1156 + $0x8] sm:$0xf]
        %v1160 = vld [vmem:[%s1156 + $0xc] sm:$0xf]
        %v1161 = vld [vmem:[%s1156 + $0x10] sm:$0xf]
        %v1162 = vld [vmem:[%s1156 + $0x14] sm:$0xf]
        %v1163 = vld [vmem:[%s1156 + $0x18] sm:$0xf]
        %v1164 = vld [vmem:[%s1156 + $0x1c] sm:$0xf]
        %v1165 = vld [vmem:[%s1156 + $0x20] sm:$0xf]
        %v1166 = vld [vmem:[%s1156 + $0x24] sm:$0xf]
        %v1167 = vld [vmem:[%s1156 + $0x28] sm:$0xf]
        %v1168 = vld [vmem:[%s1156 + $0x2c] sm:$0xf]
        %v1169 = vld [vmem:[%s1156 + $0x30] sm:$0xf]
        %v1170 = vld [vmem:[%s1156 + $0x34] sm:$0xf]
        %v1171 = vld [vmem:[%s1156 + $0x38] sm:$0xf]
        %v1172 = vld [vmem:[%s1156 + $0x3c] sm:$0xf]
        %v1173 = vrot.slane %v525, 6
        %v1174 = vrot.slane %v526, 5
        %v1175 = vsel %vm528, %v1174, %v1173
        %v1176 = vpack.c.b16 %v1175, %v1175
        %v1194 = vunpack.c.l.b16 %v1157
        %v1195 = vunpack.c.l.b16 %v1158
        %v1196 = vunpack.c.l.b16 %v1159
        %v1197 = vunpack.c.l.b16 %v1160
        %v1198 = vunpack.c.l.b16 %v1161
        %v1199 = vunpack.c.l.b16 %v1162
        %v1200 = vunpack.c.l.b16 %v1163
        %v1201 = vunpack.c.l.b16 %v1164
        %v1202 = vunpack.c.l.b16 %v1165
        %v1203 = vunpack.c.l.b16 %v1166
        %v1204 = vunpack.c.l.b16 %v1167
        %v1205 = vunpack.c.l.b16 %v1168
        %v1206 = vunpack.c.l.b16 %v1169
        %v1207 = vunpack.c.l.b16 %v1170
        %v1208 = vunpack.c.l.b16 %v1171
        %v1209 = vunpack.c.l.b16 %v1172
        %v1210 = vpack.c.b16 %v1195, %v1194
        %v1211 = vpack.c.b16 %v1197, %v1196
        %v1212 = vpack.c.b16 %v1199, %v1198
        %v1213 = vpack.c.b16 %v1201, %v1200
        %v1214 = vpack.c.b16 %v1203, %v1202
        %v1215 = vpack.c.b16 %v1205, %v1204
        %v1216 = vpack.c.b16 %v1207, %v1206
        %v1217 = vpack.c.b16 %v1209, %v1208
        %1226 = vmatprep.subr.bf16.mxu0 0
        %1227 = vmatpush1.bf16.msra.mxu0 %v1210
        %1228 = vmatprep.subr.bf16.mxu0 0
        %1229 = vmatpush1.bf16.msra.mxu0 %v1211
        %1230 = vmatprep.subr.bf16.mxu0 0
        %1231 = vmatpush1.bf16.msra.mxu0 %v1212
        %1232 = vmatprep.subr.bf16.mxu0 0
        %1233 = vmatpush1.bf16.msra.mxu0 %v1213
        %1234 = vmatprep.subr.bf16.mxu0 0
        %1235 = vmatpush1.bf16.msra.mxu0 %v1214
        %1236 = vmatprep.subr.bf16.mxu0 0
        %1237 = vmatpush1.bf16.msra.mxu0 %v1215
        %1238 = vmatprep.subr.bf16.mxu0 0
        %1239 = vmatpush1.bf16.msra.mxu0 %v1216
        %1240 = vmatprep.subr.bf16.mxu0 0
        %1241 = vmatpush1.bf16.msra.mxu0 %v1217
        %1242 = vmatprep.subr.bf16.mxu0 0
        %1243 = vmatpush1.bf16.msra.mxu0 0
        %1244 = vmatprep.subr.bf16.mxu0 0
        %1245 = vmatpush1.bf16.msra.mxu0 0
        %1246 = vmatprep.subr.bf16.mxu0 0
        %1247 = vmatpush1.bf16.msra.mxu0 0
        %1248 = vmatprep.subr.bf16.mxu0 0
        %1249 = vmatpush1.bf16.msra.mxu0 0
        %1250 = vmatprep.subr.bf16.mxu0 0
        %1251 = vmatpush1.bf16.msra.mxu0 0
        %1252 = vmatprep.subr.bf16.mxu0 0
        %1253 = vmatpush1.bf16.msra.mxu0 0
        %1254 = vmatprep.subr.bf16.mxu0 0
        %1255 = vmatpush1.bf16.msra.mxu0 0
        %1256 = vmatprep.subr.bf16.mxu0 0
        %1257 = vmatpush1.bf16.msra.mxu0 0
        %1258 = vmatprep.mubr.bf16.mxu0 0
        %1259 = vmatmul.mubr.bf16.gmra.mrb[0].mxu0 %v1176
        %v1260 = vpop.f32.mrb[0].mxu0
        %v1261 = vadd.f32 0.0, %v1260
        %v1262 = vpop.f32.mrb[0].mxu0
        %v1263 = vpop.f32.mrb[0].mxu0
        %v1264 = vpop.f32.mrb[0].mxu0
        %1265 = vdwg.mxu0
        %v1266 = vadd.f32 %v1155, %v1261
        %s1267 = scalar_lea.vmem %s343, 448 [#allocation9]
        %v1268 = vld [vmem:[%s1267] sm:$0xf]
        %v1269 = vld [vmem:[%s1267 + $0x4] sm:$0xf]
        %v1270 = vld [vmem:[%s1267 + $0x8] sm:$0xf]
        %v1271 = vld [vmem:[%s1267 + $0xc] sm:$0xf]
        %v1272 = vld [vmem:[%s1267 + $0x10] sm:$0xf]
        %v1273 = vld [vmem:[%s1267 + $0x14] sm:$0xf]
        %v1274 = vld [vmem:[%s1267 + $0x18] sm:$0xf]
        %v1275 = vld [vmem:[%s1267 + $0x1c] sm:$0xf]
        %v1276 = vld [vmem:[%s1267 + $0x20] sm:$0xf]
        %v1277 = vld [vmem:[%s1267 + $0x24] sm:$0xf]
        %v1278 = vld [vmem:[%s1267 + $0x28] sm:$0xf]
        %v1279 = vld [vmem:[%s1267 + $0x2c] sm:$0xf]
        %v1280 = vld [vmem:[%s1267 + $0x30] sm:$0xf]
        %v1281 = vld [vmem:[%s1267 + $0x34] sm:$0xf]
        %v1282 = vld [vmem:[%s1267 + $0x38] sm:$0xf]
        %v1283 = vld [vmem:[%s1267 + $0x3c] sm:$0xf]
        %v1284 = vrot.slane %v525, 7
        %v1285 = vrot.slane %v526, 6
        %v1286 = vsel %vm528, %v1285, %v1284
        %v1287 = vpack.c.b16 %v1286, %v1286
        %v1305 = vunpack.c.l.b16 %v1268
        %v1306 = vunpack.c.l.b16 %v1269
        %v1307 = vunpack.c.l.b16 %v1270
        %v1308 = vunpack.c.l.b16 %v1271
        %v1309 = vunpack.c.l.b16 %v1272
        %v1310 = vunpack.c.l.b16 %v1273
        %v1311 = vunpack.c.l.b16 %v1274
        %v1312 = vunpack.c.l.b16 %v1275
        %v1313 = vunpack.c.l.b16 %v1276
        %v1314 = vunpack.c.l.b16 %v1277
        %v1315 = vunpack.c.l.b16 %v1278
        %v1316 = vunpack.c.l.b16 %v1279
        %v1317 = vunpack.c.l.b16 %v1280
        %v1318 = vunpack.c.l.b16 %v1281
        %v1319 = vunpack.c.l.b16 %v1282
        %v1320 = vunpack.c.l.b16 %v1283
        %v1321 = vpack.c.b16 %v1306, %v1305
        %v1322 = vpack.c.b16 %v1308, %v1307
        %v1323 = vpack.c.b16 %v1310, %v1309
        %v1324 = vpack.c.b16 %v1312, %v1311
        %v1325 = vpack.c.b16 %v1314, %v1313
        %v1326 = vpack.c.b16 %v1316, %v1315
        %v1327 = vpack.c.b16 %v1318, %v1317
        %v1328 = vpack.c.b16 %v1320, %v1319
        %1337 = vmatprep.subr.bf16.mxu0 0
        %1338 = vmatpush1.bf16.msra.mxu0 %v1321
        %1339 = vmatprep.subr.bf16.mxu0 0
        %1340 = vmatpush1.bf16.msra.mxu0 %v1322
        %1341 = vmatprep.subr.bf16.mxu0 0
        %1342 = vmatpush1.bf16.msra.mxu0 %v1323
        %1343 = vmatprep.subr.bf16.mxu0 0
        %1344 = vmatpush1.bf16.msra.mxu0 %v1324
        %1345 = vmatprep.subr.bf16.mxu0 0
        %1346 = vmatpush1.bf16.msra.mxu0 %v1325
        %1347 = vmatprep.subr.bf16.mxu0 0
        %1348 = vmatpush1.bf16.msra.mxu0 %v1326
        %1349 = vmatprep.subr.bf16.mxu0 0
        %1350 = vmatpush1.bf16.msra.mxu0 %v1327
        %1351 = vmatprep.subr.bf16.mxu0 0
        %1352 = vmatpush1.bf16.msra.mxu0 %v1328
        %1353 = vmatprep.subr.bf16.mxu0 0
        %1354 = vmatpush1.bf16.msra.mxu0 0
        %1355 = vmatprep.subr.bf16.mxu0 0
        %1356 = vmatpush1.bf16.msra.mxu0 0
        %1357 = vmatprep.subr.bf16.mxu0 0
        %1358 = vmatpush1.bf16.msra.mxu0 0
        %1359 = vmatprep.subr.bf16.mxu0 0
        %1360 = vmatpush1.bf16.msra.mxu0 0
        %1361 = vmatprep.subr.bf16.mxu0 0
        %1362 = vmatpush1.bf16.msra.mxu0 0
        %1363 = vmatprep.subr.bf16.mxu0 0
        %1364 = vmatpush1.bf16.msra.mxu0 0
        %1365 = vmatprep.subr.bf16.mxu0 0
        %1366 = vmatpush1.bf16.msra.mxu0 0
        %1367 = vmatprep.subr.bf16.mxu0 0
        %1368 = vmatpush1.bf16.msra.mxu0 0
        %1369 = vmatprep.mubr.bf16.mxu0 0
        %1370 = vmatmul.mubr.bf16.gmra.mrb[0].mxu0 %v1287
        %v1371 = vpop.f32.mrb[0].mxu0
        %v1372 = vadd.f32 0.0, %v1371
        %v1373 = vpop.f32.mrb[0].mxu0
        %v1374 = vpop.f32.mrb[0].mxu0
        %v1375 = vpop.f32.mrb[0].mxu0
        %1376 = vdwg.mxu0
        %v1377 = vadd.f32 %v1266, %v1372
        %s1378 = scalar_lea.vmem %s343, 512 [#allocation9]
        %v1379 = vld [vmem:[%s1378] sm:$0xf]
        %v1380 = vld [vmem:[%s1378 + $0x4] sm:$0xf]
        %v1381 = vld [vmem:[%s1378 + $0x8] sm:$0xf]
        %v1382 = vld [vmem:[%s1378 + $0xc] sm:$0xf]
        %v1383 = vld [vmem:[%s1378 + $0x10] sm:$0xf]
        %v1384 = vld [vmem:[%s1378 + $0x14] sm:$0xf]
        %v1385 = vld [vmem:[%s1378 + $0x18] sm:$0xf]
        %v1386 = vld [vmem:[%s1378 + $0x1c] sm:$0xf]
        %v1387 = vld [vmem:[%s1378 + $0x20] sm:$0xf]
        %v1388 = vld [vmem:[%s1378 + $0x24] sm:$0xf]
        %v1389 = vld [vmem:[%s1378 + $0x28] sm:$0xf]
        %v1390 = vld [vmem:[%s1378 + $0x2c] sm:$0xf]
        %v1391 = vld [vmem:[%s1378 + $0x30] sm:$0xf]
        %v1392 = vld [vmem:[%s1378 + $0x34] sm:$0xf]
        %v1393 = vld [vmem:[%s1378 + $0x38] sm:$0xf]
        %v1394 = vld [vmem:[%s1378 + $0x3c] sm:$0xf]
        %v1395 = vunpack.c.h.b16 %v488
        %v1396 = vunpack.c.h.b16 %v489
        %v1397 = vrot.slane %v1396, 7
        %v1398 = vsel %vm528, %v1397, %v1395
        %v1399 = vpack.c.b16 %v1398, %v1398
        %v1417 = vunpack.c.l.b16 %v1379
        %v1418 = vunpack.c.l.b16 %v1380
        %v1419 = vunpack.c.l.b16 %v1381
        %v1420 = vunpack.c.l.b16 %v1382
        %v1421 = vunpack.c.l.b16 %v1383
        %v1422 = vunpack.c.l.b16 %v1384
        %v1423 = vunpack.c.l.b16 %v1385
        %v1424 = vunpack.c.l.b16 %v1386
        %v1425 = vunpack.c.l.b16 %v1387
        %v1426 = vunpack.c.l.b16 %v1388
        %v1427 = vunpack.c.l.b16 %v1389
        %v1428 = vunpack.c.l.b16 %v1390
        %v1429 = vunpack.c.l.b16 %v1391
        %v1430 = vunpack.c.l.b16 %v1392
        %v1431 = vunpack.c.l.b16 %v1393
        %v1432 = vunpack.c.l.b16 %v1394
        %v1433 = vpack.c.b16 %v1418, %v1417
        %v1434 = vpack.c.b16 %v1420, %v1419
        %v1435 = vpack.c.b16 %v1422, %v1421
        %v1436 = vpack.c.b16 %v1424, %v1423
        %v1437 = vpack.c.b16 %v1426, %v1425
        %v1438 = vpack.c.b16 %v1428, %v1427
        %v1439 = vpack.c.b16 %v1430, %v1429
        %v1440 = vpack.c.b16 %v1432, %v1431
        %1449 = vmatprep.subr.bf16.mxu0 0
        %1450 = vmatpush1.bf16.msra.mxu0 %v1433
        %1451 = vmatprep.subr.bf16.mxu0 0
        %1452 = vmatpush1.bf16.msra.mxu0 %v1434
        %1453 = vmatprep.subr.bf16.mxu0 0
        %1454 = vmatpush1.bf16.msra.mxu0 %v1435
        %1455 = vmatprep.subr.bf16.mxu0 0
        %1456 = vmatpush1.bf16.msra.mxu0 %v1436
        %1457 = vmatprep.subr.bf16.mxu0 0
        %1458 = vmatpush1.bf16.msra.mxu0 %v1437
        %1459 = vmatprep.subr.bf16.mxu0 0
        %1460 = vmatpush1.bf16.msra.mxu0 %v1438
        %1461 = vmatprep.subr.bf16.mxu0 0
        %1462 = vmatpush1.bf16.msra.mxu0 %v1439
        %1463 = vmatprep.subr.bf16.mxu0 0
        %1464 = vmatpush1.bf16.msra.mxu0 %v1440
        %1465 = vmatprep.subr.bf16.mxu0 0
        %1466 = vmatpush1.bf16.msra.mxu0 0
        %1467 = vmatprep.subr.bf16.mxu0 0
        %1468 = vmatpush1.bf16.msra.mxu0 0
        %1469 = vmatprep.subr.bf16.mxu0 0
        %1470 = vmatpush1.bf16.msra.mxu0 0
        %1471 = vmatprep.subr.bf16.mxu0 0
        %1472 = vmatpush1.bf16.msra.mxu0 0
        %1473 = vmatprep.subr.bf16.mxu0 0
        %1474 = vmatpush1.bf16.msra.mxu0 0
        %1475 = vmatprep.subr.bf16.mxu0 0
        %1476 = vmatpush1.bf16.msra.mxu0 0
        %1477 = vmatprep.subr.bf16.mxu0 0
        %1478 = vmatpush1.bf16.msra.mxu0 0
        %1479 = vmatprep.subr.bf16.mxu0 0
        %1480 = vmatpush1.bf16.msra.mxu0 0
        %1481 = vmatprep.mubr.bf16.mxu0 0
        %1482 = vmatmul.mubr.bf16.gmra.mrb[0].mxu0 %v1399
        %v1483 = vpop.f32.mrb[0].mxu0
        %v1484 = vadd.f32 0.0, %v1483
        %v1485 = vpop.f32.mrb[0].mxu0
        %v1486 = vpop.f32.mrb[0].mxu0
        %v1487 = vpop.f32.mrb[0].mxu0
        %1488 = vdwg.mxu0
        %v1489 = vadd.f32 %v1377, %v1484
        %s1490 = scalar_lea.vmem %s343, 576 [#allocation9]
        %v1491 = vld [vmem:[%s1490] sm:$0xf]
        %v1492 = vld [vmem:[%s1490 + $0x4] sm:$0xf]
        %v1493 = vld [vmem:[%s1490 + $0x8] sm:$0xf]
        %v1494 = vld [vmem:[%s1490 + $0xc] sm:$0xf]
        %v1495 = vld [vmem:[%s1490 + $0x10] sm:$0xf]
        %v1496 = vld [vmem:[%s1490 + $0x14] sm:$0xf]
        %v1497 = vld [vmem:[%s1490 + $0x18] sm:$0xf]
        %v1498 = vld [vmem:[%s1490 + $0x1c] sm:$0xf]
        %v1499 = vld [vmem:[%s1490 + $0x20] sm:$0xf]
        %v1500 = vld [vmem:[%s1490 + $0x24] sm:$0xf]
        %v1501 = vld [vmem:[%s1490 + $0x28] sm:$0xf]
        %v1502 = vld [vmem:[%s1490 + $0x2c] sm:$0xf]
        %v1503 = vld [vmem:[%s1490 + $0x30] sm:$0xf]
        %v1504 = vld [vmem:[%s1490 + $0x34] sm:$0xf]
        %v1505 = vld [vmem:[%s1490 + $0x38] sm:$0xf]
        %v1506 = vld [vmem:[%s1490 + $0x3c] sm:$0xf]
        %v1507 = vrot.slane %v1395, 1
        %v1508 = vsel %vm528, %v1396, %v1507
        %v1509 = vpack.c.b16 %v1508, %v1508
        %v1527 = vunpack.c.l.b16 %v1491
        %v1528 = vunpack.c.l.b16 %v1492
        %v1529 = vunpack.c.l.b16 %v1493
        %v1530 = vunpack.c.l.b16 %v1494
        %v1531 = vunpack.c.l.b16 %v1495
        %v1532 = vunpack.c.l.b16 %v1496
        %v1533 = vunpack.c.l.b16 %v1497
        %v1534 = vunpack.c.l.b16 %v1498
        %v1535 = vunpack.c.l.b16 %v1499
        %v1536 = vunpack.c.l.b16 %v1500
        %v1537 = vunpack.c.l.b16 %v1501
        %v1538 = vunpack.c.l.b16 %v1502
        %v1539 = vunpack.c.l.b16 %v1503
        %v1540 = vunpack.c.l.b16 %v1504
        %v1541 = vunpack.c.l.b16 %v1505
        %v1542 = vunpack.c.l.b16 %v1506
        %v1543 = vpack.c.b16 %v1528, %v1527
        %v1544 = vpack.c.b16 %v1530, %v1529
        %v1545 = vpack.c.b16 %v1532, %v1531
        %v1546 = vpack.c.b16 %v1534, %v1533
        %v1547 = vpack.c.b16 %v1536, %v1535
        %v1548 = vpack.c.b16 %v1538, %v1537
        %v1549 = vpack.c.b16 %v1540, %v1539
        %v1550 = vpack.c.b16 %v1542, %v1541
        %1559 = vmatprep.subr.bf16.mxu0 0
        %1560 = vmatpush1.bf16.msra.mxu0 %v1543
        %1561 = vmatprep.subr.bf16.mxu0 0
        %1562 = vmatpush1.bf16.msra.mxu0 %v1544
        %1563 = vmatprep.subr.bf16.mxu0 0
        %1564 = vmatpush1.bf16.msra.mxu0 %v1545
        %1565 = vmatprep.subr.bf16.mxu0 0
        %1566 = vmatpush1.bf16.msra.mxu0 %v1546
        %1567 = vmatprep.subr.bf16.mxu0 0
        %1568 = vmatpush1.bf16.msra.mxu0 %v1547
        %1569 = vmatprep.subr.bf16.mxu0 0
        %1570 = vmatpush1.bf16.msra.mxu0 %v1548
        %1571 = vmatprep.subr.bf16.mxu0 0
        %1572 = vmatpush1.bf16.msra.mxu0 %v1549
        %1573 = vmatprep.subr.bf16.mxu0 0
        %1574 = vmatpush1.bf16.msra.mxu0 %v1550
        %1575 = vmatprep.subr.bf16.mxu0 0
        %1576 = vmatpush1.bf16.msra.mxu0 0
        %1577 = vmatprep.subr.bf16.mxu0 0
        %1578 = vmatpush1.bf16.msra.mxu0 0
        %1579 = vmatprep.subr.bf16.mxu0 0
        %1580 = vmatpush1.bf16.msra.mxu0 0
        %1581 = vmatprep.subr.bf16.mxu0 0
        %1582 = vmatpush1.bf16.msra.mxu0 0
        %1583 = vmatprep.subr.bf16.mxu0 0
        %1584 = vmatpush1.bf16.msra.mxu0 0
        %1585 = vmatprep.subr.bf16.mxu0 0
        %1586 = vmatpush1.bf16.msra.mxu0 0
        %1587 = vmatprep.subr.bf16.mxu0 0
        %1588 = vmatpush1.bf16.msra.mxu0 0
        %1589 = vmatprep.subr.bf16.mxu0 0
        %1590 = vmatpush1.bf16.msra.mxu0 0
        %1591 = vmatprep.mubr.bf16.mxu0 0
        %1592 = vmatmul.mubr.bf16.gmra.mrb[0].mxu0 %v1509
        %v1593 = vpop.f32.mrb[0].mxu0
        %v1594 = vadd.f32 0.0, %v1593
        %v1595 = vpop.f32.mrb[0].mxu0
        %v1596 = vpop.f32.mrb[0].mxu0
        %v1597 = vpop.f32.mrb[0].mxu0
        %1598 = vdwg.mxu0
        %v1599 = vadd.f32 %v1489, %v1594
        %s1600 = scalar_lea.vmem %s343, 640 [#allocation9]
        %v1601 = vld [vmem:[%s1600] sm:$0xf]
        %v1602 = vld [vmem:[%s1600 + $0x4] sm:$0xf]
        %v1603 = vld [vmem:[%s1600 + $0x8] sm:$0xf]
        %v1604 = vld [vmem:[%s1600 + $0xc] sm:$0xf]
        %v1605 = vld [vmem:[%s1600 + $0x10] sm:$0xf]
        %v1606 = vld [vmem:[%s1600 + $0x14] sm:$0xf]
        %v1607 = vld [vmem:[%s1600 + $0x18] sm:$0xf]
        %v1608 = vld [vmem:[%s1600 + $0x1c] sm:$0xf]
        %v1609 = vld [vmem:[%s1600 + $0x20] sm:$0xf]
        %v1610 = vld [vmem:[%s1600 + $0x24] sm:$0xf]
        %v1611 = vld [vmem:[%s1600 + $0x28] sm:$0xf]
        %v1612 = vld [vmem:[%s1600 + $0x2c] sm:$0xf]
        %v1613 = vld [vmem:[%s1600 + $0x30] sm:$0xf]
        %v1614 = vld [vmem:[%s1600 + $0x34] sm:$0xf]
        %v1615 = vld [vmem:[%s1600 + $0x38] sm:$0xf]
        %v1616 = vld [vmem:[%s1600 + $0x3c] sm:$0xf]
        %v1617 = vrot.slane %v1395, 2
        %v1618 = vrot.slane %v1396, 1
        %v1619 = vsel %vm528, %v1618, %v1617
        %v1620 = vpack.c.b16 %v1619, %v1619
        %v1638 = vunpack.c.l.b16 %v1601
        %v1639 = vunpack.c.l.b16 %v1602
        %v1640 = vunpack.c.l.b16 %v1603
        %v1641 = vunpack.c.l.b16 %v1604
        %v1642 = vunpack.c.l.b16 %v1605
        %v1643 = vunpack.c.l.b16 %v1606
        %v1644 = vunpack.c.l.b16 %v1607
        %v1645 = vunpack.c.l.b16 %v1608
        %v1646 = vunpack.c.l.b16 %v1609
        %v1647 = vunpack.c.l.b16 %v1610
        %v1648 = vunpack.c.l.b16 %v1611
        %v1649 = vunpack.c.l.b16 %v1612
        %v1650 = vunpack.c.l.b16 %v1613
        %v1651 = vunpack.c.l.b16 %v1614
        %v1652 = vunpack.c.l.b16 %v1615
        %v1653 = vunpack.c.l.b16 %v1616
        %v1654 = vpack.c.b16 %v1639, %v1638
        %v1655 = vpack.c.b16 %v1641, %v1640
        %v1656 = vpack.c.b16 %v1643, %v1642
        %v1657 = vpack.c.b16 %v1645, %v1644
        %v1658 = vpack.c.b16 %v1647, %v1646
        %v1659 = vpack.c.b16 %v1649, %v1648
        %v1660 = vpack.c.b16 %v1651, %v1650
        %v1661 = vpack.c.b16 %v1653, %v1652
        %1670 = vmatprep.subr.bf16.mxu0 0
        %1671 = vmatpush1.bf16.msra.mxu0 %v1654
        %1672 = vmatprep.subr.bf16.mxu0 0
        %1673 = vmatpush1.bf16.msra.mxu0 %v1655
        %1674 = vmatprep.subr.bf16.mxu0 0
        %1675 = vmatpush1.bf16.msra.mxu0 %v1656
        %1676 = vmatprep.subr.bf16.mxu0 0
        %1677 = vmatpush1.bf16.msra.mxu0 %v1657
        %1678 = vmatprep.subr.bf16.mxu0 0
        %1679 = vmatpush1.bf16.msra.mxu0 %v1658
        %1680 = vmatprep.subr.bf16.mxu0 0
        %1681 = vmatpush1.bf16.msra.mxu0 %v1659
        %1682 = vmatprep.subr.bf16.mxu0 0
        %1683 = vmatpush1.bf16.msra.mxu0 %v1660
        %1684 = vmatprep.subr.bf16.mxu0 0
        %1685 = vmatpush1.bf16.msra.mxu0 %v1661
        %1686 = vmatprep.subr.bf16.mxu0 0
        %1687 = vmatpush1.bf16.msra.mxu0 0
        %1688 = vmatprep.subr.bf16.mxu0 0
        %1689 = vmatpush1.bf16.msra.mxu0 0
        %1690 = vmatprep.subr.bf16.mxu0 0
        %1691 = vmatpush1.bf16.msra.mxu0 0
        %1692 = vmatprep.subr.bf16.mxu0 0
        %1693 = vmatpush1.bf16.msra.mxu0 0
        %1694 = vmatprep.subr.bf16.mxu0 0
        %1695 = vmatpush1.bf16.msra.mxu0 0
        %1696 = vmatprep.subr.bf16.mxu0 0
        %1697 = vmatpush1.bf16.msra.mxu0 0
        %1698 = vmatprep.subr.bf16.mxu0 0
        %1699 = vmatpush1.bf16.msra.mxu0 0
        %1700 = vmatprep.subr.bf16.mxu0 0
        %1701 = vmatpush1.bf16.msra.mxu0 0
        %1702 = vmatprep.mubr.bf16.mxu0 0
        %1703 = vmatmul.mubr.bf16.gmra.mrb[0].mxu0 %v1620
        %v1704 = vpop.f32.mrb[0].mxu0
        %v1705 = vadd.f32 0.0, %v1704
        %v1706 = vpop.f32.mrb[0].mxu0
        %v1707 = vpop.f32.mrb[0].mxu0
        %v1708 = vpop.f32.mrb[0].mxu0
        %1709 = vdwg.mxu0
        %v1710 = vadd.f32 %v1599, %v1705
        %s1711 = scalar_lea.vmem %s343, 704 [#allocation9]
        %v1712 = vld [vmem:[%s1711] sm:$0xf]
        %v1713 = vld [vmem:[%s1711 + $0x4] sm:$0xf]
        %v1714 = vld [vmem:[%s1711 + $0x8] sm:$0xf]
        %v1715 = vld [vmem:[%s1711 + $0xc] sm:$0xf]
        %v1716 = vld [vmem:[%s1711 + $0x10] sm:$0xf]
        %v1717 = vld [vmem:[%s1711 + $0x14] sm:$0xf]
        %v1718 = vld [vmem:[%s1711 + $0x18] sm:$0xf]
        %v1719 = vld [vmem:[%s1711 + $0x1c] sm:$0xf]
        %v1720 = vld [vmem:[%s1711 + $0x20] sm:$0xf]
        %v1721 = vld [vmem:[%s1711 + $0x24] sm:$0xf]
        %v1722 = vld [vmem:[%s1711 + $0x28] sm:$0xf]
        %v1723 = vld [vmem:[%s1711 + $0x2c] sm:$0xf]
        %v1724 = vld [vmem:[%s1711 + $0x30] sm:$0xf]
        %v1725 = vld [vmem:[%s1711 + $0x34] sm:$0xf]
        %v1726 = vld [vmem:[%s1711 + $0x38] sm:$0xf]
        %v1727 = vld [vmem:[%s1711 + $0x3c] sm:$0xf]
        %v1728 = vrot.slane %v1395, 3
        %v1729 = vrot.slane %v1396, 2
        %v1730 = vsel %vm528, %v1729, %v1728
        %v1731 = vpack.c.b16 %v1730, %v1730
        %v1749 = vunpack.c.l.b16 %v1712
        %v1750 = vunpack.c.l.b16 %v1713
        %v1751 = vunpack.c.l.b16 %v1714
        %v1752 = vunpack.c.l.b16 %v1715
        %v1753 = vunpack.c.l.b16 %v1716
        %v1754 = vunpack.c.l.b16 %v1717
        %v1755 = vunpack.c.l.b16 %v1718
        %v1756 = vunpack.c.l.b16 %v1719
        %v1757 = vunpack.c.l.b16 %v1720
        %v1758 = vunpack.c.l.b16 %v1721
        %v1759 = vunpack.c.l.b16 %v1722
        %v1760 = vunpack.c.l.b16 %v1723
        %v1761 = vunpack.c.l.b16 %v1724
        %v1762 = vunpack.c.l.b16 %v1725
        %v1763 = vunpack.c.l.b16 %v1726
        %v1764 = vunpack.c.l.b16 %v1727
        %v1765 = vpack.c.b16 %v1750, %v1749
        %v1766 = vpack.c.b16 %v1752, %v1751
        %v1767 = vpack.c.b16 %v1754, %v1753
        %v1768 = vpack.c.b16 %v1756, %v1755
        %v1769 = vpack.c.b16 %v1758, %v1757
        %v1770 = vpack.c.b16 %v1760, %v1759
        %v1771 = vpack.c.b16 %v1762, %v1761
        %v1772 = vpack.c.b16 %v1764, %v1763
        %1781 = vmatprep.subr.bf16.mxu0 0
        %1782 = vmatpush1.bf16.msra.mxu0 %v1765
        %1783 = vmatprep.subr.bf16.mxu0 0
        %1784 = vmatpush1.bf16.msra.mxu0 %v1766
        %1785 = vmatprep.subr.bf16.mxu0 0
        %1786 = vmatpush1.bf16.msra.mxu0 %v1767
        %1787 = vmatprep.subr.bf16.mxu0 0
        %1788 = vmatpush1.bf16.msra.mxu0 %v1768
        %1789 = vmatprep.subr.bf16.mxu0 0
        %1790 = vmatpush1.bf16.msra.mxu0 %v1769
        %1791 = vmatprep.subr.bf16.mxu0 0
        %1792 = vmatpush1.bf16.msra.mxu0 %v1770
        %1793 = vmatprep.subr.bf16.mxu0 0
        %1794 = vmatpush1.bf16.msra.mxu0 %v1771
        %1795 = vmatprep.subr.bf16.mxu0 0
        %1796 = vmatpush1.bf16.msra.mxu0 %v1772
        %1797 = vmatprep.subr.bf16.mxu0 0
        %1798 = vmatpush1.bf16.msra.mxu0 0
        %1799 = vmatprep.subr.bf16.mxu0 0
        %1800 = vmatpush1.bf16.msra.mxu0 0
        %1801 = vmatprep.subr.bf16.mxu0 0
        %1802 = vmatpush1.bf16.msra.mxu0 0
        %1803 = vmatprep.subr.bf16.mxu0 0
        %1804 = vmatpush1.bf16.msra.mxu0 0
        %1805 = vmatprep.subr.bf16.mxu0 0
        %1806 = vmatpush1.bf16.msra.mxu0 0
        %1807 = vmatprep.subr.bf16.mxu0 0
        %1808 = vmatpush1.bf16.msra.mxu0 0
        %1809 = vmatprep.subr.bf16.mxu0 0
        %1810 = vmatpush1.bf16.msra.mxu0 0
        %1811 = vmatprep.subr.bf16.mxu0 0
        %1812 = vmatpush1.bf16.msra.mxu0 0
        %1813 = vmatprep.mubr.bf16.mxu0 0
        %1814 = vmatmul.mubr.bf16.gmra.mrb[0].mxu0 %v1731
        %v1815 = vpop.f32.mrb[0].mxu0
        %v1816 = vadd.f32 0.0, %v1815
        %v1817 = vpop.f32.mrb[0].mxu0
        %v1818 = vpop.f32.mrb[0].mxu0
        %v1819 = vpop.f32.mrb[0].mxu0
        %1820 = vdwg.mxu0
        %v1821 = vadd.f32 %v1710, %v1816
        %s1822 = scalar_lea.vmem %s343, 768 [#allocation9]
        %v1823 = vld [vmem:[%s1822] sm:$0xf]
        %v1824 = vld [vmem:[%s1822 + $0x4] sm:$0xf]
        %v1825 = vld [vmem:[%s1822 + $0x8] sm:$0xf]
        %v1826 = vld [vmem:[%s1822 + $0xc] sm:$0xf]
        %v1827 = vld [vmem:[%s1822 + $0x10] sm:$0xf]
        %v1828 = vld [vmem:[%s1822 + $0x14] sm:$0xf]
        %v1829 = vld [vmem:[%s1822 + $0x18] sm:$0xf]
        %v1830 = vld [vmem:[%s1822 + $0x1c] sm:$0xf]
        %v1831 = vld [vmem:[%s1822 + $0x20] sm:$0xf]
        %v1832 = vld [vmem:[%s1822 + $0x24] sm:$0xf]
        %v1833 = vld [vmem:[%s1822 + $0x28] sm:$0xf]
        %v1834 = vld [vmem:[%s1822 + $0x2c] sm:$0xf]
        %v1835 = vld [vmem:[%s1822 + $0x30] sm:$0xf]
        %v1836 = vld [vmem:[%s1822 + $0x34] sm:$0xf]
        %v1837 = vld [vmem:[%s1822 + $0x38] sm:$0xf]
        %v1838 = vld [vmem:[%s1822 + $0x3c] sm:$0xf]
        %v1839 = vrot.slane %v1395, 4
        %v1840 = vrot.slane %v1396, 3
        %v1841 = vsel %vm528, %v1840, %v1839
        %v1842 = vpack.c.b16 %v1841, %v1841
        %v1860 = vunpack.c.l.b16 %v1823
        %v1861 = vunpack.c.l.b16 %v1824
        %v1862 = vunpack.c.l.b16 %v1825
        %v1863 = vunpack.c.l.b16 %v1826
        %v1864 = vunpack.c.l.b16 %v1827
        %v1865 = vunpack.c.l.b16 %v1828
        %v1866 = vunpack.c.l.b16 %v1829
        %v1867 = vunpack.c.l.b16 %v1830
        %v1868 = vunpack.c.l.b16 %v1831
        %v1869 = vunpack.c.l.b16 %v1832
        %v1870 = vunpack.c.l.b16 %v1833
        %v1871 = vunpack.c.l.b16 %v1834
        %v1872 = vunpack.c.l.b16 %v1835
        %v1873 = vunpack.c.l.b16 %v1836
        %v1874 = vunpack.c.l.b16 %v1837
        %v1875 = vunpack.c.l.b16 %v1838
        %v1876 = vpack.c.b16 %v1861, %v1860
        %v1877 = vpack.c.b16 %v1863, %v1862
        %v1878 = vpack.c.b16 %v1865, %v1864
        %v1879 = vpack.c.b16 %v1867, %v1866
        %v1880 = vpack.c.b16 %v1869, %v1868
        %v1881 = vpack.c.b16 %v1871, %v1870
        %v1882 = vpack.c.b16 %v1873, %v1872
        %v1883 = vpack.c.b16 %v1875, %v1874
        %1892 = vmatprep.subr.bf16.mxu0 0
        %1893 = vmatpush1.bf16.msra.mxu0 %v1876
        %1894 = vmatprep.subr.bf16.mxu0 0
        %1895 = vmatpush1.bf16.msra.mxu0 %v1877
        %1896 = vmatprep.subr.bf16.mxu0 0
        %1897 = vmatpush1.bf16.msra.mxu0 %v1878
        %1898 = vmatprep.subr.bf16.mxu0 0
        %1899 = vmatpush1.bf16.msra.mxu0 %v1879
        %1900 = vmatprep.subr.bf16.mxu0 0
        %1901 = vmatpush1.bf16.msra.mxu0 %v1880
        %1902 = vmatprep.subr.bf16.mxu0 0
        %1903 = vmatpush1.bf16.msra.mxu0 %v1881
        %1904 = vmatprep.subr.bf16.mxu0 0
        %1905 = vmatpush1.bf16.msra.mxu0 %v1882
        %1906 = vmatprep.subr.bf16.mxu0 0
        %1907 = vmatpush1.bf16.msra.mxu0 %v1883
        %1908 = vmatprep.subr.bf16.mxu0 0
        %1909 = vmatpush1.bf16.msra.mxu0 0
        %1910 = vmatprep.subr.bf16.mxu0 0
        %1911 = vmatpush1.bf16.msra.mxu0 0
        %1912 = vmatprep.subr.bf16.mxu0 0
        %1913 = vmatpush1.bf16.msra.mxu0 0
        %1914 = vmatprep.subr.bf16.mxu0 0
        %1915 = vmatpush1.bf16.msra.mxu0 0
        %1916 = vmatprep.subr.bf16.mxu0 0
        %1917 = vmatpush1.bf16.msra.mxu0 0
        %1918 = vmatprep.subr.bf16.mxu0 0
        %1919 = vmatpush1.bf16.msra.mxu0 0
        %1920 = vmatprep.subr.bf16.mxu0 0
        %1921 = vmatpush1.bf16.msra.mxu0 0
        %1922 = vmatprep.subr.bf16.mxu0 0
        %1923 = vmatpush1.bf16.msra.mxu0 0
        %1924 = vmatprep.mubr.bf16.mxu0 0
        %1925 = vmatmul.mubr.bf16.gmra.mrb[0].mxu0 %v1842
        %v1926 = vpop.f32.mrb[0].mxu0
        %v1927 = vadd.f32 0.0, %v1926
        %v1928 = vpop.f32.mrb[0].mxu0
        %v1929 = vpop.f32.mrb[0].mxu0
        %v1930 = vpop.f32.mrb[0].mxu0
        %1931 = vdwg.mxu0
        %v1932 = vadd.f32 %v1821, %v1927
        %s1933 = scalar_lea.vmem %s343, 832 [#allocation9]
        %v1934 = vld [vmem:[%s1933] sm:$0xf]
        %v1935 = vld [vmem:[%s1933 + $0x4] sm:$0xf]
        %v1936 = vld [vmem:[%s1933 + $0x8] sm:$0xf]
        %v1937 = vld [vmem:[%s1933 + $0xc] sm:$0xf]
        %v1938 = vld [vmem:[%s1933 + $0x10] sm:$0xf]
        %v1939 = vld [vmem:[%s1933 + $0x14] sm:$0xf]
        %v1940 = vld [vmem:[%s1933 + $0x18] sm:$0xf]
        %v1941 = vld [vmem:[%s1933 + $0x1c] sm:$0xf]
        %v1942 = vld [vmem:[%s1933 + $0x20] sm:$0xf]
        %v1943 = vld [vmem:[%s1933 + $0x24] sm:$0xf]
        %v1944 = vld [vmem:[%s1933 + $0x28] sm:$0xf]
        %v1945 = vld [vmem:[%s1933 + $0x2c] sm:$0xf]
        %v1946 = vld [vmem:[%s1933 + $0x30] sm:$0xf]
        %v1947 = vld [vmem:[%s1933 + $0x34] sm:$0xf]
        %v1948 = vld [vmem:[%s1933 + $0x38] sm:$0xf]
        %v1949 = vld [vmem:[%s1933 + $0x3c] sm:$0xf]
        %v1950 = vrot.slane %v1395, 5
        %v1951 = vrot.slane %v1396, 4
        %v1952 = vsel %vm528, %v1951, %v1950
        %v1953 = vpack.c.b16 %v1952, %v1952
        %v1971 = vunpack.c.l.b16 %v1934
        %v1972 = vunpack.c.l.b16 %v1935
        %v1973 = vunpack.c.l.b16 %v1936
        %v1974 = vunpack.c.l.b16 %v1937
        %v1975 = vunpack.c.l.b16 %v1938
        %v1976 = vunpack.c.l.b16 %v1939
        %v1977 = vunpack.c.l.b16 %v1940
        %v1978 = vunpack.c.l.b16 %v1941
        %v1979 = vunpack.c.l.b16 %v1942
        %v1980 = vunpack.c.l.b16 %v1943
        %v1981 = vunpack.c.l.b16 %v1944
        %v1982 = vunpack.c.l.b16 %v1945
        %v1983 = vunpack.c.l.b16 %v1946
        %v1984 = vunpack.c.l.b16 %v1947
        %v1985 = vunpack.c.l.b16 %v1948
        %v1986 = vunpack.c.l.b16 %v1949
        %v1987 = vpack.c.b16 %v1972, %v1971
        %v1988 = vpack.c.b16 %v1974, %v1973
        %v1989 = vpack.c.b16 %v1976, %v1975
        %v1990 = vpack.c.b16 %v1978, %v1977
        %v1991 = vpack.c.b16 %v1980, %v1979
        %v1992 = vpack.c.b16 %v1982, %v1981
        %v1993 = vpack.c.b16 %v1984, %v1983
        %v1994 = vpack.c.b16 %v1986, %v1985
        %2003 = vmatprep.subr.bf16.mxu0 0
        %2004 = vmatpush1.bf16.msra.mxu0 %v1987
        %2005 = vmatprep.subr.bf16.mxu0 0
        %2006 = vmatpush1.bf16.msra.mxu0 %v1988
        %2007 = vmatprep.subr.bf16.mxu0 0
        %2008 = vmatpush1.bf16.msra.mxu0 %v1989
        %2009 = vmatprep.subr.bf16.mxu0 0
        %2010 = vmatpush1.bf16.msra.mxu0 %v1990
        %2011 = vmatprep.subr.bf16.mxu0 0
        %2012 = vmatpush1.bf16.msra.mxu0 %v1991
        %2013 = vmatprep.subr.bf16.mxu0 0
        %2014 = vmatpush1.bf16.msra.mxu0 %v1992
        %2015 = vmatprep.subr.bf16.mxu0 0
        %2016 = vmatpush1.bf16.msra.mxu0 %v1993
        %2017 = vmatprep.subr.bf16.mxu0 0
        %2018 = vmatpush1.bf16.msra.mxu0 %v1994
        %2019 = vmatprep.subr.bf16.mxu0 0
        %2020 = vmatpush1.bf16.msra.mxu0 0
        %2021 = vmatprep.subr.bf16.mxu0 0
        %2022 = vmatpush1.bf16.msra.mxu0 0
        %2023 = vmatprep.subr.bf16.mxu0 0
        %2024 = vmatpush1.bf16.msra.mxu0 0
        %2025 = vmatprep.subr.bf16.mxu0 0
        %2026 = vmatpush1.bf16.msra.mxu0 0
        %2027 = vmatprep.subr.bf16.mxu0 0
        %2028 = vmatpush1.bf16.msra.mxu0 0
        %2029 = vmatprep.subr.bf16.mxu0 0
        %2030 = vmatpush1.bf16.msra.mxu0 0
        %2031 = vmatprep.subr.bf16.mxu0 0
        %2032 = vmatpush1.bf16.msra.mxu0 0
        %2033 = vmatprep.subr.bf16.mxu0 0
        %2034 = vmatpush1.bf16.msra.mxu0 0
        %2035 = vmatprep.mubr.bf16.mxu0 0
        %2036 = vmatmul.mubr.bf16.gmra.mrb[0].mxu0 %v1953
        %v2037 = vpop.f32.mrb[0].mxu0
        %v2038 = vadd.f32 0.0, %v2037
        %v2039 = vpop.f32.mrb[0].mxu0
        %v2040 = vpop.f32.mrb[0].mxu0
        %v2041 = vpop.f32.mrb[0].mxu0
        %2042 = vdwg.mxu0
        %v2043 = vadd.f32 %v1932, %v2038
        %s2044 = scalar_lea.vmem %s343, 896 [#allocation9]
        %v2045 = vld [vmem:[%s2044] sm:$0xf]
        %v2046 = vld [vmem:[%s2044 + $0x4] sm:$0xf]
        %v2047 = vld [vmem:[%s2044 + $0x8] sm:$0xf]
        %v2048 = vld [vmem:[%s2044 + $0xc] sm:$0xf]
        %v2049 = vld [vmem:[%s2044 + $0x10] sm:$0xf]
        %v2050 = vld [vmem:[%s2044 + $0x14] sm:$0xf]
        %v2051 = vld [vmem:[%s2044 + $0x18] sm:$0xf]
        %v2052 = vld [vmem:[%s2044 + $0x1c] sm:$0xf]
        %v2053 = vld [vmem:[%s2044 + $0x20] sm:$0xf]
        %v2054 = vld [vmem:[%s2044 + $0x24] sm:$0xf]
        %v2055 = vld [vmem:[%s2044 + $0x28] sm:$0xf]
        %v2056 = vld [vmem:[%s2044 + $0x2c] sm:$0xf]
        %v2057 = vld [vmem:[%s2044 + $0x30] sm:$0xf]
        %v2058 = vld [vmem:[%s2044 + $0x34] sm:$0xf]
        %v2059 = vld [vmem:[%s2044 + $0x38] sm:$0xf]
        %v2060 = vld [vmem:[%s2044 + $0x3c] sm:$0xf]
        %v2061 = vrot.slane %v1395, 6
        %v2062 = vrot.slane %v1396, 5
        %v2063 = vsel %vm528, %v2062, %v2061
        %v2064 = vpack.c.b16 %v2063, %v2063
        %v2082 = vunpack.c.l.b16 %v2045
        %v2083 = vunpack.c.l.b16 %v2046
        %v2084 = vunpack.c.l.b16 %v2047
        %v2085 = vunpack.c.l.b16 %v2048
        %v2086 = vunpack.c.l.b16 %v2049
        %v2087 = vunpack.c.l.b16 %v2050
        %v2088 = vunpack.c.l.b16 %v2051
        %v2089 = vunpack.c.l.b16 %v2052
        %v2090 = vunpack.c.l.b16 %v2053
        %v2091 = vunpack.c.l.b16 %v2054
        %v2092 = vunpack.c.l.b16 %v2055
        %v2093 = vunpack.c.l.b16 %v2056
        %v2094 = vunpack.c.l.b16 %v2057
        %v2095 = vunpack.c.l.b16 %v2058
        %v2096 = vunpack.c.l.b16 %v2059
        %v2097 = vunpack.c.l.b16 %v2060
        %v2098 = vpack.c.b16 %v2083, %v2082
        %v2099 = vpack.c.b16 %v2085, %v2084
        %v2100 = vpack.c.b16 %v2087, %v2086
        %v2101 = vpack.c.b16 %v2089, %v2088
        %v2102 = vpack.c.b16 %v2091, %v2090
        %v2103 = vpack.c.b16 %v2093, %v2092
        %v2104 = vpack.c.b16 %v2095, %v2094
        %v2105 = vpack.c.b16 %v2097, %v2096
        %2114 = vmatprep.subr.bf16.mxu0 0
        %2115 = vmatpush1.bf16.msra.mxu0 %v2098
        %2116 = vmatprep.subr.bf16.mxu0 0
        %2117 = vmatpush1.bf16.msra.mxu0 %v2099
        %2118 = vmatprep.subr.bf16.mxu0 0
        %2119 = vmatpush1.bf16.msra.mxu0 %v2100
        %2120 = vmatprep.subr.bf16.mxu0 0
        %2121 = vmatpush1.bf16.msra.mxu0 %v2101
        %2122 = vmatprep.subr.bf16.mxu0 0
        %2123 = vmatpush1.bf16.msra.mxu0 %v2102
        %2124 = vmatprep.subr.bf16.mxu0 0
        %2125 = vmatpush1.bf16.msra.mxu0 %v2103
        %2126 = vmatprep.subr.bf16.mxu0 0
        %2127 = vmatpush1.bf16.msra.mxu0 %v2104
        %2128 = vmatprep.subr.bf16.mxu0 0
        %2129 = vmatpush1.bf16.msra.mxu0 %v2105
        %2130 = vmatprep.subr.bf16.mxu0 0
        %2131 = vmatpush1.bf16.msra.mxu0 0
        %2132 = vmatprep.subr.bf16.mxu0 0
        %2133 = vmatpush1.bf16.msra.mxu0 0
        %2134 = vmatprep.subr.bf16.mxu0 0
        %2135 = vmatpush1.bf16.msra.mxu0 0
        %2136 = vmatprep.subr.bf16.mxu0 0
        %2137 = vmatpush1.bf16.msra.mxu0 0
        %2138 = vmatprep.subr.bf16.mxu0 0
        %2139 = vmatpush1.bf16.msra.mxu0 0
        %2140 = vmatprep.subr.bf16.mxu0 0
        %2141 = vmatpush1.bf16.msra.mxu0 0
        %2142 = vmatprep.subr.bf16.mxu0 0
        %2143 = vmatpush1.bf16.msra.mxu0 0
        %2144 = vmatprep.subr.bf16.mxu0 0
        %2145 = vmatpush1.bf16.msra.mxu0 0
        %2146 = vmatprep.mubr.bf16.mxu0 0
        %2147 = vmatmul.mubr.bf16.gmra.mrb[0].mxu0 %v2064
        %v2148 = vpop.f32.mrb[0].mxu0
        %v2149 = vadd.f32 0.0, %v2148
        %v2150 = vpop.f32.mrb[0].mxu0
        %v2151 = vpop.f32.mrb[0].mxu0
        %v2152 = vpop.f32.mrb[0].mxu0
        %2153 = vdwg.mxu0
        %v2154 = vadd.f32 %v2043, %v2149
        %s2155 = scalar_lea.vmem %s343, 960 [#allocation9]
        %v2156 = vld [vmem:[%s2155] sm:$0xf]
        %v2157 = vld [vmem:[%s2155 + $0x4] sm:$0xf]
        %v2158 = vld [vmem:[%s2155 + $0x8] sm:$0xf]
        %v2159 = vld [vmem:[%s2155 + $0xc] sm:$0xf]
        %v2160 = vld [vmem:[%s2155 + $0x10] sm:$0xf]
        %v2161 = vld [vmem:[%s2155 + $0x14] sm:$0xf]
        %v2162 = vld [vmem:[%s2155 + $0x18] sm:$0xf]
        %v2163 = vld [vmem:[%s2155 + $0x1c] sm:$0xf]
        %v2164 = vld [vmem:[%s2155 + $0x20] sm:$0xf]
        %v2165 = vld [vmem:[%s2155 + $0x24] sm:$0xf]
        %v2166 = vld [vmem:[%s2155 + $0x28] sm:$0xf]
        %v2167 = vld [vmem:[%s2155 + $0x2c] sm:$0xf]
        %v2168 = vld [vmem:[%s2155 + $0x30] sm:$0xf]
        %v2169 = vld [vmem:[%s2155 + $0x34] sm:$0xf]
        %v2170 = vld [vmem:[%s2155 + $0x38] sm:$0xf]
        %v2171 = vld [vmem:[%s2155 + $0x3c] sm:$0xf]
        %v2172 = vrot.slane %v1395, 7
        %v2173 = vrot.slane %v1396, 6
        %v2174 = vsel %vm528, %v2173, %v2172
        %v2175 = vpack.c.b16 %v2174, %v2174
        %v2193 = vunpack.c.l.b16 %v2156
        %v2194 = vunpack.c.l.b16 %v2157
        %v2195 = vunpack.c.l.b16 %v2158
        %v2196 = vunpack.c.l.b16 %v2159
        %v2197 = vunpack.c.l.b16 %v2160
        %v2198 = vunpack.c.l.b16 %v2161
        %v2199 = vunpack.c.l.b16 %v2162
        %v2200 = vunpack.c.l.b16 %v2163
        %v2201 = vunpack.c.l.b16 %v2164
        %v2202 = vunpack.c.l.b16 %v2165
        %v2203 = vunpack.c.l.b16 %v2166
        %v2204 = vunpack.c.l.b16 %v2167
        %v2205 = vunpack.c.l.b16 %v2168
        %v2206 = vunpack.c.l.b16 %v2169
        %v2207 = vunpack.c.l.b16 %v2170
        %v2208 = vunpack.c.l.b16 %v2171
        %v2209 = vpack.c.b16 %v2194, %v2193
        %v2210 = vpack.c.b16 %v2196, %v2195
        %v2211 = vpack.c.b16 %v2198, %v2197
        %v2212 = vpack.c.b16 %v2200, %v2199
        %v2213 = vpack.c.b16 %v2202, %v2201
        %v2214 = vpack.c.b16 %v2204, %v2203
        %v2215 = vpack.c.b16 %v2206, %v2205
        %v2216 = vpack.c.b16 %v2208, %v2207
        %2225 = vmatprep.subr.bf16.mxu0 0
        %2226 = vmatpush1.bf16.msra.mxu0 %v2209
        %2227 = vmatprep.subr.bf16.mxu0 0
        %2228 = vmatpush1.bf16.msra.mxu0 %v2210
        %2229 = vmatprep.subr.bf16.mxu0 0
        %2230 = vmatpush1.bf16.msra.mxu0 %v2211
        %2231 = vmatprep.subr.bf16.mxu0 0
        %2232 = vmatpush1.bf16.msra.mxu0 %v2212
        %2233 = vmatprep.subr.bf16.mxu0 0
        %2234 = vmatpush1.bf16.msra.mxu0 %v2213
        %2235 = vmatprep.subr.bf16.mxu0 0
        %2236 = vmatpush1.bf16.msra.mxu0 %v2214
        %2237 = vmatprep.subr.bf16.mxu0 0
        %2238 = vmatpush1.bf16.msra.mxu0 %v2215
        %2239 = vmatprep.subr.bf16.mxu0 0
        %2240 = vmatpush1.bf16.msra.mxu0 %v2216
        %2241 = vmatprep.subr.bf16.mxu0 0
        %2242 = vmatpush1.bf16.msra.mxu0 0
        %2243 = vmatprep.subr.bf16.mxu0 0
        %2244 = vmatpush1.bf16.msra.mxu0 0
        %2245 = vmatprep.subr.bf16.mxu0 0
        %2246 = vmatpush1.bf16.msra.mxu0 0
        %2247 = vmatprep.subr.bf16.mxu0 0
        %2248 = vmatpush1.bf16.msra.mxu0 0
        %2249 = vmatprep.subr.bf16.mxu0 0
        %2250 = vmatpush1.bf16.msra.mxu0 0
        %2251 = vmatprep.subr.bf16.mxu0 0
        %2252 = vmatpush1.bf16.msra.mxu0 0
        %2253 = vmatprep.subr.bf16.mxu0 0
        %2254 = vmatpush1.bf16.msra.mxu0 0
        %2255 = vmatprep.subr.bf16.mxu0 0
        %2256 = vmatpush1.bf16.msra.mxu0 0
        %2257 = vmatprep.mubr.bf16.mxu0 0
        %2258 = vmatmul.mubr.bf16.gmra.mrb[0].mxu0 %v2175
        %v2259 = vpop.f32.mrb[0].mxu0
        %v2260 = vadd.f32 0.0, %v2259
        %v2261 = vpop.f32.mrb[0].mxu0
        %v2262 = vpop.f32.mrb[0].mxu0
        %v2263 = vpop.f32.mrb[0].mxu0
        %2264 = vdwg.mxu0
        %v2265 = vadd.f32 %v2154, %v2260
        %v2266 = vld [vmem:[#allocation2] sm:$0x3]
        %v2267 = vadd.f32 %v2266, %v2265
        %2268 = vst [vmem:[#allocation2] sm:$0x3] %v2267
        %p2269 = scmp.eq.s32.totalorder %s24, 1
        // Predicated region
        $region69: #{tpu_custom_call.1} parent=47 // pred_check
          %p2270 = pneg %p2269
        $region70: #{tpu_custom_call.1} parent=47 // pred_check_branch
          %2272 = sbr.rel (%p2270) target = $region72
        $region71: #{tpu_custom_call.1} parent=47 // pred_region
          %v2273 = vld [vmem:[#allocation2] sm:$0x3]
          %v2274 = vld [vmem:[%s3] sm:$0x1]
          %v2276 = vlaneseq
          %v2277 = vshrl.u32 %v2276, 7
          %v2278 = vsub.s32 0, %v2277
          %v2279 = vrot.slane %v2274, %v2278
          %v2281 = vadd.f32 %v2273, %v2279
          %s2282 = sld [smem:[#allocation3]]
          %vm2283 = vcmp.gt.f32.partialorder %v2281, 0.0
          %v2284 = vstv %s2282
          %v2285 = vmul.f32 %v2284, %v2281
          %v2286 = vsel %vm2283, %v2281, %v2285
          %v2287 = vld [vmem:[#allocation10] sm:$0xff]
          %v2288 = vld [vmem:[#allocation10 + $0x8] sm:$0xff]
          %v2289 = vld [vmem:[#allocation10 + $0x10] sm:$0xff]
          %v2290 = vld [vmem:[#allocation10 + $0x18] sm:$0xff]
          %v2291 = vld [vmem:[#allocation10 + $0x20] sm:$0xff]
          %v2292 = vld [vmem:[#allocation10 + $0x28] sm:$0xff]
          %v2293 = vld [vmem:[#allocation10 + $0x30] sm:$0xff]
          %v2294 = vld [vmem:[#allocation10 + $0x38] sm:$0xff]
          %v2295 = vld [vmem:[#allocation10 + $0x40] sm:$0xff]
          %v2296 = vld [vmem:[#allocation10 + $0x48] sm:$0xff]
          %v2297 = vld [vmem:[#allocation10 + $0x50] sm:$0xff]
          %v2298 = vld [vmem:[#allocation10 + $0x58] sm:$0xff]
          %v2299 = vld [vmem:[#allocation10 + $0x60] sm:$0xff]
          %v2300 = vld [vmem:[#allocation10 + $0x68] sm:$0xff]
          %v2301 = vld [vmem:[#allocation10 + $0x70] sm:$0xff]
          %v2302 = vld [vmem:[#allocation10 + $0x78] sm:$0xff]
          %v2303 = vld [vmem:[%s6] sm:$0x1]
          %v2305 = vlaneseq
          %v2306 = vshrl.u32 %v2305, 7
          %v2307 = vsub.s32 0, %v2306
          %v2308 = vrot.slane %v2303, %v2307
          %2310 = vmatprep.subr.mxu0 0.0
          %2311 = vmatpush1.msra.mxu0 %v2287
          %2312 = vmatprep.subr.mxu0 0.0
          %2313 = vmatpush1.msra.mxu0 %v2288
          %2314 = vmatprep.subr.mxu0 0.0
          %2315 = vmatpush1.msra.mxu0 %v2289
          %2316 = vmatprep.subr.mxu0 0.0
          %2317 = vmatpush1.msra.mxu0 %v2290
          %2318 = vmatprep.subr.mxu0 0.0
          %2319 = vmatpush1.msra.mxu0 %v2291
          %2320 = vmatprep.subr.mxu0 0.0
          %2321 = vmatpush1.msra.mxu0 %v2292
          %2322 = vmatprep.subr.mxu0 0.0
          %2323 = vmatpush1.msra.mxu0 %v2293
          %2324 = vmatprep.subr.mxu0 0.0
          %2325 = vmatpush1.msra.mxu0 %v2294
          %2326 = vmatprep.subr.mxu0 0.0
          %2327 = vmatpush1.msra.mxu0 %v2295
          %2328 = vmatprep.subr.mxu0 0.0
          %2329 = vmatpush1.msra.mxu0 %v2296
          %2330 = vmatprep.subr.mxu0 0.0
          %2331 = vmatpush1.msra.mxu0 %v2297
          %2332 = vmatprep.subr.mxu0 0.0
          %2333 = vmatpush1.msra.mxu0 %v2298
          %2334 = vmatprep.subr.mxu0 0.0
          %2335 = vmatpush1.msra.mxu0 %v2299
          %2336 = vmatprep.subr.mxu0 0.0
          %2337 = vmatpush1.msra.mxu0 %v2300
          %2338 = vmatprep.subr.mxu0 0.0
          %2339 = vmatpush1.msra.mxu0 %v2301
          %2340 = vmatprep.subr.mxu0 0.0
          %2341 = vmatpush1.msra.mxu0 %v2302
          %2342 = vmatprep.subr.mxu0 0.0
          %2343 = vmatpush1.msra.mxu0 0.0
          %2344 = vmatprep.subr.mxu0 0.0
          %2345 = vmatpush1.msra.mxu0 0.0
          %2346 = vmatprep.subr.mxu0 0.0
          %2347 = vmatpush1.msra.mxu0 0.0
          %2348 = vmatprep.subr.mxu0 0.0
          %2349 = vmatpush1.msra.mxu0 0.0
          %2350 = vmatprep.subr.mxu0 0.0
          %2351 = vmatpush1.msra.mxu0 0.0
          %2352 = vmatprep.subr.mxu0 0.0
          %2353 = vmatpush1.msra.mxu0 0.0
          %2354 = vmatprep.subr.mxu0 0.0
          %2355 = vmatpush1.msra.mxu0 0.0
          %2356 = vmatprep.subr.mxu0 0.0
          %2357 = vmatpush1.msra.mxu0 0.0
          %2358 = vmatprep.subr.mxu0 0.0
          %2359 = vmatpush1.msra.mxu0 0.0
          %2360 = vmatprep.subr.mxu0 0.0
          %2361 = vmatpush1.msra.mxu0 0.0
          %2362 = vmatprep.subr.mxu0 0.0
          %2363 = vmatpush1.msra.mxu0 0.0
          %2364 = vmatprep.subr.mxu0 0.0
          %2365 = vmatpush1.msra.mxu0 0.0
          %2366 = vmatprep.subr.mxu0 0.0
          %2367 = vmatpush1.msra.mxu0 0.0
          %2368 = vmatprep.subr.mxu0 0.0
          %2369 = vmatpush1.msra.mxu0 0.0
          %2370 = vmatprep.subr.mxu0 0.0
          %2371 = vmatpush1.msra.mxu0 0.0
          %2372 = vmatprep.subr.mxu0 0.0
          %2373 = vmatpush1.msra.mxu0 0.0
          %2374 = vmatprep.mubr.f32.mxu0 0.0
          %2375 = vmatmul.mubr.f32.gmra.mrb[0].mxu0 %v2286
          %v2376 = vpop.f32.mrb[0].mxu0
          %v2377 = vadd.f32 %v2308, %v2376
          %v2378 = vpop.f32.mrb[0].mxu0
          %2379 = vdwg.mxu0
          %v2380 = vtanh.pop %v2377
          %2381 = vst [vmem:[#allocation11] sm:$0x3] %v2380
        $region72: #{tpu_custom_call.1} parent=47 // pred_fallthru
          _
        // Predicated region
        $region73: #{tpu_custom_call.1} parent=47 // pred_check
          %p2382 = pneg %p194
        $region74: #{tpu_custom_call.1} parent=47 // pred_check_branch
          %2384 = sbr.rel (%p2382) target = $region76
        $region75: #{tpu_custom_call.1} parent=47 // pred_region
          %s2386 = ssub.s32 32, 32
          %2387 = vsyncadd [#allocation6], %s2386
          %s2389 = sshll.u32 [#allocation11], 4
          %s2390 = int_to_ptr.vmem [resolvable:$true] %s2389
          %2392 = dma.vmem_to_hbm [thread:$0]  %s2390, 32, %s7, [#allocation6]
        $region76: #{tpu_custom_call.1} parent=47 // pred_fallthru
          _
        // Predicated region
        $region77: #{tpu_custom_call.1} parent=47 // pred_check
          %p2393 = pneg %p194
        $region78: #{tpu_custom_call.1} parent=47 // pred_check_branch
          %2395 = sbr.rel (%p2393) target = $region80
        $region79: #{tpu_custom_call.1} parent=47 // pred_region
          %2396 = dma.done [#allocation6], 32
        $region80: #{tpu_custom_call.1} parent=47 // pred_fallthru
          _
      $region48: #{tpu_custom_call.1} parent=5 // pred_fallthru
        _
      %p2397 = scmp.le.s32.totalorder 2, %s19
      // Predicated region
      $region81: #{tpu_custom_call.1} parent=5 // pred_check
        %p2398 = pneg %p2397
      $region82: #{tpu_custom_call.1} parent=5 // pred_check_branch
        %2400 = sbr.rel (%p2398) target = $region84
      $region83: #{tpu_custom_call.1} parent=5 // pred_region
        %s2401 = ssub.s32 %s19, 2
      $region84: #{tpu_custom_call.1} parent=5 // pred_fallthru
        _
    $region6: #{tpu_custom_call.1} parent=1 // loop_footer
      %s23 = sadd.s32 1, %s19
    $region7: #{tpu_custom_call.1} parent=1 // loop_footer_branch
      %18 = sbr.rel target = $region3
    $region8: #{tpu_custom_call.1} parent=1 // loop_exit
      _
    %2402 = vsyncpa [#allocation5], 1
    %s2403 = scalar_lea.sflag [#allocation5], 1
    %2404 = vsyncpa %s2403, 1
    %2405 = vsyncpa [#allocation8], 1
    %2406 = vsyncpa [#allocation6], 1
    %s2407 = scalar_lea.sflag [#allocation6], 1
    %2408 = vsyncpa %s2407, 1

</llo_original>
